<compile_context>
chip_gen: v6e
topology: v6e:2x2x1
jax: 0.10.0
libtpu: 0.0.40
codegen_flags: <defaults>
</compile_context>

<pallas_src>
import jax
import jax.numpy as jnp
from jax.experimental import pallas as pl
from jax.experimental.pallas import tpu as pltpu

LANES = 128                 # vreg lane width
HALF = 64                   # column-parity lane half (max per-layer input channels)
CHANS = [16, 32, 64, 128]   # conv block output channels
SLACK = 16                  # zeroed slack rows appended to every plane buffer


def _geoms(img_size):
    """Per-layer geometry: output spatial Ho(=Wo) and plane-cell count."""
    gs = []
    h = img_size
    for _ in range(4):
        ho = h // 2
        gs.append(dict(Ho=ho, Wo=ho, ncell=(ho + 1) * (ho + 1)))
        h = ho
    return gs


def _make_kernel(geoms, ds, B):
    n_layers = len(geoms)
    ncells = [g["ncell"] for g in geoms]
    ncell_head = ncells[-1]                       # (ds+1)**2

    def conv_block(planes, w_ref, e_ref, Wo, M):
        """Stride-2 3x3 conv as 6 constant-shift GEMMs + bias/LeakyReLU/BN (f32)."""
        acc = None
        for kh in range(3):
            src = planes[kh % 2]                  # row-parity plane array
            base = (kh // 2) * (Wo + 1)
            for dc in range(2):                   # column-pair offset
                j = kh * 2 + dc
                lhs = src[pl.ds(base + dc, M), :].astype(jnp.bfloat16)
                d = jnp.dot(lhs, w_ref[j * LANES:(j + 1) * LANES, :],
                            preferred_element_type=jnp.float32)
                acc = d if acc is None else acc + d
        bias, scale, shift = e_ref[0:1, :], e_ref[1:2, :], e_ref[2:3, :]
        h = acc + bias
        h = jnp.maximum(h, 0.2 * h)               # LeakyReLU(0.2); Dropout2d = identity
        return h * scale + shift                  # folded BatchNorm (identity for block 1)

    def stage(act_ref, planes_next, Ho, Wo, ncell_cur, ncell_nxt):
        """Scatter valid conv outputs into the next layer's parity-plane layout."""
        Hn, Wn = Ho // 2, Wo // 2
        for p in planes_next:                     # zero border + slack (megacore-safe)
            p[...] = jnp.zeros_like(p)
        for b in range(B):
            for ra in range(2):
                for rb in range(2):
                    dstp = planes_next[1 - ra]
                    lane0 = (1 - rb) * HALF
                    for a in range(Hn):
                        src = b * ncell_cur + (2 * a + ra) * (Wo + 1) + rb
                        dst = b * ncell_nxt + (a + ra) * (Wn + 1) + rb
                        sl = pl.ds(src, Wn, stride=2) if Wn > 1 else pl.ds(src, 1)
                        vals = act_ref[sl, :]
                        dstp[pl.ds(dst, Wn), pl.ds(lane0, HALF)] = vals[:, :HALF]

    def kernel(x0, x1, w0, e0, w1, e1, w2, e2, w3, e3, fcw_ref, fb_ref, out_ref,
               act0, act1, act2, p1a, p1b, p2a, p2b, p3a, p3b):
        w_refs = [w0, w1, w2, w3]
        e_refs = [e0, e1, e2, e3]
        act_refs = [act0, act1, act2]
        plane_sets = [(x0, x1), (p1a, p1b), (p2a, p2b), (p3a, p3b)]

        act_last = None
        for l in range(n_layers):
            g = geoms[l]
            M = B * ncells[l]
            act = conv_block(plane_sets[l], w_refs[l], e_refs[l], g["Wo"], M)
            if l + 1 < n_layers:
                act_refs[l][...] = act
                stage(act_refs[l], plane_sets[l + 1], g["Ho"], g["Wo"],
                      ncells[l], ncells[l + 1])
            else:
                act_last = act

        # ---- adversarial head: Linear(128*ds*ds -> 1) + Sigmoid (VPU mul + reduce)
        rows = []
        for b in range(B):
            chunk = act_last[b * ncell_head:(b + 1) * ncell_head, :]
            rows.append(jnp.sum(chunk * fcw_ref[...], axis=0, keepdims=True))
        per_lane = rows[0] if B == 1 else jnp.concatenate(rows, axis=0)      # (B,128)
        logit = jnp.sum(per_lane, axis=1, keepdims=True) + fb_ref[0:1, 0:1]  # (B,1)
        out_ref[...] = jnp.broadcast_to(1.0 / (1.0 + jnp.exp(-logit)), (B, LANES))

    return kernel


def discriminator_forward(img, params, block_b=None):
    """img: (N, C, H, W) float32 -> validity (N, 1)."""
    n, c, h, w = img.shape
    assert h == w and h % 16 == 0 and c <= HALF
    geoms = _geoms(h)
    ds = h // 16
    B = block_b if block_b is not None else max(d for d in (8, 4, 2, 1) if n % d == 0)
    n_blocks = n // B
    ncell0 = geoms[0]["ncell"]
    R = geoms[0]["Ho"] + 1
    Q = geoms[0]["Wo"] + 1

    # ---- input prep: NCHW -> 2 row-parity plane arrays, column parity in lane halves
    x = jnp.transpose(img, (0, 2, 3, 1))                       # (n, H, W, C)
    x = jnp.pad(x, ((0, 0), (1, 1), (1, 1), (0, HALF - c)))    # (n, H+2, W+2, 64)
    x = x.reshape(n, R, 2, Q, 2, HALF)                         # (n, r, pr, q, pc, 64)
    x = jnp.transpose(x, (2, 0, 1, 3, 4, 5)).reshape(2, n, ncell0, LANES)
    x = x.reshape(2, n_blocks, B * ncell0, LANES)
    x = jnp.pad(x, ((0, 0), (0, 0), (0, SLACK), (0, 0))).astype(jnp.bfloat16)
    x0, x1 = x[0], x[1]

    rows0 = B * ncell0 + SLACK
    in_specs = [pl.BlockSpec((None, rows0, LANES), lambda i: (i, 0, 0)),
                pl.BlockSpec((None, rows0, LANES), lambda i: (i, 0, 0))]
    inputs = [x0, x1]
    for blk in params["blocks"]:
        in_specs.append(pl.BlockSpec(blk["w"].shape, lambda i: (0, 0)))
        in_specs.append(pl.BlockSpec(blk["eps"].shape, lambda i: (0, 0)))
        inputs += [blk["w"], blk["eps"]]
    in_specs.append(pl.BlockSpec(params["fc_w"].shape, lambda i: (0, 0)))
    in_specs.append(pl.BlockSpec(params["fc_b"].shape, lambda i: (0, 0)))
    inputs += [params["fc_w"], params["fc_b"]]

    scratch = [pltpu.VMEM((B * geoms[l]["ncell"], LANES), jnp.float32) for l in range(3)]
    for l in range(1, 4):
        rows = B * geoms[l]["ncell"] + SLACK
        scratch += [pltpu.VMEM((rows, LANES), jnp.float32),
                    pltpu.VMEM((rows, LANES), jnp.float32)]

    out = pl.pallas_call(
        _make_kernel(geoms, ds, B),
        grid=(n_blocks,),
        in_specs=in_specs,
        out_specs=pl.BlockSpec((None, B, LANES), lambda i: (i, 0, 0)),
        out_shape=jax.ShapeDtypeStruct((n_blocks, B, LANES), jnp.float32),
        scratch_shapes=scratch,
        compiler_params=pltpu.CompilerParams(
            dimension_semantics=("parallel",)),
    )(*inputs)
    return out.reshape(n, LANES)[:, :1]                        # (N, 1)


def init_params(key, channels, img_size):
    assert channels <= HALF
    ds = img_size // 16
    chans = [channels] + CHANS
    keys = jax.random.split(key, 16)
    ki = 0
    raw_blocks, packed_blocks = [], []
    for i in range(4):
        c_in, c_out = chans[i], chans[i + 1]
        w = 0.02 * jax.random.normal(keys[ki], (c_out, c_in, 3, 3), jnp.float32); ki += 1
        b = 0.01 * jax.random.normal(keys[ki], (c_out,), jnp.float32); ki += 1
        if i == 0:                                   # block 1: no BatchNorm
            scale = jnp.ones((c_out,), jnp.float32)
            shift = jnp.zeros((c_out,), jnp.float32)
        else:                                        # nn.BatchNorm2d(c_out, 0.8), eval
            gamma = 1.0 + 0.1 * jax.random.normal(keys[ki], (c_out,), jnp.float32); ki += 1
            beta = 0.1 * jax.random.normal(keys[ki], (c_out,), jnp.float32); ki += 1
            running_mean = jnp.zeros((c_out,), jnp.float32)
            running_var = jnp.ones((c_out,), jnp.float32)
            inv = gamma / jnp.sqrt(running_var + 0.8)
            scale = inv
            shift = beta - running_mean * inv
        raw_blocks.append(dict(w=w, b=b, scale=scale, shift=shift))

        # pack conv weight: 6 GEMM operands (kh x pair-offset), rows = pc*64 + c_in
        wmat = jnp.zeros((6 * LANES, LANES), jnp.float32)
        for kh in range(3):
            for dc in range(2):
                j = kh * 2 + dc
                for pc in range(2):
                    kw = 2 * dc + pc
                    if kw > 2:
                        continue
                    blk = jnp.transpose(w[:, :, kh, kw], (1, 0))   # (c_in, c_out)
                    r0 = j * LANES + pc * HALF
                    wmat = wmat.at[r0:r0 + c_in, :c_out].set(blk)
        eps = jnp.zeros((3, LANES), jnp.float32)     # rows: bias, scale, shift
        eps = eps.at[0, :c_out].set(b)
        eps = eps.at[1, :].set(1.0)
        eps = eps.at[1, :c_out].set(scale)
        eps = eps.at[2, :c_out].set(shift)
        packed_blocks.append(dict(w=wmat.astype(jnp.bfloat16), eps=eps))

    fc_w = 0.02 * jax.random.normal(keys[ki], (1, 128 * ds * ds), jnp.float32); ki += 1
    fc_b = 0.01 * jax.random.normal(keys[ki], (1,), jnp.float32)
    # head weights in the kernel's over-computed (oh, ow) cell layout, dense 128 lanes
    fcw = jnp.zeros(((ds + 1) * (ds + 1), LANES), jnp.float32)
    w_r = fc_w.reshape(LANES, ds, ds)
    for oh in range(ds):
        for ow in range(ds):
            fcw = fcw.at[oh * (ds + 1) + ow, :].set(w_r[:, oh, ow])
    fb = jnp.zeros((1, LANES), jnp.float32).at[0, 0].set(fc_b[0])
    packed = dict(blocks=packed_blocks, fc_w=fcw, fc_b=fb)
    raw = dict(blocks=raw_blocks, fc_w=fc_w, fc_b=fc_b)
    return dict(packed=packed, raw=raw)


def reference_forward(img, raw):
    """Pure-JAX reference (PyTorch eval-mode semantics)."""
    x = img
    for blk in raw["blocks"]:
        x = jax.lax.conv_general_dilated(
            x, blk["w"], window_strides=(2, 2), padding=((1, 1), (1, 1)),
            dimension_numbers=("NCHW", "OIHW", "NCHW"),
            precision=jax.lax.Precision.HIGHEST)
        x = x + blk["b"][None, :, None, None]
        x = jnp.where(x > 0, x, 0.2 * x)
        x = x * blk["scale"][None, :, None, None] + blk["shift"][None, :, None, None]
    flat = x.reshape(x.shape[0], -1)
    y = jnp.dot(flat, raw["fc_w"].T, precision=jax.lax.Precision.HIGHEST) + raw["fc_b"]
    return 1.0 / (1.0 + jnp.exp(-y))


if __name__ == "__main__":
    batch, channels, img_size = 2, 4, 16      # opt.channels=4, opt.img_size=16
    key = jax.random.PRNGKey(0)
    k_img, k_par = jax.random.split(key)
    img = jax.random.normal(k_img, (batch, channels, img_size, img_size), jnp.float32)
    params = init_params(k_par, channels, img_size)

    fwd = jax.jit(discriminator_forward)
    validity = fwd(img, params["packed"])
    jax.block_until_ready(validity)

    assert validity.shape == (batch, 1)
    assert bool(jnp.all((validity >= 0.0) & (validity <= 1.0)))
    ref = reference_forward(img, params["raw"])
    # bf16 GEMM operands (f32 accumulation); tolerance sized for that.
    assert bool(jnp.allclose(validity, ref, atol=2e-3, rtol=2e-3)), (
        f"max abs diff {float(jnp.max(jnp.abs(validity - ref)))}")
    print("KERNEL_OK")
</pallas_src>

<mosaic_0001>
module attributes {stable_mosaic.version = 11 : i64} {
  func.func @kernel(%arg0: i32, %arg1: memref<1x178x128xbf16, #tpu.memory_space<vmem>>, %arg2: memref<1x178x128xbf16, #tpu.memory_space<vmem>>, %arg3: memref<768x128xbf16, #tpu.memory_space<vmem>>, %arg4: memref<3x128xf32, #tpu.memory_space<vmem>>, %arg5: memref<768x128xbf16, #tpu.memory_space<vmem>>, %arg6: memref<3x128xf32, #tpu.memory_space<vmem>>, %arg7: memref<768x128xbf16, #tpu.memory_space<vmem>>, %arg8: memref<3x128xf32, #tpu.memory_space<vmem>>, %arg9: memref<768x128xbf16, #tpu.memory_space<vmem>>, %arg10: memref<3x128xf32, #tpu.memory_space<vmem>>, %arg11: memref<4x128xf32, #tpu.memory_space<vmem>>, %arg12: memref<1x128xf32, #tpu.memory_space<vmem>>, %arg13: memref<1x2x128xf32, #tpu.memory_space<vmem>>, %arg14: memref<162x128xf32, #tpu.memory_space<vmem>>, %arg15: memref<50x128xf32, #tpu.memory_space<vmem>>, %arg16: memref<18x128xf32, #tpu.memory_space<vmem>>, %arg17: memref<66x128xf32, #tpu.memory_space<vmem>>, %arg18: memref<66x128xf32, #tpu.memory_space<vmem>>, %arg19: memref<34x128xf32, #tpu.memory_space<vmem>>, %arg20: memref<34x128xf32, #tpu.memory_space<vmem>>, %arg21: memref<24x128xf32, #tpu.memory_space<vmem>>, %arg22: memref<24x128xf32, #tpu.memory_space<vmem>>) attributes {dimension_semantics = [#tpu.dimension_semantics<parallel>], iteration_bounds = array<i64: 1>, scalar_prefetch = 0 : i64, scratch_operands = 9 : i64, tpu.core_type = #tpu.core_type<tc>, window_params = [{transform_indices = @transform_0, window_bounds = array<i64: 1, 178, 128>}, {transform_indices = @transform_1, window_bounds = array<i64: 1, 178, 128>}, {pipeline_mode = #tpu.pipeline_mode<synchronous>, transform_indices = @transform_2, window_bounds = array<i64: 768, 128>}, {pipeline_mode = #tpu.pipeline_mode<synchronous>, transform_indices = @transform_3, window_bounds = array<i64: 3, 128>}, {pipeline_mode = #tpu.pipeline_mode<synchronous>, transform_indices = @transform_4, window_bounds = array<i64: 768, 128>}, {pipeline_mode = #tpu.pipeline_mode<synchronous>, transform_indices = @transform_5, window_bounds = array<i64: 3, 128>}, {pipeline_mode = #tpu.pipeline_mode<synchronous>, transform_indices = @transform_6, window_bounds = array<i64: 768, 128>}, {pipeline_mode = #tpu.pipeline_mode<synchronous>, transform_indices = @transform_7, window_bounds = array<i64: 3, 128>}, {pipeline_mode = #tpu.pipeline_mode<synchronous>, transform_indices = @transform_8, window_bounds = array<i64: 768, 128>}, {pipeline_mode = #tpu.pipeline_mode<synchronous>, transform_indices = @transform_9, window_bounds = array<i64: 3, 128>}, {pipeline_mode = #tpu.pipeline_mode<synchronous>, transform_indices = @transform_10, window_bounds = array<i64: 4, 128>}, {pipeline_mode = #tpu.pipeline_mode<synchronous>, transform_indices = @transform_11, window_bounds = array<i64: 1, 128>}, {transform_indices = @transform_12, window_bounds = array<i64: 1, 2, 128>}]} {
    %c0 = arith.constant 0 : index
    %c0_0 = arith.constant 0 : index
    %c0_1 = arith.constant 0 : index
    %0 = vector.load %arg1[%c0, %c0_0, %c0_1] : memref<1x178x128xbf16, #tpu.memory_space<vmem>>, vector<1x162x128xbf16>
    %1 = vector.shape_cast %0 : vector<1x162x128xbf16> to vector<162x128xbf16>
    %c0_2 = arith.constant 0 : index
    %c0_3 = arith.constant 0 : index
    %2 = vector.load %arg3[%c0_2, %c0_3] : memref<768x128xbf16, #tpu.memory_space<vmem>>, vector<128x128xbf16>
    %cst = arith.constant dense<0.000000e+00> : vector<162x128xf32>
    %3 = tpu.matmul %1, %2, %cst {dimension_numbers = #tpu.dot_dimension_numbers<[1], [0], [0], [1], [0, 0, 1, 1], [], []>} : vector<162x128xbf16>, vector<128x128xbf16>, vector<162x128xf32> -> vector<162x128xf32>
    %c0_4 = arith.constant 0 : index
    %c1 = arith.constant 1 : index
    %c0_5 = arith.constant 0 : index
    %4 = vector.load %arg1[%c0_4, %c1, %c0_5] : memref<1x178x128xbf16, #tpu.memory_space<vmem>>, vector<1x162x128xbf16>
    %5 = vector.shape_cast %4 : vector<1x162x128xbf16> to vector<162x128xbf16>
    %c128 = arith.constant 128 : index
    %c0_6 = arith.constant 0 : index
    %6 = vector.load %arg3[%c128, %c0_6] : memref<768x128xbf16, #tpu.memory_space<vmem>>, vector<128x128xbf16>
    %cst_7 = arith.constant dense<0.000000e+00> : vector<162x128xf32>
    %7 = tpu.matmul %5, %6, %cst_7 {dimension_numbers = #tpu.dot_dimension_numbers<[1], [0], [0], [1], [0, 0, 1, 1], [], []>} : vector<162x128xbf16>, vector<128x128xbf16>, vector<162x128xf32> -> vector<162x128xf32>
    %8 = arith.addf %3, %7 : vector<162x128xf32>
    %c0_8 = arith.constant 0 : index
    %c0_9 = arith.constant 0 : index
    %c0_10 = arith.constant 0 : index
    %9 = vector.load %arg2[%c0_8, %c0_9, %c0_10] : memref<1x178x128xbf16, #tpu.memory_space<vmem>>, vector<1x162x128xbf16>
    %10 = vector.shape_cast %9 : vector<1x162x128xbf16> to vector<162x128xbf16>
    %c256 = arith.constant 256 : index
    %c0_11 = arith.constant 0 : index
    %11 = vector.load %arg3[%c256, %c0_11] : memref<768x128xbf16, #tpu.memory_space<vmem>>, vector<128x128xbf16>
    %cst_12 = arith.constant dense<0.000000e+00> : vector<162x128xf32>
    %12 = tpu.matmul %10, %11, %cst_12 {dimension_numbers = #tpu.dot_dimension_numbers<[1], [0], [0], [1], [0, 0, 1, 1], [], []>} : vector<162x128xbf16>, vector<128x128xbf16>, vector<162x128xf32> -> vector<162x128xf32>
    %13 = arith.addf %8, %12 : vector<162x128xf32>
    %c0_13 = arith.constant 0 : index
    %c1_14 = arith.constant 1 : index
    %c0_15 = arith.constant 0 : index
    %14 = vector.load %arg2[%c0_13, %c1_14, %c0_15] : memref<1x178x128xbf16, #tpu.memory_space<vmem>>, vector<1x162x128xbf16>
    %15 = vector.shape_cast %14 : vector<1x162x128xbf16> to vector<162x128xbf16>
    %c384 = arith.constant 384 : index
    %c0_16 = arith.constant 0 : index
    %16 = vector.load %arg3[%c384, %c0_16] : memref<768x128xbf16, #tpu.memory_space<vmem>>, vector<128x128xbf16>
    %cst_17 = arith.constant dense<0.000000e+00> : vector<162x128xf32>
    %17 = tpu.matmul %15, %16, %cst_17 {dimension_numbers = #tpu.dot_dimension_numbers<[1], [0], [0], [1], [0, 0, 1, 1], [], []>} : vector<162x128xbf16>, vector<128x128xbf16>, vector<162x128xf32> -> vector<162x128xf32>
    %18 = arith.addf %13, %17 : vector<162x128xf32>
    %c0_18 = arith.constant 0 : index
    %c9 = arith.constant 9 : index
    %c0_19 = arith.constant 0 : index
    %19 = vector.load %arg1[%c0_18, %c9, %c0_19] : memref<1x178x128xbf16, #tpu.memory_space<vmem>>, vector<1x162x128xbf16>
    %20 = vector.shape_cast %19 : vector<1x162x128xbf16> to vector<162x128xbf16>
    %c512 = arith.constant 512 : index
    %c0_20 = arith.constant 0 : index
    %21 = vector.load %arg3[%c512, %c0_20] : memref<768x128xbf16, #tpu.memory_space<vmem>>, vector<128x128xbf16>
    %cst_21 = arith.constant dense<0.000000e+00> : vector<162x128xf32>
    %22 = tpu.matmul %20, %21, %cst_21 {dimension_numbers = #tpu.dot_dimension_numbers<[1], [0], [0], [1], [0, 0, 1, 1], [], []>} : vector<162x128xbf16>, vector<128x128xbf16>, vector<162x128xf32> -> vector<162x128xf32>
    %23 = arith.addf %18, %22 : vector<162x128xf32>
    %c0_22 = arith.constant 0 : index
    %c10 = arith.constant 10 : index
    %c0_23 = arith.constant 0 : index
    %24 = vector.load %arg1[%c0_22, %c10, %c0_23] : memref<1x178x128xbf16, #tpu.memory_space<vmem>>, vector<1x162x128xbf16>
    %25 = vector.shape_cast %24 : vector<1x162x128xbf16> to vector<162x128xbf16>
    %c640 = arith.constant 640 : index
    %c0_24 = arith.constant 0 : index
    %26 = vector.load %arg3[%c640, %c0_24] : memref<768x128xbf16, #tpu.memory_space<vmem>>, vector<128x128xbf16>
    %cst_25 = arith.constant dense<0.000000e+00> : vector<162x128xf32>
    %27 = tpu.matmul %25, %26, %cst_25 {dimension_numbers = #tpu.dot_dimension_numbers<[1], [0], [0], [1], [0, 0, 1, 1], [], []>} : vector<162x128xbf16>, vector<128x128xbf16>, vector<162x128xf32> -> vector<162x128xf32>
    %28 = arith.addf %23, %27 : vector<162x128xf32>
    %c0_26 = arith.constant 0 : index
    %c0_27 = arith.constant 0 : index
    %29 = vector.load %arg4[%c0_26, %c0_27] : memref<3x128xf32, #tpu.memory_space<vmem>>, vector<1x128xf32>
    %c1_28 = arith.constant 1 : index
    %c0_29 = arith.constant 0 : index
    %30 = vector.load %arg4[%c1_28, %c0_29] : memref<3x128xf32, #tpu.memory_space<vmem>>, vector<1x128xf32>
    %c2 = arith.constant 2 : index
    %c0_30 = arith.constant 0 : index
    %31 = vector.load %arg4[%c2, %c0_30] : memref<3x128xf32, #tpu.memory_space<vmem>>, vector<1x128xf32>
    %32 = vector.broadcast %29 : vector<1x128xf32> to vector<162x128xf32>
    %33 = arith.addf %28, %32 : vector<162x128xf32>
    %cst_31 = arith.constant 2.000000e-01 : f32
    %34 = vector.broadcast %cst_31 : f32 to vector<162x128xf32>
    %35 = arith.mulf %34, %33 : vector<162x128xf32>
    %36 = arith.maximumf %33, %35 : vector<162x128xf32>
    %37 = vector.broadcast %30 : vector<1x128xf32> to vector<162x128xf32>
    %38 = arith.mulf %36, %37 : vector<162x128xf32>
    %39 = vector.broadcast %31 : vector<1x128xf32> to vector<162x128xf32>
    %40 = arith.addf %38, %39 : vector<162x128xf32>
    %c0_32 = arith.constant 0 : index
    %c0_33 = arith.constant 0 : index
    %41 = vector.load %arg14[%c0_32, %c0_33] : memref<162x128xf32, #tpu.memory_space<vmem>>, vector<162x128xf32>
    tpu.vector_store %arg14[%c0_32, %c0_33], %40 {strides = array<i32>} : memref<162x128xf32, #tpu.memory_space<vmem>>, vector<162x128xf32>,
    %cst_34 = arith.constant 0.000000e+00 : f32
    %42 = vector.broadcast %cst_34 : f32 to vector<66x128xf32>
    %c0_35 = arith.constant 0 : index
    %c0_36 = arith.constant 0 : index
    %43 = vector.load %arg17[%c0_35, %c0_36] : memref<66x128xf32, #tpu.memory_space<vmem>>, vector<66x128xf32>
    tpu.vector_store %arg17[%c0_35, %c0_36], %42 {strides = array<i32>} : memref<66x128xf32, #tpu.memory_space<vmem>>, vector<66x128xf32>,
    %cst_37 = arith.constant 0.000000e+00 : f32
    %44 = vector.broadcast %cst_37 : f32 to vector<66x128xf32>
    %c0_38 = arith.constant 0 : index
    %c0_39 = arith.constant 0 : index
    %45 = vector.load %arg18[%c0_38, %c0_39] : memref<66x128xf32, #tpu.memory_space<vmem>>, vector<66x128xf32>
    tpu.vector_store %arg18[%c0_38, %c0_39], %44 {strides = array<i32>} : memref<66x128xf32, #tpu.memory_space<vmem>>, vector<66x128xf32>,
    %c0_40 = arith.constant 0 : index
    %c0_41 = arith.constant 0 : index
    %46 = tpu.strided_load %arg14[%c0_40, %c0_41] {strides = array<i32: 2, 1>} : memref<162x128xf32, #tpu.memory_space<vmem>>, vector<4x128xf32>
    %47 = vector.extract_strided_slice %46 {offsets = [0, 0], sizes = [4, 64], strides = [1, 1]} : vector<4x128xf32> to vector<4x64xf32>
    %c0_42 = arith.constant 0 : index
    %c64 = arith.constant 64 : index
    %48 = vector.load %arg18[%c0_42, %c64] : memref<66x128xf32, #tpu.memory_space<vmem>>, vector<4x64xf32>
    tpu.vector_store %arg18[%c0_42, %c64], %47 {strides = array<i32>} : memref<66x128xf32, #tpu.memory_space<vmem>>, vector<4x64xf32>,
    %c18 = arith.constant 18 : index
    %c0_43 = arith.constant 0 : index
    %49 = tpu.strided_load %arg14[%c18, %c0_43] {strides = array<i32: 2, 1>} : memref<162x128xf32, #tpu.memory_space<vmem>>, vector<4x128xf32>
    %50 = vector.extract_strided_slice %49 {offsets = [0, 0], sizes = [4, 64], strides = [1, 1]} : vector<4x128xf32> to vector<4x64xf32>
    %c5 = arith.constant 5 : index
    %c64_44 = arith.constant 64 : index
    %51 = vector.load %arg18[%c5, %c64_44] : memref<66x128xf32, #tpu.memory_space<vmem>>, vector<4x64xf32>
    tpu.vector_store %arg18[%c5, %c64_44], %50 {strides = array<i32>} : memref<66x128xf32, #tpu.memory_space<vmem>>, vector<4x64xf32>,
    %c36 = arith.constant 36 : index
    %c0_45 = arith.constant 0 : index
    %52 = tpu.strided_load %arg14[%c36, %c0_45] {strides = array<i32: 2, 1>} : memref<162x128xf32, #tpu.memory_space<vmem>>, vector<4x128xf32>
    %53 = vector.extract_strided_slice %52 {offsets = [0, 0], sizes = [4, 64], strides = [1, 1]} : vector<4x128xf32> to vector<4x64xf32>
    %c10_46 = arith.constant 10 : index
    %c64_47 = arith.constant 64 : index
    %54 = vector.load %arg18[%c10_46, %c64_47] : memref<66x128xf32, #tpu.memory_space<vmem>>, vector<4x64xf32>
    tpu.vector_store %arg18[%c10_46, %c64_47], %53 {strides = array<i32>} : memref<66x128xf32, #tpu.memory_space<vmem>>, vector<4x64xf32>,
    %c54 = arith.constant 54 : index
    %c0_48 = arith.constant 0 : index
    %55 = tpu.strided_load %arg14[%c54, %c0_48] {strides = array<i32: 2, 1>} : memref<162x128xf32, #tpu.memory_space<vmem>>, vector<4x128xf32>
    %56 = vector.extract_strided_slice %55 {offsets = [0, 0], sizes = [4, 64], strides = [1, 1]} : vector<4x128xf32> to vector<4x64xf32>
    %c15 = arith.constant 15 : index
    %c64_49 = arith.constant 64 : index
    %57 = vector.load %arg18[%c15, %c64_49] : memref<66x128xf32, #tpu.memory_space<vmem>>, vector<4x64xf32>
    tpu.vector_store %arg18[%c15, %c64_49], %56 {strides = array<i32>} : memref<66x128xf32, #tpu.memory_space<vmem>>, vector<4x64xf32>,
    %c1_50 = arith.constant 1 : index
    %c0_51 = arith.constant 0 : index
    %58 = tpu.strided_load %arg14[%c1_50, %c0_51] {strides = array<i32: 2, 1>} : memref<162x128xf32, #tpu.memory_space<vmem>>, vector<4x128xf32>
    %59 = vector.extract_strided_slice %58 {offsets = [0, 0], sizes = [4, 64], strides = [1, 1]} : vector<4x128xf32> to vector<4x64xf32>
    %c1_52 = arith.constant 1 : index
    %c0_53 = arith.constant 0 : index
    %60 = vector.load %arg18[%c1_52, %c0_53] : memref<66x128xf32, #tpu.memory_space<vmem>>, vector<4x64xf32>
    tpu.vector_store %arg18[%c1_52, %c0_53], %59 {strides = array<i32>} : memref<66x128xf32, #tpu.memory_space<vmem>>, vector<4x64xf32>,
    %c19 = arith.constant 19 : index
    %c0_54 = arith.constant 0 : index
    %61 = tpu.strided_load %arg14[%c19, %c0_54] {strides = array<i32: 2, 1>} : memref<162x128xf32, #tpu.memory_space<vmem>>, vector<4x128xf32>
    %62 = vector.extract_strided_slice %61 {offsets = [0, 0], sizes = [4, 64], strides = [1, 1]} : vector<4x128xf32> to vector<4x64xf32>
    %c6 = arith.constant 6 : index
    %c0_55 = arith.constant 0 : index
    %63 = vector.load %arg18[%c6, %c0_55] : memref<66x128xf32, #tpu.memory_space<vmem>>, vector<4x64xf32>
    tpu.vector_store %arg18[%c6, %c0_55], %62 {strides = array<i32>} : memref<66x128xf32, #tpu.memory_space<vmem>>, vector<4x64xf32>,
    %c37 = arith.constant 37 : index
    %c0_56 = arith.constant 0 : index
    %64 = tpu.strided_load %arg14[%c37, %c0_56] {strides = array<i32: 2, 1>} : memref<162x128xf32, #tpu.memory_space<vmem>>, vector<4x128xf32>
    %65 = vector.extract_strided_slice %64 {offsets = [0, 0], sizes = [4, 64], strides = [1, 1]} : vector<4x128xf32> to vector<4x64xf32>
    %c11 = arith.constant 11 : index
    %c0_57 = arith.constant 0 : index
    %66 = vector.load %arg18[%c11, %c0_57] : memref<66x128xf32, #tpu.memory_space<vmem>>, vector<4x64xf32>
    tpu.vector_store %arg18[%c11, %c0_57], %65 {strides = array<i32>} : memref<66x128xf32, #tpu.memory_space<vmem>>, vector<4x64xf32>,
    %c55 = arith.constant 55 : index
    %c0_58 = arith.constant 0 : index
    %67 = tpu.strided_load %arg14[%c55, %c0_58] {strides = array<i32: 2, 1>} : memref<162x128xf32, #tpu.memory_space<vmem>>, vector<4x128xf32>
    %68 = vector.extract_strided_slice %67 {offsets = [0, 0], sizes = [4, 64], strides = [1, 1]} : vector<4x128xf32> to vector<4x64xf32>
    %c16 = arith.constant 16 : index
    %c0_59 = arith.constant 0 : index
    %69 = vector.load %arg18[%c16, %c0_59] : memref<66x128xf32, #tpu.memory_space<vmem>>, vector<4x64xf32>
    tpu.vector_store %arg18[%c16, %c0_59], %68 {strides = array<i32>} : memref<66x128xf32, #tpu.memory_space<vmem>>, vector<4x64xf32>,
    %c9_60 = arith.constant 9 : index
    %c0_61 = arith.constant 0 : index
    %70 = tpu.strided_load %arg14[%c9_60, %c0_61] {strides = array<i32: 2, 1>} : memref<162x128xf32, #tpu.memory_space<vmem>>, vector<4x128xf32>
    %71 = vector.extract_strided_slice %70 {offsets = [0, 0], sizes = [4, 64], strides = [1, 1]} : vector<4x128xf32> to vector<4x64xf32>
    %c5_62 = arith.constant 5 : index
    %c64_63 = arith.constant 64 : index
    %72 = vector.load %arg17[%c5_62, %c64_63] : memref<66x128xf32, #tpu.memory_space<vmem>>, vector<4x64xf32>
    tpu.vector_store %arg17[%c5_62, %c64_63], %71 {strides = array<i32>} : memref<66x128xf32, #tpu.memory_space<vmem>>, vector<4x64xf32>,
    %c27 = arith.constant 27 : index
    %c0_64 = arith.constant 0 : index
    %73 = tpu.strided_load %arg14[%c27, %c0_64] {strides = array<i32: 2, 1>} : memref<162x128xf32, #tpu.memory_space<vmem>>, vector<4x128xf32>
    %74 = vector.extract_strided_slice %73 {offsets = [0, 0], sizes = [4, 64], strides = [1, 1]} : vector<4x128xf32> to vector<4x64xf32>
    %c10_65 = arith.constant 10 : index
    %c64_66 = arith.constant 64 : index
    %75 = vector.load %arg17[%c10_65, %c64_66] : memref<66x128xf32, #tpu.memory_space<vmem>>, vector<4x64xf32>
    tpu.vector_store %arg17[%c10_65, %c64_66], %74 {strides = array<i32>} : memref<66x128xf32, #tpu.memory_space<vmem>>, vector<4x64xf32>,
    %c45 = arith.constant 45 : index
    %c0_67 = arith.constant 0 : index
    %76 = tpu.strided_load %arg14[%c45, %c0_67] {strides = array<i32: 2, 1>} : memref<162x128xf32, #tpu.memory_space<vmem>>, vector<4x128xf32>
    %77 = vector.extract_strided_slice %76 {offsets = [0, 0], sizes = [4, 64], strides = [1, 1]} : vector<4x128xf32> to vector<4x64xf32>
    %c15_68 = arith.constant 15 : index
    %c64_69 = arith.constant 64 : index
    %78 = vector.load %arg17[%c15_68, %c64_69] : memref<66x128xf32, #tpu.memory_space<vmem>>, vector<4x64xf32>
    tpu.vector_store %arg17[%c15_68, %c64_69], %77 {strides = array<i32>} : memref<66x128xf32, #tpu.memory_space<vmem>>, vector<4x64xf32>,
    %c63 = arith.constant 63 : index
    %c0_70 = arith.constant 0 : index
    %79 = tpu.strided_load %arg14[%c63, %c0_70] {strides = array<i32: 2, 1>} : memref<162x128xf32, #tpu.memory_space<vmem>>, vector<4x128xf32>
    %80 = vector.extract_strided_slice %79 {offsets = [0, 0], sizes = [4, 64], strides = [1, 1]} : vector<4x128xf32> to vector<4x64xf32>
    %c20 = arith.constant 20 : index
    %c64_71 = arith.constant 64 : index
    %81 = vector.load %arg17[%c20, %c64_71] : memref<66x128xf32, #tpu.memory_space<vmem>>, vector<4x64xf32>
    tpu.vector_store %arg17[%c20, %c64_71], %80 {strides = array<i32>} : memref<66x128xf32, #tpu.memory_space<vmem>>, vector<4x64xf32>,
    %c10_72 = arith.constant 10 : index
    %c0_73 = arith.constant 0 : index
    %82 = tpu.strided_load %arg14[%c10_72, %c0_73] {strides = array<i32: 2, 1>} : memref<162x128xf32, #tpu.memory_space<vmem>>, vector<4x128xf32>
    %83 = vector.extract_strided_slice %82 {offsets = [0, 0], sizes = [4, 64], strides = [1, 1]} : vector<4x128xf32> to vector<4x64xf32>
    %c6_74 = arith.constant 6 : index
    %c0_75 = arith.constant 0 : index
    %84 = vector.load %arg17[%c6_74, %c0_75] : memref<66x128xf32, #tpu.memory_space<vmem>>, vector<4x64xf32>
    tpu.vector_store %arg17[%c6_74, %c0_75], %83 {strides = array<i32>} : memref<66x128xf32, #tpu.memory_space<vmem>>, vector<4x64xf32>,
    %c28 = arith.constant 28 : index
    %c0_76 = arith.constant 0 : index
    %85 = tpu.strided_load %arg14[%c28, %c0_76] {strides = array<i32: 2, 1>} : memref<162x128xf32, #tpu.memory_space<vmem>>, vector<4x128xf32>
    %86 = vector.extract_strided_slice %85 {offsets = [0, 0], sizes = [4, 64], strides = [1, 1]} : vector<4x128xf32> to vector<4x64xf32>
    %c11_77 = arith.constant 11 : index
    %c0_78 = arith.constant 0 : index
    %87 = vector.load %arg17[%c11_77, %c0_78] : memref<66x128xf32, #tpu.memory_space<vmem>>, vector<4x64xf32>
    tpu.vector_store %arg17[%c11_77, %c0_78], %86 {strides = array<i32>} : memref<66x128xf32, #tpu.memory_space<vmem>>, vector<4x64xf32>,
    %c46 = arith.constant 46 : index
    %c0_79 = arith.constant 0 : index
    %88 = tpu.strided_load %arg14[%c46, %c0_79] {strides = array<i32: 2, 1>} : memref<162x128xf32, #tpu.memory_space<vmem>>, vector<4x128xf32>
    %89 = vector.extract_strided_slice %88 {offsets = [0, 0], sizes = [4, 64], strides = [1, 1]} : vector<4x128xf32> to vector<4x64xf32>
    %c16_80 = arith.constant 16 : index
    %c0_81 = arith.constant 0 : index
    %90 = vector.load %arg17[%c16_80, %c0_81] : memref<66x128xf32, #tpu.memory_space<vmem>>, vector<4x64xf32>
    tpu.vector_store %arg17[%c16_80, %c0_81], %89 {strides = array<i32>} : memref<66x128xf32, #tpu.memory_space<vmem>>, vector<4x64xf32>,
    %c64_82 = arith.constant 64 : index
    %c0_83 = arith.constant 0 : index
    %91 = tpu.strided_load %arg14[%c64_82, %c0_83] {strides = array<i32: 2, 1>} : memref<162x128xf32, #tpu.memory_space<vmem>>, vector<4x128xf32>
    %92 = vector.extract_strided_slice %91 {offsets = [0, 0], sizes = [4, 64], strides = [1, 1]} : vector<4x128xf32> to vector<4x64xf32>
    %c21 = arith.constant 21 : index
    %c0_84 = arith.constant 0 : index
    %93 = vector.load %arg17[%c21, %c0_84] : memref<66x128xf32, #tpu.memory_space<vmem>>, vector<4x64xf32>
    tpu.vector_store %arg17[%c21, %c0_84], %92 {strides = array<i32>} : memref<66x128xf32, #tpu.memory_space<vmem>>, vector<4x64xf32>,
    %c81 = arith.constant 81 : index
    %c0_85 = arith.constant 0 : index
    %94 = tpu.strided_load %arg14[%c81, %c0_85] {strides = array<i32: 2, 1>} : memref<162x128xf32, #tpu.memory_space<vmem>>, vector<4x128xf32>
    %95 = vector.extract_strided_slice %94 {offsets = [0, 0], sizes = [4, 64], strides = [1, 1]} : vector<4x128xf32> to vector<4x64xf32>
    %c25 = arith.constant 25 : index
    %c64_86 = arith.constant 64 : index
    %96 = vector.load %arg18[%c25, %c64_86] : memref<66x128xf32, #tpu.memory_space<vmem>>, vector<4x64xf32>
    tpu.vector_store %arg18[%c25, %c64_86], %95 {strides = array<i32>} : memref<66x128xf32, #tpu.memory_space<vmem>>, vector<4x64xf32>,
    %c99 = arith.constant 99 : index
    %c0_87 = arith.constant 0 : index
    %97 = tpu.strided_load %arg14[%c99, %c0_87] {strides = array<i32: 2, 1>} : memref<162x128xf32, #tpu.memory_space<vmem>>, vector<4x128xf32>
    %98 = vector.extract_strided_slice %97 {offsets = [0, 0], sizes = [4, 64], strides = [1, 1]} : vector<4x128xf32> to vector<4x64xf32>
    %c30 = arith.constant 30 : index
    %c64_88 = arith.constant 64 : index
    %99 = vector.load %arg18[%c30, %c64_88] : memref<66x128xf32, #tpu.memory_space<vmem>>, vector<4x64xf32>
    tpu.vector_store %arg18[%c30, %c64_88], %98 {strides = array<i32>} : memref<66x128xf32, #tpu.memory_space<vmem>>, vector<4x64xf32>,
    %c117 = arith.constant 117 : index
    %c0_89 = arith.constant 0 : index
    %100 = tpu.strided_load %arg14[%c117, %c0_89] {strides = array<i32: 2, 1>} : memref<162x128xf32, #tpu.memory_space<vmem>>, vector<4x128xf32>
    %101 = vector.extract_strided_slice %100 {offsets = [0, 0], sizes = [4, 64], strides = [1, 1]} : vector<4x128xf32> to vector<4x64xf32>
    %c35 = arith.constant 35 : index
    %c64_90 = arith.constant 64 : index
    %102 = vector.load %arg18[%c35, %c64_90] : memref<66x128xf32, #tpu.memory_space<vmem>>, vector<4x64xf32>
    tpu.vector_store %arg18[%c35, %c64_90], %101 {strides = array<i32>} : memref<66x128xf32, #tpu.memory_space<vmem>>, vector<4x64xf32>,
    %c135 = arith.constant 135 : index
    %c0_91 = arith.constant 0 : index
    %103 = tpu.strided_load %arg14[%c135, %c0_91] {strides = array<i32: 2, 1>} : memref<162x128xf32, #tpu.memory_space<vmem>>, vector<4x128xf32>
    %104 = vector.extract_strided_slice %103 {offsets = [0, 0], sizes = [4, 64], strides = [1, 1]} : vector<4x128xf32> to vector<4x64xf32>
    %c40 = arith.constant 40 : index
    %c64_92 = arith.constant 64 : index
    %105 = vector.load %arg18[%c40, %c64_92] : memref<66x128xf32, #tpu.memory_space<vmem>>, vector<4x64xf32>
    tpu.vector_store %arg18[%c40, %c64_92], %104 {strides = array<i32>} : memref<66x128xf32, #tpu.memory_space<vmem>>, vector<4x64xf32>,
    %c82 = arith.constant 82 : index
    %c0_93 = arith.constant 0 : index
    %106 = tpu.strided_load %arg14[%c82, %c0_93] {strides = array<i32: 2, 1>} : memref<162x128xf32, #tpu.memory_space<vmem>>, vector<4x128xf32>
    %107 = vector.extract_strided_slice %106 {offsets = [0, 0], sizes = [4, 64], strides = [1, 1]} : vector<4x128xf32> to vector<4x64xf32>
    %c26 = arith.constant 26 : index
    %c0_94 = arith.constant 0 : index
    %108 = vector.load %arg18[%c26, %c0_94] : memref<66x128xf32, #tpu.memory_space<vmem>>, vector<4x64xf32>
    tpu.vector_store %arg18[%c26, %c0_94], %107 {strides = array<i32>} : memref<66x128xf32, #tpu.memory_space<vmem>>, vector<4x64xf32>,
    %c100 = arith.constant 100 : index
    %c0_95 = arith.constant 0 : index
    %109 = tpu.strided_load %arg14[%c100, %c0_95] {strides = array<i32: 2, 1>} : memref<162x128xf32, #tpu.memory_space<vmem>>, vector<4x128xf32>
    %110 = vector.extract_strided_slice %109 {offsets = [0, 0], sizes = [4, 64], strides = [1, 1]} : vector<4x128xf32> to vector<4x64xf32>
    %c31 = arith.constant 31 : index
    %c0_96 = arith.constant 0 : index
    %111 = vector.load %arg18[%c31, %c0_96] : memref<66x128xf32, #tpu.memory_space<vmem>>, vector<4x64xf32>
    tpu.vector_store %arg18[%c31, %c0_96], %110 {strides = array<i32>} : memref<66x128xf32, #tpu.memory_space<vmem>>, vector<4x64xf32>,
    %c118 = arith.constant 118 : index
    %c0_97 = arith.constant 0 : index
    %112 = tpu.strided_load %arg14[%c118, %c0_97] {strides = array<i32: 2, 1>} : memref<162x128xf32, #tpu.memory_space<vmem>>, vector<4x128xf32>
    %113 = vector.extract_strided_slice %112 {offsets = [0, 0], sizes = [4, 64], strides = [1, 1]} : vector<4x128xf32> to vector<4x64xf32>
    %c36_98 = arith.constant 36 : index
    %c0_99 = arith.constant 0 : index
    %114 = vector.load %arg18[%c36_98, %c0_99] : memref<66x128xf32, #tpu.memory_space<vmem>>, vector<4x64xf32>
    tpu.vector_store %arg18[%c36_98, %c0_99], %113 {strides = array<i32>} : memref<66x128xf32, #tpu.memory_space<vmem>>, vector<4x64xf32>,
    %c136 = arith.constant 136 : index
    %c0_100 = arith.constant 0 : index
    %115 = tpu.strided_load %arg14[%c136, %c0_100] {strides = array<i32: 2, 1>} : memref<162x128xf32, #tpu.memory_space<vmem>>, vector<4x128xf32>
    %116 = vector.extract_strided_slice %115 {offsets = [0, 0], sizes = [4, 64], strides = [1, 1]} : vector<4x128xf32> to vector<4x64xf32>
    %c41 = arith.constant 41 : index
    %c0_101 = arith.constant 0 : index
    %117 = vector.load %arg18[%c41, %c0_101] : memref<66x128xf32, #tpu.memory_space<vmem>>, vector<4x64xf32>
    tpu.vector_store %arg18[%c41, %c0_101], %116 {strides = array<i32>} : memref<66x128xf32, #tpu.memory_space<vmem>>, vector<4x64xf32>,
    %c90 = arith.constant 90 : index
    %c0_102 = arith.constant 0 : index
    %118 = tpu.strided_load %arg14[%c90, %c0_102] {strides = array<i32: 2, 1>} : memref<162x128xf32, #tpu.memory_space<vmem>>, vector<4x128xf32>
    %119 = vector.extract_strided_slice %118 {offsets = [0, 0], sizes = [4, 64], strides = [1, 1]} : vector<4x128xf32> to vector<4x64xf32>
    %c30_103 = arith.constant 30 : index
    %c64_104 = arith.constant 64 : index
    %120 = vector.load %arg17[%c30_103, %c64_104] : memref<66x128xf32, #tpu.memory_space<vmem>>, vector<4x64xf32>
    tpu.vector_store %arg17[%c30_103, %c64_104], %119 {strides = array<i32>} : memref<66x128xf32, #tpu.memory_space<vmem>>, vector<4x64xf32>,
    %c108 = arith.constant 108 : index
    %c0_105 = arith.constant 0 : index
    %121 = tpu.strided_load %arg14[%c108, %c0_105] {strides = array<i32: 2, 1>} : memref<162x128xf32, #tpu.memory_space<vmem>>, vector<4x128xf32>
    %122 = vector.extract_strided_slice %121 {offsets = [0, 0], sizes = [4, 64], strides = [1, 1]} : vector<4x128xf32> to vector<4x64xf32>
    %c35_106 = arith.constant 35 : index
    %c64_107 = arith.constant 64 : index
    %123 = vector.load %arg17[%c35_106, %c64_107] : memref<66x128xf32, #tpu.memory_space<vmem>>, vector<4x64xf32>
    tpu.vector_store %arg17[%c35_106, %c64_107], %122 {strides = array<i32>} : memref<66x128xf32, #tpu.memory_space<vmem>>, vector<4x64xf32>,
    %c126 = arith.constant 126 : index
    %c0_108 = arith.constant 0 : index
    %124 = tpu.strided_load %arg14[%c126, %c0_108] {strides = array<i32: 2, 1>} : memref<162x128xf32, #tpu.memory_space<vmem>>, vector<4x128xf32>
    %125 = vector.extract_strided_slice %124 {offsets = [0, 0], sizes = [4, 64], strides = [1, 1]} : vector<4x128xf32> to vector<4x64xf32>
    %c40_109 = arith.constant 40 : index
    %c64_110 = arith.constant 64 : index
    %126 = vector.load %arg17[%c40_109, %c64_110] : memref<66x128xf32, #tpu.memory_space<vmem>>, vector<4x64xf32>
    tpu.vector_store %arg17[%c40_109, %c64_110], %125 {strides = array<i32>} : memref<66x128xf32, #tpu.memory_space<vmem>>, vector<4x64xf32>,
    %c144 = arith.constant 144 : index
    %c0_111 = arith.constant 0 : index
    %127 = tpu.strided_load %arg14[%c144, %c0_111] {strides = array<i32: 2, 1>} : memref<162x128xf32, #tpu.memory_space<vmem>>, vector<4x128xf32>
    %128 = vector.extract_strided_slice %127 {offsets = [0, 0], sizes = [4, 64], strides = [1, 1]} : vector<4x128xf32> to vector<4x64xf32>
    %c45_112 = arith.constant 45 : index
    %c64_113 = arith.constant 64 : index
    %129 = vector.load %arg17[%c45_112, %c64_113] : memref<66x128xf32, #tpu.memory_space<vmem>>, vector<4x64xf32>
    tpu.vector_store %arg17[%c45_112, %c64_113], %128 {strides = array<i32>} : memref<66x128xf32, #tpu.memory_space<vmem>>, vector<4x64xf32>,
    %c91 = arith.constant 91 : index
    %c0_114 = arith.constant 0 : index
    %130 = tpu.strided_load %arg14[%c91, %c0_114] {strides = array<i32: 2, 1>} : memref<162x128xf32, #tpu.memory_space<vmem>>, vector<4x128xf32>
    %131 = vector.extract_strided_slice %130 {offsets = [0, 0], sizes = [4, 64], strides = [1, 1]} : vector<4x128xf32> to vector<4x64xf32>
    %c31_115 = arith.constant 31 : index
    %c0_116 = arith.constant 0 : index
    %132 = vector.load %arg17[%c31_115, %c0_116] : memref<66x128xf32, #tpu.memory_space<vmem>>, vector<4x64xf32>
    tpu.vector_store %arg17[%c31_115, %c0_116], %131 {strides = array<i32>} : memref<66x128xf32, #tpu.memory_space<vmem>>, vector<4x64xf32>,
    %c109 = arith.constant 109 : index
    %c0_117 = arith.constant 0 : index
    %133 = tpu.strided_load %arg14[%c109, %c0_117] {strides = array<i32: 2, 1>} : memref<162x128xf32, #tpu.memory_space<vmem>>, vector<4x128xf32>
    %134 = vector.extract_strided_slice %133 {offsets = [0, 0], sizes = [4, 64], strides = [1, 1]} : vector<4x128xf32> to vector<4x64xf32>
    %c36_118 = arith.constant 36 : index
    %c0_119 = arith.constant 0 : index
    %135 = vector.load %arg17[%c36_118, %c0_119] : memref<66x128xf32, #tpu.memory_space<vmem>>, vector<4x64xf32>
    tpu.vector_store %arg17[%c36_118, %c0_119], %134 {strides = array<i32>} : memref<66x128xf32, #tpu.memory_space<vmem>>, vector<4x64xf32>,
    %c127 = arith.constant 127 : index
    %c0_120 = arith.constant 0 : index
    %136 = tpu.strided_load %arg14[%c127, %c0_120] {strides = array<i32: 2, 1>} : memref<162x128xf32, #tpu.memory_space<vmem>>, vector<4x128xf32>
    %137 = vector.extract_strided_slice %136 {offsets = [0, 0], sizes = [4, 64], strides = [1, 1]} : vector<4x128xf32> to vector<4x64xf32>
    %c41_121 = arith.constant 41 : index
    %c0_122 = arith.constant 0 : index
    %138 = vector.load %arg17[%c41_121, %c0_122] : memref<66x128xf32, #tpu.memory_space<vmem>>, vector<4x64xf32>
    tpu.vector_store %arg17[%c41_121, %c0_122], %137 {strides = array<i32>} : memref<66x128xf32, #tpu.memory_space<vmem>>, vector<4x64xf32>,
    %c145 = arith.constant 145 : index
    %c0_123 = arith.constant 0 : index
    %139 = tpu.strided_load %arg14[%c145, %c0_123] {strides = array<i32: 2, 1>} : memref<162x128xf32, #tpu.memory_space<vmem>>, vector<4x128xf32>
    %140 = vector.extract_strided_slice %139 {offsets = [0, 0], sizes = [4, 64], strides = [1, 1]} : vector<4x128xf32> to vector<4x64xf32>
    %c46_124 = arith.constant 46 : index
    %c0_125 = arith.constant 0 : index
    %141 = vector.load %arg17[%c46_124, %c0_125] : memref<66x128xf32, #tpu.memory_space<vmem>>, vector<4x64xf32>
    tpu.vector_store %arg17[%c46_124, %c0_125], %140 {strides = array<i32>} : memref<66x128xf32, #tpu.memory_space<vmem>>, vector<4x64xf32>,
    %c0_126 = arith.constant 0 : index
    %c0_127 = arith.constant 0 : index
    %142 = vector.load %arg17[%c0_126, %c0_127] : memref<66x128xf32, #tpu.memory_space<vmem>>, vector<50x128xf32>
    %143 = arith.truncf %142 : vector<50x128xf32> to vector<50x128xbf16>
    %c0_128 = arith.constant 0 : index
    %c0_129 = arith.constant 0 : index
    %144 = vector.load %arg5[%c0_128, %c0_129] : memref<768x128xbf16, #tpu.memory_space<vmem>>, vector<128x128xbf16>
    %cst_130 = arith.constant dense<0.000000e+00> : vector<50x128xf32>
    %145 = tpu.matmul %143, %144, %cst_130 {dimension_numbers = #tpu.dot_dimension_numbers<[1], [0], [0], [1], [0, 0, 1, 1], [], []>} : vector<50x128xbf16>, vector<128x128xbf16>, vector<50x128xf32> -> vector<50x128xf32>
    %c1_131 = arith.constant 1 : index
    %c0_132 = arith.constant 0 : index
    %146 = vector.load %arg17[%c1_131, %c0_132] : memref<66x128xf32, #tpu.memory_space<vmem>>, vector<50x128xf32>
    %147 = arith.truncf %146 : vector<50x128xf32> to vector<50x128xbf16>
    %c128_133 = arith.constant 128 : index
    %c0_134 = arith.constant 0 : index
    %148 = vector.load %arg5[%c128_133, %c0_134] : memref<768x128xbf16, #tpu.memory_space<vmem>>, vector<128x128xbf16>
    %cst_135 = arith.constant dense<0.000000e+00> : vector<50x128xf32>
    %149 = tpu.matmul %147, %148, %cst_135 {dimension_numbers = #tpu.dot_dimension_numbers<[1], [0], [0], [1], [0, 0, 1, 1], [], []>} : vector<50x128xbf16>, vector<128x128xbf16>, vector<50x128xf32> -> vector<50x128xf32>
    %150 = arith.addf %145, %149 : vector<50x128xf32>
    %c0_136 = arith.constant 0 : index
    %c0_137 = arith.constant 0 : index
    %151 = vector.load %arg18[%c0_136, %c0_137] : memref<66x128xf32, #tpu.memory_space<vmem>>, vector<50x128xf32>
    %152 = arith.truncf %151 : vector<50x128xf32> to vector<50x128xbf16>
    %c256_138 = arith.constant 256 : index
    %c0_139 = arith.constant 0 : index
    %153 = vector.load %arg5[%c256_138, %c0_139] : memref<768x128xbf16, #tpu.memory_space<vmem>>, vector<128x128xbf16>
    %cst_140 = arith.constant dense<0.000000e+00> : vector<50x128xf32>
    %154 = tpu.matmul %152, %153, %cst_140 {dimension_numbers = #tpu.dot_dimension_numbers<[1], [0], [0], [1], [0, 0, 1, 1], [], []>} : vector<50x128xbf16>, vector<128x128xbf16>, vector<50x128xf32> -> vector<50x128xf32>
    %155 = arith.addf %150, %154 : vector<50x128xf32>
    %c1_141 = arith.constant 1 : index
    %c0_142 = arith.constant 0 : index
    %156 = vector.load %arg18[%c1_141, %c0_142] : memref<66x128xf32, #tpu.memory_space<vmem>>, vector<50x128xf32>
    %157 = arith.truncf %156 : vector<50x128xf32> to vector<50x128xbf16>
    %c384_143 = arith.constant 384 : index
    %c0_144 = arith.constant 0 : index
    %158 = vector.load %arg5[%c384_143, %c0_144] : memref<768x128xbf16, #tpu.memory_space<vmem>>, vector<128x128xbf16>
    %cst_145 = arith.constant dense<0.000000e+00> : vector<50x128xf32>
    %159 = tpu.matmul %157, %158, %cst_145 {dimension_numbers = #tpu.dot_dimension_numbers<[1], [0], [0], [1], [0, 0, 1, 1], [], []>} : vector<50x128xbf16>, vector<128x128xbf16>, vector<50x128xf32> -> vector<50x128xf32>
    %160 = arith.addf %155, %159 : vector<50x128xf32>
    %c5_146 = arith.constant 5 : index
    %c0_147 = arith.constant 0 : index
    %161 = vector.load %arg17[%c5_146, %c0_147] : memref<66x128xf32, #tpu.memory_space<vmem>>, vector<50x128xf32>
    %162 = arith.truncf %161 : vector<50x128xf32> to vector<50x128xbf16>
    %c512_148 = arith.constant 512 : index
    %c0_149 = arith.constant 0 : index
    %163 = vector.load %arg5[%c512_148, %c0_149] : memref<768x128xbf16, #tpu.memory_space<vmem>>, vector<128x128xbf16>
    %cst_150 = arith.constant dense<0.000000e+00> : vector<50x128xf32>
    %164 = tpu.matmul %162, %163, %cst_150 {dimension_numbers = #tpu.dot_dimension_numbers<[1], [0], [0], [1], [0, 0, 1, 1], [], []>} : vector<50x128xbf16>, vector<128x128xbf16>, vector<50x128xf32> -> vector<50x128xf32>
    %165 = arith.addf %160, %164 : vector<50x128xf32>
    %c6_151 = arith.constant 6 : index
    %c0_152 = arith.constant 0 : index
    %166 = vector.load %arg17[%c6_151, %c0_152] : memref<66x128xf32, #tpu.memory_space<vmem>>, vector<50x128xf32>
    %167 = arith.truncf %166 : vector<50x128xf32> to vector<50x128xbf16>
    %c640_153 = arith.constant 640 : index
    %c0_154 = arith.constant 0 : index
    %168 = vector.load %arg5[%c640_153, %c0_154] : memref<768x128xbf16, #tpu.memory_space<vmem>>, vector<128x128xbf16>
    %cst_155 = arith.constant dense<0.000000e+00> : vector<50x128xf32>
    %169 = tpu.matmul %167, %168, %cst_155 {dimension_numbers = #tpu.dot_dimension_numbers<[1], [0], [0], [1], [0, 0, 1, 1], [], []>} : vector<50x128xbf16>, vector<128x128xbf16>, vector<50x128xf32> -> vector<50x128xf32>
    %170 = arith.addf %165, %169 : vector<50x128xf32>
    %c0_156 = arith.constant 0 : index
    %c0_157 = arith.constant 0 : index
    %171 = vector.load %arg6[%c0_156, %c0_157] : memref<3x128xf32, #tpu.memory_space<vmem>>, vector<1x128xf32>
    %c1_158 = arith.constant 1 : index
    %c0_159 = arith.constant 0 : index
    %172 = vector.load %arg6[%c1_158, %c0_159] : memref<3x128xf32, #tpu.memory_space<vmem>>, vector<1x128xf32>
    %c2_160 = arith.constant 2 : index
    %c0_161 = arith.constant 0 : index
    %173 = vector.load %arg6[%c2_160, %c0_161] : memref<3x128xf32, #tpu.memory_space<vmem>>, vector<1x128xf32>
    %174 = vector.broadcast %171 : vector<1x128xf32> to vector<50x128xf32>
    %175 = arith.addf %170, %174 : vector<50x128xf32>
    %cst_162 = arith.constant 2.000000e-01 : f32
    %176 = vector.broadcast %cst_162 : f32 to vector<50x128xf32>
    %177 = arith.mulf %176, %175 : vector<50x128xf32>
    %178 = arith.maximumf %175, %177 : vector<50x128xf32>
    %179 = vector.broadcast %172 : vector<1x128xf32> to vector<50x128xf32>
    %180 = arith.mulf %178, %179 : vector<50x128xf32>
    %181 = vector.broadcast %173 : vector<1x128xf32> to vector<50x128xf32>
    %182 = arith.addf %180, %181 : vector<50x128xf32>
    %c0_163 = arith.constant 0 : index
    %c0_164 = arith.constant 0 : index
    %183 = vector.load %arg15[%c0_163, %c0_164] : memref<50x128xf32, #tpu.memory_space<vmem>>, vector<50x128xf32>
    tpu.vector_store %arg15[%c0_163, %c0_164], %182 {strides = array<i32>} : memref<50x128xf32, #tpu.memory_space<vmem>>, vector<50x128xf32>,
    %cst_165 = arith.constant 0.000000e+00 : f32
    %184 = vector.broadcast %cst_165 : f32 to vector<34x128xf32>
    %c0_166 = arith.constant 0 : index
    %c0_167 = arith.constant 0 : index
    %185 = vector.load %arg19[%c0_166, %c0_167] : memref<34x128xf32, #tpu.memory_space<vmem>>, vector<34x128xf32>
    tpu.vector_store %arg19[%c0_166, %c0_167], %184 {strides = array<i32>} : memref<34x128xf32, #tpu.memory_space<vmem>>, vector<34x128xf32>,
    %cst_168 = arith.constant 0.000000e+00 : f32
    %186 = vector.broadcast %cst_168 : f32 to vector<34x128xf32>
    %c0_169 = arith.constant 0 : index
    %c0_170 = arith.constant 0 : index
    %187 = vector.load %arg20[%c0_169, %c0_170] : memref<34x128xf32, #tpu.memory_space<vmem>>, vector<34x128xf32>
    tpu.vector_store %arg20[%c0_169, %c0_170], %186 {strides = array<i32>} : memref<34x128xf32, #tpu.memory_space<vmem>>, vector<34x128xf32>,
    %c0_171 = arith.constant 0 : index
    %c0_172 = arith.constant 0 : index
    %188 = tpu.strided_load %arg15[%c0_171, %c0_172] {strides = array<i32: 2, 1>} : memref<50x128xf32, #tpu.memory_space<vmem>>, vector<2x128xf32>
    %189 = vector.extract_strided_slice %188 {offsets = [0, 0], sizes = [2, 64], strides = [1, 1]} : vector<2x128xf32> to vector<2x64xf32>
    %c0_173 = arith.constant 0 : index
    %c64_174 = arith.constant 64 : index
    %190 = vector.load %arg20[%c0_173, %c64_174] : memref<34x128xf32, #tpu.memory_space<vmem>>, vector<2x64xf32>
    tpu.vector_store %arg20[%c0_173, %c64_174], %189 {strides = array<i32>} : memref<34x128xf32, #tpu.memory_space<vmem>>, vector<2x64xf32>,
    %c10_175 = arith.constant 10 : index
    %c0_176 = arith.constant 0 : index
    %191 = tpu.strided_load %arg15[%c10_175, %c0_176] {strides = array<i32: 2, 1>} : memref<50x128xf32, #tpu.memory_space<vmem>>, vector<2x128xf32>
    %192 = vector.extract_strided_slice %191 {offsets = [0, 0], sizes = [2, 64], strides = [1, 1]} : vector<2x128xf32> to vector<2x64xf32>
    %c3 = arith.constant 3 : index
    %c64_177 = arith.constant 64 : index
    %193 = vector.load %arg20[%c3, %c64_177] : memref<34x128xf32, #tpu.memory_space<vmem>>, vector<2x64xf32>
    tpu.vector_store %arg20[%c3, %c64_177], %192 {strides = array<i32>} : memref<34x128xf32, #tpu.memory_space<vmem>>, vector<2x64xf32>,
    %c1_178 = arith.constant 1 : index
    %c0_179 = arith.constant 0 : index
    %194 = tpu.strided_load %arg15[%c1_178, %c0_179] {strides = array<i32: 2, 1>} : memref<50x128xf32, #tpu.memory_space<vmem>>, vector<2x128xf32>
    %195 = vector.extract_strided_slice %194 {offsets = [0, 0], sizes = [2, 64], strides = [1, 1]} : vector<2x128xf32> to vector<2x64xf32>
    %c1_180 = arith.constant 1 : index
    %c0_181 = arith.constant 0 : index
    %196 = vector.load %arg20[%c1_180, %c0_181] : memref<34x128xf32, #tpu.memory_space<vmem>>, vector<2x64xf32>
    tpu.vector_store %arg20[%c1_180, %c0_181], %195 {strides = array<i32>} : memref<34x128xf32, #tpu.memory_space<vmem>>, vector<2x64xf32>,
    %c11_182 = arith.constant 11 : index
    %c0_183 = arith.constant 0 : index
    %197 = tpu.strided_load %arg15[%c11_182, %c0_183] {strides = array<i32: 2, 1>} : memref<50x128xf32, #tpu.memory_space<vmem>>, vector<2x128xf32>
    %198 = vector.extract_strided_slice %197 {offsets = [0, 0], sizes = [2, 64], strides = [1, 1]} : vector<2x128xf32> to vector<2x64xf32>
    %c4 = arith.constant 4 : index
    %c0_184 = arith.constant 0 : index
    %199 = vector.load %arg20[%c4, %c0_184] : memref<34x128xf32, #tpu.memory_space<vmem>>, vector<2x64xf32>
    tpu.vector_store %arg20[%c4, %c0_184], %198 {strides = array<i32>} : memref<34x128xf32, #tpu.memory_space<vmem>>, vector<2x64xf32>,
    %c5_185 = arith.constant 5 : index
    %c0_186 = arith.constant 0 : index
    %200 = tpu.strided_load %arg15[%c5_185, %c0_186] {strides = array<i32: 2, 1>} : memref<50x128xf32, #tpu.memory_space<vmem>>, vector<2x128xf32>
    %201 = vector.extract_strided_slice %200 {offsets = [0, 0], sizes = [2, 64], strides = [1, 1]} : vector<2x128xf32> to vector<2x64xf32>
    %c3_187 = arith.constant 3 : index
    %c64_188 = arith.constant 64 : index
    %202 = vector.load %arg19[%c3_187, %c64_188] : memref<34x128xf32, #tpu.memory_space<vmem>>, vector<2x64xf32>
    tpu.vector_store %arg19[%c3_187, %c64_188], %201 {strides = array<i32>} : memref<34x128xf32, #tpu.memory_space<vmem>>, vector<2x64xf32>,
    %c15_189 = arith.constant 15 : index
    %c0_190 = arith.constant 0 : index
    %203 = tpu.strided_load %arg15[%c15_189, %c0_190] {strides = array<i32: 2, 1>} : memref<50x128xf32, #tpu.memory_space<vmem>>, vector<2x128xf32>
    %204 = vector.extract_strided_slice %203 {offsets = [0, 0], sizes = [2, 64], strides = [1, 1]} : vector<2x128xf32> to vector<2x64xf32>
    %c6_191 = arith.constant 6 : index
    %c64_192 = arith.constant 64 : index
    %205 = vector.load %arg19[%c6_191, %c64_192] : memref<34x128xf32, #tpu.memory_space<vmem>>, vector<2x64xf32>
    tpu.vector_store %arg19[%c6_191, %c64_192], %204 {strides = array<i32>} : memref<34x128xf32, #tpu.memory_space<vmem>>, vector<2x64xf32>,
    %c6_193 = arith.constant 6 : index
    %c0_194 = arith.constant 0 : index
    %206 = tpu.strided_load %arg15[%c6_193, %c0_194] {strides = array<i32: 2, 1>} : memref<50x128xf32, #tpu.memory_space<vmem>>, vector<2x128xf32>
    %207 = vector.extract_strided_slice %206 {offsets = [0, 0], sizes = [2, 64], strides = [1, 1]} : vector<2x128xf32> to vector<2x64xf32>
    %c4_195 = arith.constant 4 : index
    %c0_196 = arith.constant 0 : index
    %208 = vector.load %arg19[%c4_195, %c0_196] : memref<34x128xf32, #tpu.memory_space<vmem>>, vector<2x64xf32>
    tpu.vector_store %arg19[%c4_195, %c0_196], %207 {strides = array<i32>} : memref<34x128xf32, #tpu.memory_space<vmem>>, vector<2x64xf32>,
    %c16_197 = arith.constant 16 : index
    %c0_198 = arith.constant 0 : index
    %209 = tpu.strided_load %arg15[%c16_197, %c0_198] {strides = array<i32: 2, 1>} : memref<50x128xf32, #tpu.memory_space<vmem>>, vector<2x128xf32>
    %210 = vector.extract_strided_slice %209 {offsets = [0, 0], sizes = [2, 64], strides = [1, 1]} : vector<2x128xf32> to vector<2x64xf32>
    %c7 = arith.constant 7 : index
    %c0_199 = arith.constant 0 : index
    %211 = vector.load %arg19[%c7, %c0_199] : memref<34x128xf32, #tpu.memory_space<vmem>>, vector<2x64xf32>
    tpu.vector_store %arg19[%c7, %c0_199], %210 {strides = array<i32>} : memref<34x128xf32, #tpu.memory_space<vmem>>, vector<2x64xf32>,
    %c25_200 = arith.constant 25 : index
    %c0_201 = arith.constant 0 : index
    %212 = tpu.strided_load %arg15[%c25_200, %c0_201] {strides = array<i32: 2, 1>} : memref<50x128xf32, #tpu.memory_space<vmem>>, vector<2x128xf32>
    %213 = vector.extract_strided_slice %212 {offsets = [0, 0], sizes = [2, 64], strides = [1, 1]} : vector<2x128xf32> to vector<2x64xf32>
    %c9_202 = arith.constant 9 : index
    %c64_203 = arith.constant 64 : index
    %214 = vector.load %arg20[%c9_202, %c64_203] : memref<34x128xf32, #tpu.memory_space<vmem>>, vector<2x64xf32>
    tpu.vector_store %arg20[%c9_202, %c64_203], %213 {strides = array<i32>} : memref<34x128xf32, #tpu.memory_space<vmem>>, vector<2x64xf32>,
    %c35_204 = arith.constant 35 : index
    %c0_205 = arith.constant 0 : index
    %215 = tpu.strided_load %arg15[%c35_204, %c0_205] {strides = array<i32: 2, 1>} : memref<50x128xf32, #tpu.memory_space<vmem>>, vector<2x128xf32>
    %216 = vector.extract_strided_slice %215 {offsets = [0, 0], sizes = [2, 64], strides = [1, 1]} : vector<2x128xf32> to vector<2x64xf32>
    %c12 = arith.constant 12 : index
    %c64_206 = arith.constant 64 : index
    %217 = vector.load %arg20[%c12, %c64_206] : memref<34x128xf32, #tpu.memory_space<vmem>>, vector<2x64xf32>
    tpu.vector_store %arg20[%c12, %c64_206], %216 {strides = array<i32>} : memref<34x128xf32, #tpu.memory_space<vmem>>, vector<2x64xf32>,
    %c26_207 = arith.constant 26 : index
    %c0_208 = arith.constant 0 : index
    %218 = tpu.strided_load %arg15[%c26_207, %c0_208] {strides = array<i32: 2, 1>} : memref<50x128xf32, #tpu.memory_space<vmem>>, vector<2x128xf32>
    %219 = vector.extract_strided_slice %218 {offsets = [0, 0], sizes = [2, 64], strides = [1, 1]} : vector<2x128xf32> to vector<2x64xf32>
    %c10_209 = arith.constant 10 : index
    %c0_210 = arith.constant 0 : index
    %220 = vector.load %arg20[%c10_209, %c0_210] : memref<34x128xf32, #tpu.memory_space<vmem>>, vector<2x64xf32>
    tpu.vector_store %arg20[%c10_209, %c0_210], %219 {strides = array<i32>} : memref<34x128xf32, #tpu.memory_space<vmem>>, vector<2x64xf32>,
    %c36_211 = arith.constant 36 : index
    %c0_212 = arith.constant 0 : index
    %221 = tpu.strided_load %arg15[%c36_211, %c0_212] {strides = array<i32: 2, 1>} : memref<50x128xf32, #tpu.memory_space<vmem>>, vector<2x128xf32>
    %222 = vector.extract_strided_slice %221 {offsets = [0, 0], sizes = [2, 64], strides = [1, 1]} : vector<2x128xf32> to vector<2x64xf32>
    %c13 = arith.constant 13 : index
    %c0_213 = arith.constant 0 : index
    %223 = vector.load %arg20[%c13, %c0_213] : memref<34x128xf32, #tpu.memory_space<vmem>>, vector<2x64xf32>
    tpu.vector_store %arg20[%c13, %c0_213], %222 {strides = array<i32>} : memref<34x128xf32, #tpu.memory_space<vmem>>, vector<2x64xf32>,
    %c30_214 = arith.constant 30 : index
    %c0_215 = arith.constant 0 : index
    %224 = tpu.strided_load %arg15[%c30_214, %c0_215] {strides = array<i32: 2, 1>} : memref<50x128xf32, #tpu.memory_space<vmem>>, vector<2x128xf32>
    %225 = vector.extract_strided_slice %224 {offsets = [0, 0], sizes = [2, 64], strides = [1, 1]} : vector<2x128xf32> to vector<2x64xf32>
    %c12_216 = arith.constant 12 : index
    %c64_217 = arith.constant 64 : index
    %226 = vector.load %arg19[%c12_216, %c64_217] : memref<34x128xf32, #tpu.memory_space<vmem>>, vector<2x64xf32>
    tpu.vector_store %arg19[%c12_216, %c64_217], %225 {strides = array<i32>} : memref<34x128xf32, #tpu.memory_space<vmem>>, vector<2x64xf32>,
    %c40_218 = arith.constant 40 : index
    %c0_219 = arith.constant 0 : index
    %227 = tpu.strided_load %arg15[%c40_218, %c0_219] {strides = array<i32: 2, 1>} : memref<50x128xf32, #tpu.memory_space<vmem>>, vector<2x128xf32>
    %228 = vector.extract_strided_slice %227 {offsets = [0, 0], sizes = [2, 64], strides = [1, 1]} : vector<2x128xf32> to vector<2x64xf32>
    %c15_220 = arith.constant 15 : index
    %c64_221 = arith.constant 64 : index
    %229 = vector.load %arg19[%c15_220, %c64_221] : memref<34x128xf32, #tpu.memory_space<vmem>>, vector<2x64xf32>
    tpu.vector_store %arg19[%c15_220, %c64_221], %228 {strides = array<i32>} : memref<34x128xf32, #tpu.memory_space<vmem>>, vector<2x64xf32>,
    %c31_222 = arith.constant 31 : index
    %c0_223 = arith.constant 0 : index
    %230 = tpu.strided_load %arg15[%c31_222, %c0_223] {strides = array<i32: 2, 1>} : memref<50x128xf32, #tpu.memory_space<vmem>>, vector<2x128xf32>
    %231 = vector.extract_strided_slice %230 {offsets = [0, 0], sizes = [2, 64], strides = [1, 1]} : vector<2x128xf32> to vector<2x64xf32>
    %c13_224 = arith.constant 13 : index
    %c0_225 = arith.constant 0 : index
    %232 = vector.load %arg19[%c13_224, %c0_225] : memref<34x128xf32, #tpu.memory_space<vmem>>, vector<2x64xf32>
    tpu.vector_store %arg19[%c13_224, %c0_225], %231 {strides = array<i32>} : memref<34x128xf32, #tpu.memory_space<vmem>>, vector<2x64xf32>,
    %c41_226 = arith.constant 41 : index
    %c0_227 = arith.constant 0 : index
    %233 = tpu.strided_load %arg15[%c41_226, %c0_227] {strides = array<i32: 2, 1>} : memref<50x128xf32, #tpu.memory_space<vmem>>, vector<2x128xf32>
    %234 = vector.extract_strided_slice %233 {offsets = [0, 0], sizes = [2, 64], strides = [1, 1]} : vector<2x128xf32> to vector<2x64xf32>
    %c16_228 = arith.constant 16 : index
    %c0_229 = arith.constant 0 : index
    %235 = vector.load %arg19[%c16_228, %c0_229] : memref<34x128xf32, #tpu.memory_space<vmem>>, vector<2x64xf32>
    tpu.vector_store %arg19[%c16_228, %c0_229], %234 {strides = array<i32>} : memref<34x128xf32, #tpu.memory_space<vmem>>, vector<2x64xf32>,
    %c0_230 = arith.constant 0 : index
    %c0_231 = arith.constant 0 : index
    %236 = vector.load %arg19[%c0_230, %c0_231] : memref<34x128xf32, #tpu.memory_space<vmem>>, vector<18x128xf32>
    %237 = arith.truncf %236 : vector<18x128xf32> to vector<18x128xbf16>
    %c0_232 = arith.constant 0 : index
    %c0_233 = arith.constant 0 : index
    %238 = vector.load %arg7[%c0_232, %c0_233] : memref<768x128xbf16, #tpu.memory_space<vmem>>, vector<128x128xbf16>
    %cst_234 = arith.constant dense<0.000000e+00> : vector<18x128xf32>
    %239 = tpu.matmul %237, %238, %cst_234 {dimension_numbers = #tpu.dot_dimension_numbers<[1], [0], [0], [1], [0, 0, 1, 1], [], []>} : vector<18x128xbf16>, vector<128x128xbf16>, vector<18x128xf32> -> vector<18x128xf32>
    %c1_235 = arith.constant 1 : index
    %c0_236 = arith.constant 0 : index
    %240 = vector.load %arg19[%c1_235, %c0_236] : memref<34x128xf32, #tpu.memory_space<vmem>>, vector<18x128xf32>
    %241 = arith.truncf %240 : vector<18x128xf32> to vector<18x128xbf16>
    %c128_237 = arith.constant 128 : index
    %c0_238 = arith.constant 0 : index
    %242 = vector.load %arg7[%c128_237, %c0_238] : memref<768x128xbf16, #tpu.memory_space<vmem>>, vector<128x128xbf16>
    %cst_239 = arith.constant dense<0.000000e+00> : vector<18x128xf32>
    %243 = tpu.matmul %241, %242, %cst_239 {dimension_numbers = #tpu.dot_dimension_numbers<[1], [0], [0], [1], [0, 0, 1, 1], [], []>} : vector<18x128xbf16>, vector<128x128xbf16>, vector<18x128xf32> -> vector<18x128xf32>
    %244 = arith.addf %239, %243 : vector<18x128xf32>
    %c0_240 = arith.constant 0 : index
    %c0_241 = arith.constant 0 : index
    %245 = vector.load %arg20[%c0_240, %c0_241] : memref<34x128xf32, #tpu.memory_space<vmem>>, vector<18x128xf32>
    %246 = arith.truncf %245 : vector<18x128xf32> to vector<18x128xbf16>
    %c256_242 = arith.constant 256 : index
    %c0_243 = arith.constant 0 : index
    %247 = vector.load %arg7[%c256_242, %c0_243] : memref<768x128xbf16, #tpu.memory_space<vmem>>, vector<128x128xbf16>
    %cst_244 = arith.constant dense<0.000000e+00> : vector<18x128xf32>
    %248 = tpu.matmul %246, %247, %cst_244 {dimension_numbers = #tpu.dot_dimension_numbers<[1], [0], [0], [1], [0, 0, 1, 1], [], []>} : vector<18x128xbf16>, vector<128x128xbf16>, vector<18x128xf32> -> vector<18x128xf32>
    %249 = arith.addf %244, %248 : vector<18x128xf32>
    %c1_245 = arith.constant 1 : index
    %c0_246 = arith.constant 0 : index
    %250 = vector.load %arg20[%c1_245, %c0_246] : memref<34x128xf32, #tpu.memory_space<vmem>>, vector<18x128xf32>
    %251 = arith.truncf %250 : vector<18x128xf32> to vector<18x128xbf16>
    %c384_247 = arith.constant 384 : index
    %c0_248 = arith.constant 0 : index
    %252 = vector.load %arg7[%c384_247, %c0_248] : memref<768x128xbf16, #tpu.memory_space<vmem>>, vector<128x128xbf16>
    %cst_249 = arith.constant dense<0.000000e+00> : vector<18x128xf32>
    %253 = tpu.matmul %251, %252, %cst_249 {dimension_numbers = #tpu.dot_dimension_numbers<[1], [0], [0], [1], [0, 0, 1, 1], [], []>} : vector<18x128xbf16>, vector<128x128xbf16>, vector<18x128xf32> -> vector<18x128xf32>
    %254 = arith.addf %249, %253 : vector<18x128xf32>
    %c3_250 = arith.constant 3 : index
    %c0_251 = arith.constant 0 : index
    %255 = vector.load %arg19[%c3_250, %c0_251] : memref<34x128xf32, #tpu.memory_space<vmem>>, vector<18x128xf32>
    %256 = arith.truncf %255 : vector<18x128xf32> to vector<18x128xbf16>
    %c512_252 = arith.constant 512 : index
    %c0_253 = arith.constant 0 : index
    %257 = vector.load %arg7[%c512_252, %c0_253] : memref<768x128xbf16, #tpu.memory_space<vmem>>, vector<128x128xbf16>
    %cst_254 = arith.constant dense<0.000000e+00> : vector<18x128xf32>
    %258 = tpu.matmul %256, %257, %cst_254 {dimension_numbers = #tpu.dot_dimension_numbers<[1], [0], [0], [1], [0, 0, 1, 1], [], []>} : vector<18x128xbf16>, vector<128x128xbf16>, vector<18x128xf32> -> vector<18x128xf32>
    %259 = arith.addf %254, %258 : vector<18x128xf32>
    %c4_255 = arith.constant 4 : index
    %c0_256 = arith.constant 0 : index
    %260 = vector.load %arg19[%c4_255, %c0_256] : memref<34x128xf32, #tpu.memory_space<vmem>>, vector<18x128xf32>
    %261 = arith.truncf %260 : vector<18x128xf32> to vector<18x128xbf16>
    %c640_257 = arith.constant 640 : index
    %c0_258 = arith.constant 0 : index
    %262 = vector.load %arg7[%c640_257, %c0_258] : memref<768x128xbf16, #tpu.memory_space<vmem>>, vector<128x128xbf16>
    %cst_259 = arith.constant dense<0.000000e+00> : vector<18x128xf32>
    %263 = tpu.matmul %261, %262, %cst_259 {dimension_numbers = #tpu.dot_dimension_numbers<[1], [0], [0], [1], [0, 0, 1, 1], [], []>} : vector<18x128xbf16>, vector<128x128xbf16>, vector<18x128xf32> -> vector<18x128xf32>
    %264 = arith.addf %259, %263 : vector<18x128xf32>
    %c0_260 = arith.constant 0 : index
    %c0_261 = arith.constant 0 : index
    %265 = vector.load %arg8[%c0_260, %c0_261] : memref<3x128xf32, #tpu.memory_space<vmem>>, vector<1x128xf32>
    %c1_262 = arith.constant 1 : index
    %c0_263 = arith.constant 0 : index
    %266 = vector.load %arg8[%c1_262, %c0_263] : memref<3x128xf32, #tpu.memory_space<vmem>>, vector<1x128xf32>
    %c2_264 = arith.constant 2 : index
    %c0_265 = arith.constant 0 : index
    %267 = vector.load %arg8[%c2_264, %c0_265] : memref<3x128xf32, #tpu.memory_space<vmem>>, vector<1x128xf32>
    %268 = vector.broadcast %265 : vector<1x128xf32> to vector<18x128xf32>
    %269 = arith.addf %264, %268 : vector<18x128xf32>
    %cst_266 = arith.constant 2.000000e-01 : f32
    %270 = vector.broadcast %cst_266 : f32 to vector<18x128xf32>
    %271 = arith.mulf %270, %269 : vector<18x128xf32>
    %272 = arith.maximumf %269, %271 : vector<18x128xf32>
    %273 = vector.broadcast %266 : vector<1x128xf32> to vector<18x128xf32>
    %274 = arith.mulf %272, %273 : vector<18x128xf32>
    %275 = vector.broadcast %267 : vector<1x128xf32> to vector<18x128xf32>
    %276 = arith.addf %274, %275 : vector<18x128xf32>
    %c0_267 = arith.constant 0 : index
    %c0_268 = arith.constant 0 : index
    %277 = vector.load %arg16[%c0_267, %c0_268] : memref<18x128xf32, #tpu.memory_space<vmem>>, vector<18x128xf32>
    tpu.vector_store %arg16[%c0_267, %c0_268], %276 {strides = array<i32>} : memref<18x128xf32, #tpu.memory_space<vmem>>, vector<18x128xf32>,
    %cst_269 = arith.constant 0.000000e+00 : f32
    %278 = vector.broadcast %cst_269 : f32 to vector<24x128xf32>
    %c0_270 = arith.constant 0 : index
    %c0_271 = arith.constant 0 : index
    %279 = vector.load %arg21[%c0_270, %c0_271] : memref<24x128xf32, #tpu.memory_space<vmem>>, vector<24x128xf32>
    tpu.vector_store %arg21[%c0_270, %c0_271], %278 {strides = array<i32>} : memref<24x128xf32, #tpu.memory_space<vmem>>, vector<24x128xf32>,
    %cst_272 = arith.constant 0.000000e+00 : f32
    %280 = vector.broadcast %cst_272 : f32 to vector<24x128xf32>
    %c0_273 = arith.constant 0 : index
    %c0_274 = arith.constant 0 : index
    %281 = vector.load %arg22[%c0_273, %c0_274] : memref<24x128xf32, #tpu.memory_space<vmem>>, vector<24x128xf32>
    tpu.vector_store %arg22[%c0_273, %c0_274], %280 {strides = array<i32>} : memref<24x128xf32, #tpu.memory_space<vmem>>, vector<24x128xf32>,
    %c0_275 = arith.constant 0 : index
    %c0_276 = arith.constant 0 : index
    %282 = vector.load %arg16[%c0_275, %c0_276] : memref<18x128xf32, #tpu.memory_space<vmem>>, vector<1x128xf32>
    %283 = vector.extract_strided_slice %282 {offsets = [0, 0], sizes = [1, 64], strides = [1, 1]} : vector<1x128xf32> to vector<1x64xf32>
    %c0_277 = arith.constant 0 : index
    %c64_278 = arith.constant 64 : index
    %284 = vector.load %arg22[%c0_277, %c64_278] : memref<24x128xf32, #tpu.memory_space<vmem>>, vector<1x64xf32>
    tpu.vector_store %arg22[%c0_277, %c64_278], %283 {strides = array<i32>} : memref<24x128xf32, #tpu.memory_space<vmem>>, vector<1x64xf32>,
    %c1_279 = arith.constant 1 : index
    %c0_280 = arith.constant 0 : index
    %285 = vector.load %arg16[%c1_279, %c0_280] : memref<18x128xf32, #tpu.memory_space<vmem>>, vector<1x128xf32>
    %286 = vector.extract_strided_slice %285 {offsets = [0, 0], sizes = [1, 64], strides = [1, 1]} : vector<1x128xf32> to vector<1x64xf32>
    %c1_281 = arith.constant 1 : index
    %c0_282 = arith.constant 0 : index
    %287 = vector.load %arg22[%c1_281, %c0_282] : memref<24x128xf32, #tpu.memory_space<vmem>>, vector<1x64xf32>
    tpu.vector_store %arg22[%c1_281, %c0_282], %286 {strides = array<i32>} : memref<24x128xf32, #tpu.memory_space<vmem>>, vector<1x64xf32>,
    %c3_283 = arith.constant 3 : index
    %c0_284 = arith.constant 0 : index
    %288 = vector.load %arg16[%c3_283, %c0_284] : memref<18x128xf32, #tpu.memory_space<vmem>>, vector<1x128xf32>
    %289 = vector.extract_strided_slice %288 {offsets = [0, 0], sizes = [1, 64], strides = [1, 1]} : vector<1x128xf32> to vector<1x64xf32>
    %c2_285 = arith.constant 2 : index
    %c64_286 = arith.constant 64 : index
    %290 = vector.load %arg21[%c2_285, %c64_286] : memref<24x128xf32, #tpu.memory_space<vmem>>, vector<1x64xf32>
    tpu.vector_store %arg21[%c2_285, %c64_286], %289 {strides = array<i32>} : memref<24x128xf32, #tpu.memory_space<vmem>>, vector<1x64xf32>,
    %c4_287 = arith.constant 4 : index
    %c0_288 = arith.constant 0 : index
    %291 = vector.load %arg16[%c4_287, %c0_288] : memref<18x128xf32, #tpu.memory_space<vmem>>, vector<1x128xf32>
    %292 = vector.extract_strided_slice %291 {offsets = [0, 0], sizes = [1, 64], strides = [1, 1]} : vector<1x128xf32> to vector<1x64xf32>
    %c3_289 = arith.constant 3 : index
    %c0_290 = arith.constant 0 : index
    %293 = vector.load %arg21[%c3_289, %c0_290] : memref<24x128xf32, #tpu.memory_space<vmem>>, vector<1x64xf32>
    tpu.vector_store %arg21[%c3_289, %c0_290], %292 {strides = array<i32>} : memref<24x128xf32, #tpu.memory_space<vmem>>, vector<1x64xf32>,
    %c9_291 = arith.constant 9 : index
    %c0_292 = arith.constant 0 : index
    %294 = vector.load %arg16[%c9_291, %c0_292] : memref<18x128xf32, #tpu.memory_space<vmem>>, vector<1x128xf32>
    %295 = vector.extract_strided_slice %294 {offsets = [0, 0], sizes = [1, 64], strides = [1, 1]} : vector<1x128xf32> to vector<1x64xf32>
    %c4_293 = arith.constant 4 : index
    %c64_294 = arith.constant 64 : index
    %296 = vector.load %arg22[%c4_293, %c64_294] : memref<24x128xf32, #tpu.memory_space<vmem>>, vector<1x64xf32>
    tpu.vector_store %arg22[%c4_293, %c64_294], %295 {strides = array<i32>} : memref<24x128xf32, #tpu.memory_space<vmem>>, vector<1x64xf32>,
    %c10_295 = arith.constant 10 : index
    %c0_296 = arith.constant 0 : index
    %297 = vector.load %arg16[%c10_295, %c0_296] : memref<18x128xf32, #tpu.memory_space<vmem>>, vector<1x128xf32>
    %298 = vector.extract_strided_slice %297 {offsets = [0, 0], sizes = [1, 64], strides = [1, 1]} : vector<1x128xf32> to vector<1x64xf32>
    %c5_297 = arith.constant 5 : index
    %c0_298 = arith.constant 0 : index
    %299 = vector.load %arg22[%c5_297, %c0_298] : memref<24x128xf32, #tpu.memory_space<vmem>>, vector<1x64xf32>
    tpu.vector_store %arg22[%c5_297, %c0_298], %298 {strides = array<i32>} : memref<24x128xf32, #tpu.memory_space<vmem>>, vector<1x64xf32>,
    %c12_299 = arith.constant 12 : index
    %c0_300 = arith.constant 0 : index
    %300 = vector.load %arg16[%c12_299, %c0_300] : memref<18x128xf32, #tpu.memory_space<vmem>>, vector<1x128xf32>
    %301 = vector.extract_strided_slice %300 {offsets = [0, 0], sizes = [1, 64], strides = [1, 1]} : vector<1x128xf32> to vector<1x64xf32>
    %c6_301 = arith.constant 6 : index
    %c64_302 = arith.constant 64 : index
    %302 = vector.load %arg21[%c6_301, %c64_302] : memref<24x128xf32, #tpu.memory_space<vmem>>, vector<1x64xf32>
    tpu.vector_store %arg21[%c6_301, %c64_302], %301 {strides = array<i32>} : memref<24x128xf32, #tpu.memory_space<vmem>>, vector<1x64xf32>,
    %c13_303 = arith.constant 13 : index
    %c0_304 = arith.constant 0 : index
    %303 = vector.load %arg16[%c13_303, %c0_304] : memref<18x128xf32, #tpu.memory_space<vmem>>, vector<1x128xf32>
    %304 = vector.extract_strided_slice %303 {offsets = [0, 0], sizes = [1, 64], strides = [1, 1]} : vector<1x128xf32> to vector<1x64xf32>
    %c7_305 = arith.constant 7 : index
    %c0_306 = arith.constant 0 : index
    %305 = vector.load %arg21[%c7_305, %c0_306] : memref<24x128xf32, #tpu.memory_space<vmem>>, vector<1x64xf32>
    tpu.vector_store %arg21[%c7_305, %c0_306], %304 {strides = array<i32>} : memref<24x128xf32, #tpu.memory_space<vmem>>, vector<1x64xf32>,
    %c0_307 = arith.constant 0 : index
    %c0_308 = arith.constant 0 : index
    %306 = vector.load %arg21[%c0_307, %c0_308] : memref<24x128xf32, #tpu.memory_space<vmem>>, vector<8x128xf32>
    %307 = arith.truncf %306 : vector<8x128xf32> to vector<8x128xbf16>
    %c0_309 = arith.constant 0 : index
    %c0_310 = arith.constant 0 : index
    %308 = vector.load %arg9[%c0_309, %c0_310] : memref<768x128xbf16, #tpu.memory_space<vmem>>, vector<128x128xbf16>
    %cst_311 = arith.constant dense<0.000000e+00> : vector<8x128xf32>
    %309 = tpu.matmul %307, %308, %cst_311 {dimension_numbers = #tpu.dot_dimension_numbers<[1], [0], [0], [1], [0, 0, 1, 1], [], []>} : vector<8x128xbf16>, vector<128x128xbf16>, vector<8x128xf32> -> vector<8x128xf32>
    %c1_312 = arith.constant 1 : index
    %c0_313 = arith.constant 0 : index
    %310 = vector.load %arg21[%c1_312, %c0_313] : memref<24x128xf32, #tpu.memory_space<vmem>>, vector<8x128xf32>
    %311 = arith.truncf %310 : vector<8x128xf32> to vector<8x128xbf16>
    %c128_314 = arith.constant 128 : index
    %c0_315 = arith.constant 0 : index
    %312 = vector.load %arg9[%c128_314, %c0_315] : memref<768x128xbf16, #tpu.memory_space<vmem>>, vector<128x128xbf16>
    %cst_316 = arith.constant dense<0.000000e+00> : vector<8x128xf32>
    %313 = tpu.matmul %311, %312, %cst_316 {dimension_numbers = #tpu.dot_dimension_numbers<[1], [0], [0], [1], [0, 0, 1, 1], [], []>} : vector<8x128xbf16>, vector<128x128xbf16>, vector<8x128xf32> -> vector<8x128xf32>
    %314 = arith.addf %309, %313 : vector<8x128xf32>
    %c0_317 = arith.constant 0 : index
    %c0_318 = arith.constant 0 : index
    %315 = vector.load %arg22[%c0_317, %c0_318] : memref<24x128xf32, #tpu.memory_space<vmem>>, vector<8x128xf32>
    %316 = arith.truncf %315 : vector<8x128xf32> to vector<8x128xbf16>
    %c256_319 = arith.constant 256 : index
    %c0_320 = arith.constant 0 : index
    %317 = vector.load %arg9[%c256_319, %c0_320] : memref<768x128xbf16, #tpu.memory_space<vmem>>, vector<128x128xbf16>
    %cst_321 = arith.constant dense<0.000000e+00> : vector<8x128xf32>
    %318 = tpu.matmul %316, %317, %cst_321 {dimension_numbers = #tpu.dot_dimension_numbers<[1], [0], [0], [1], [0, 0, 1, 1], [], []>} : vector<8x128xbf16>, vector<128x128xbf16>, vector<8x128xf32> -> vector<8x128xf32>
    %319 = arith.addf %314, %318 : vector<8x128xf32>
    %c1_322 = arith.constant 1 : index
    %c0_323 = arith.constant 0 : index
    %320 = vector.load %arg22[%c1_322, %c0_323] : memref<24x128xf32, #tpu.memory_space<vmem>>, vector<8x128xf32>
    %321 = arith.truncf %320 : vector<8x128xf32> to vector<8x128xbf16>
    %c384_324 = arith.constant 384 : index
    %c0_325 = arith.constant 0 : index
    %322 = vector.load %arg9[%c384_324, %c0_325] : memref<768x128xbf16, #tpu.memory_space<vmem>>, vector<128x128xbf16>
    %cst_326 = arith.constant dense<0.000000e+00> : vector<8x128xf32>
    %323 = tpu.matmul %321, %322, %cst_326 {dimension_numbers = #tpu.dot_dimension_numbers<[1], [0], [0], [1], [0, 0, 1, 1], [], []>} : vector<8x128xbf16>, vector<128x128xbf16>, vector<8x128xf32> -> vector<8x128xf32>
    %324 = arith.addf %319, %323 : vector<8x128xf32>
    %c2_327 = arith.constant 2 : index
    %c0_328 = arith.constant 0 : index
    %325 = vector.load %arg21[%c2_327, %c0_328] : memref<24x128xf32, #tpu.memory_space<vmem>>, vector<8x128xf32>
    %326 = arith.truncf %325 : vector<8x128xf32> to vector<8x128xbf16>
    %c512_329 = arith.constant 512 : index
    %c0_330 = arith.constant 0 : index
    %327 = vector.load %arg9[%c512_329, %c0_330] : memref<768x128xbf16, #tpu.memory_space<vmem>>, vector<128x128xbf16>
    %cst_331 = arith.constant dense<0.000000e+00> : vector<8x128xf32>
    %328 = tpu.matmul %326, %327, %cst_331 {dimension_numbers = #tpu.dot_dimension_numbers<[1], [0], [0], [1], [0, 0, 1, 1], [], []>} : vector<8x128xbf16>, vector<128x128xbf16>, vector<8x128xf32> -> vector<8x128xf32>
    %329 = arith.addf %324, %328 : vector<8x128xf32>
    %c3_332 = arith.constant 3 : index
    %c0_333 = arith.constant 0 : index
    %330 = vector.load %arg21[%c3_332, %c0_333] : memref<24x128xf32, #tpu.memory_space<vmem>>, vector<8x128xf32>
    %331 = arith.truncf %330 : vector<8x128xf32> to vector<8x128xbf16>
    %c640_334 = arith.constant 640 : index
    %c0_335 = arith.constant 0 : index
    %332 = vector.load %arg9[%c640_334, %c0_335] : memref<768x128xbf16, #tpu.memory_space<vmem>>, vector<128x128xbf16>
    %cst_336 = arith.constant dense<0.000000e+00> : vector<8x128xf32>
    %333 = tpu.matmul %331, %332, %cst_336 {dimension_numbers = #tpu.dot_dimension_numbers<[1], [0], [0], [1], [0, 0, 1, 1], [], []>} : vector<8x128xbf16>, vector<128x128xbf16>, vector<8x128xf32> -> vector<8x128xf32>
    %334 = arith.addf %329, %333 : vector<8x128xf32>
    %c0_337 = arith.constant 0 : index
    %c0_338 = arith.constant 0 : index
    %335 = vector.load %arg10[%c0_337, %c0_338] : memref<3x128xf32, #tpu.memory_space<vmem>>, vector<1x128xf32>
    %c1_339 = arith.constant 1 : index
    %c0_340 = arith.constant 0 : index
    %336 = vector.load %arg10[%c1_339, %c0_340] : memref<3x128xf32, #tpu.memory_space<vmem>>, vector<1x128xf32>
    %c2_341 = arith.constant 2 : index
    %c0_342 = arith.constant 0 : index
    %337 = vector.load %arg10[%c2_341, %c0_342] : memref<3x128xf32, #tpu.memory_space<vmem>>, vector<1x128xf32>
    %338 = vector.broadcast %335 : vector<1x128xf32> to vector<8x128xf32>
    %339 = arith.addf %334, %338 : vector<8x128xf32>
    %cst_343 = arith.constant 2.000000e-01 : f32
    %340 = vector.broadcast %cst_343 : f32 to vector<8x128xf32>
    %341 = arith.mulf %340, %339 : vector<8x128xf32>
    %342 = arith.maximumf %339, %341 : vector<8x128xf32>
    %343 = vector.broadcast %336 : vector<1x128xf32> to vector<8x128xf32>
    %344 = arith.mulf %342, %343 : vector<8x128xf32>
    %345 = vector.broadcast %337 : vector<1x128xf32> to vector<8x128xf32>
    %346 = arith.addf %344, %345 : vector<8x128xf32>
    %347 = vector.extract_strided_slice %346 {offsets = [0, 0], sizes = [4, 128], strides = [1, 1]} : vector<8x128xf32> to vector<4x128xf32>
    %c0_344 = arith.constant 0 : index
    %c0_345 = arith.constant 0 : index
    %348 = vector.load %arg11[%c0_344, %c0_345] : memref<4x128xf32, #tpu.memory_space<vmem>>, vector<4x128xf32>
    %349 = arith.mulf %347, %348 : vector<4x128xf32>
    %cst_346 = arith.constant dense<0.000000e+00> : vector<128xf32>
    %350 = vector.multi_reduction <add>, %349, %cst_346 [0] : vector<4x128xf32> to vector<128xf32>
    %351 = vector.shape_cast %350 : vector<128xf32> to vector<1x128xf32>
    %352 = vector.extract_strided_slice %346 {offsets = [4, 0], sizes = [4, 128], strides = [1, 1]} : vector<8x128xf32> to vector<4x128xf32>
    %c0_347 = arith.constant 0 : index
    %c0_348 = arith.constant 0 : index
    %353 = vector.load %arg11[%c0_347, %c0_348] : memref<4x128xf32, #tpu.memory_space<vmem>>, vector<4x128xf32>
    %354 = arith.mulf %352, %353 : vector<4x128xf32>
    %cst_349 = arith.constant dense<0.000000e+00> : vector<128xf32>
    %355 = vector.multi_reduction <add>, %354, %cst_349 [0] : vector<4x128xf32> to vector<128xf32>
    %356 = vector.shape_cast %355 : vector<128xf32> to vector<1x128xf32>
    %357 = tpu.concatenate %351, %356 in 0 : vector<1x128xf32>, vector<1x128xf32> -> vector<2x128xf32>
    %cst_350 = arith.constant dense<0.000000e+00> : vector<2xf32>
    %358 = vector.multi_reduction <add>, %357, %cst_350 [1] : vector<2x128xf32> to vector<2xf32>
    %359 = vector.shape_cast %358 : vector<2xf32> to vector<2x1xf32>
    %c0_351 = arith.constant 0 : index
    %c0_352 = arith.constant 0 : index
    %360 = vector.load %arg12[%c0_351, %c0_352] : memref<1x128xf32, #tpu.memory_space<vmem>>, vector<1x1xf32>
    %361 = vector.broadcast %360 : vector<1x1xf32> to vector<2x1xf32>
    %362 = arith.addf %359, %361 : vector<2x1xf32>
    %cst_353 = arith.constant 0.000000e+00 : f32
    %363 = vector.broadcast %cst_353 : f32 to vector<2x1xf32>
    %364 = arith.subf %363, %362 : vector<2x1xf32>
    %365 = math.exp %364 : vector<2x1xf32>
    %cst_354 = arith.constant 1.000000e+00 : f32
    %366 = vector.broadcast %cst_354 : f32 to vector<2x1xf32>
    %367 = arith.addf %366, %365 : vector<2x1xf32>
    %cst_355 = arith.constant 1.000000e+00 : f32
    %368 = vector.broadcast %cst_355 : f32 to vector<2x1xf32>
    %369 = arith.divf %368, %367 : vector<2x1xf32>
    %370 = vector.shape_cast %369 : vector<2x1xf32> to vector<2x1xf32>
    %371 = vector.broadcast %370 : vector<2x1xf32> to vector<2x128xf32>
    %c0_356 = arith.constant 0 : index
    %c0_357 = arith.constant 0 : index
    %c0_358 = arith.constant 0 : index
    %372 = vector.load %arg13[%c0_356, %c0_357, %c0_358] : memref<1x2x128xf32, #tpu.memory_space<vmem>>, vector<1x2x128xf32>
    %373 = vector.shape_cast %372 : vector<1x2x128xf32> to vector<2x128xf32>
    %374 = vector.shape_cast %371 : vector<2x128xf32> to vector<1x2x128xf32>
    tpu.vector_store %arg13[%c0_356, %c0_357, %c0_358], %374 {strides = array<i32>} : memref<1x2x128xf32, #tpu.memory_space<vmem>>, vector<1x2x128xf32>,
    return
  }
  func.func @transform_0(%arg0: i32) -> (i32, i32, i32) {
    %c0_i32 = arith.constant 0 : i32
    %c0_i32_0 = arith.constant 0 : i32
    %c0_i32_1 = arith.constant 0 : i32
    return %arg0, %c0_i32, %c0_i32_0 : i32, i32, i32
  }
  func.func @transform_1(%arg0: i32) -> (i32, i32, i32) {
    %c0_i32 = arith.constant 0 : i32
    %c0_i32_0 = arith.constant 0 : i32
    %c0_i32_1 = arith.constant 0 : i32
    return %arg0, %c0_i32, %c0_i32_0 : i32, i32, i32
  }
  func.func @transform_2(%arg0: i32) -> (i32, i32) {
    %c0_i32 = arith.constant 0 : i32
    %c0_i32_0 = arith.constant 0 : i32
    %c0_i32_1 = arith.constant 0 : i32
    return %c0_i32, %c0_i32_0 : i32, i32
  }
  func.func @transform_3(%arg0: i32) -> (i32, i32) {
    %c0_i32 = arith.constant 0 : i32
    %c0_i32_0 = arith.constant 0 : i32
    %c0_i32_1 = arith.constant 0 : i32
    return %c0_i32, %c0_i32_0 : i32, i32
  }
  func.func @transform_4(%arg0: i32) -> (i32, i32) {
    %c0_i32 = arith.constant 0 : i32
    %c0_i32_0 = arith.constant 0 : i32
    %c0_i32_1 = arith.constant 0 : i32
    return %c0_i32, %c0_i32_0 : i32, i32
  }
  func.func @transform_5(%arg0: i32) -> (i32, i32) {
    %c0_i32 = arith.constant 0 : i32
    %c0_i32_0 = arith.constant 0 : i32
    %c0_i32_1 = arith.constant 0 : i32
    return %c0_i32, %c0_i32_0 : i32, i32
  }
  func.func @transform_6(%arg0: i32) -> (i32, i32) {
    %c0_i32 = arith.constant 0 : i32
    %c0_i32_0 = arith.constant 0 : i32
    %c0_i32_1 = arith.constant 0 : i32
    return %c0_i32, %c0_i32_0 : i32, i32
  }
  func.func @transform_7(%arg0: i32) -> (i32, i32) {
    %c0_i32 = arith.constant 0 : i32
    %c0_i32_0 = arith.constant 0 : i32
    %c0_i32_1 = arith.constant 0 : i32
    return %c0_i32, %c0_i32_0 : i32, i32
  }
  func.func @transform_8(%arg0: i32) -> (i32, i32) {
    %c0_i32 = arith.constant 0 : i32
    %c0_i32_0 = arith.constant 0 : i32
    %c0_i32_1 = arith.constant 0 : i32
    return %c0_i32, %c0_i32_0 : i32, i32
  }
  func.func @transform_9(%arg0: i32) -> (i32, i32) {
    %c0_i32 = arith.constant 0 : i32
    %c0_i32_0 = arith.constant 0 : i32
    %c0_i32_1 = arith.constant 0 : i32
    return %c0_i32, %c0_i32_0 : i32, i32
  }
  func.func @transform_10(%arg0: i32) -> (i32, i32) {
    %c0_i32 = arith.constant 0 : i32
    %c0_i32_0 = arith.constant 0 : i32
    %c0_i32_1 = arith.constant 0 : i32
    return %c0_i32, %c0_i32_0 : i32, i32
  }
  func.func @transform_11(%arg0: i32) -> (i32, i32) {
    %c0_i32 = arith.constant 0 : i32
    %c0_i32_0 = arith.constant 0 : i32
    %c0_i32_1 = arith.constant 0 : i32
    return %c0_i32, %c0_i32_0 : i32, i32
  }
  func.func @transform_12(%arg0: i32) -> (i32, i32, i32) {
    %c0_i32 = arith.constant 0 : i32
    %c0_i32_0 = arith.constant 0 : i32
    %c0_i32_1 = arith.constant 0 : i32
    return %arg0, %c0_i32, %c0_i32_0 : i32, i32, i32
  }
}

</mosaic_0001>

<llo_original>
// kernel: discriminator_forward.1
$region0: #{discriminator_forward.1}
  #allocation0 [shape = 'u32[]', space=smem, size = 0x4, offset = 0x4, fixed_abs, tag = 'smem constant byte address 0x4 - core index']
  #allocation1 [shape = 'u32[144,128]{1,0:T(1,128)}', space=vmem, size = 0x12000, scoped, tag = 'internal scratch']
  #allocation2 [shape = 'f32[162,128]{1,0:T(8,128)}', space=vmem, size = 0x15000, scoped, tag = 'scratch operand']
  #allocation3 [shape = 'f32[50,128]{1,0:T(8,128)}', space=vmem, size = 0x7000, scoped, tag = 'scratch operand']
  #allocation4 [shape = 'f32[18,128]{1,0:T(8,128)}', space=vmem, size = 0x3000, scoped, tag = 'scratch operand']
  #allocation5 [shape = 'f32[66,128]{1,0:T(8,128)}', space=vmem, size = 0x9000, scoped, tag = 'scratch operand']
  #allocation6 [shape = 'f32[66,128]{1,0:T(8,128)}', space=vmem, size = 0x9000, scoped, tag = 'scratch operand']
  #allocation7 [shape = 'f32[34,128]{1,0:T(8,128)}', space=vmem, size = 0x5000, scoped, tag = 'scratch operand']
  #allocation8 [shape = 'f32[34,128]{1,0:T(8,128)}', space=vmem, size = 0x5000, scoped, tag = 'scratch operand']
  #allocation9 [shape = 'f32[24,128]{1,0:T(8,128)}', space=vmem, size = 0x3000, scoped, tag = 'scratch operand']
  #allocation10 [shape = 'f32[24,128]{1,0:T(8,128)}', space=vmem, size = 0x3000, scoped, tag = 'scratch operand']
  %s0 = inlined_call_operand.vmem [shape: bf16[1,178,128], index: 0, kind: input, shape index: {}]
  %s1 = inlined_call_operand.vmem [shape: bf16[1,178,128], index: 1, kind: input, shape index: {}]
  %s2 = inlined_call_operand.vmem [shape: bf16[768,128], index: 2, kind: input, shape index: {}]
  %s3 = inlined_call_operand.vmem [shape: f32[3,128], index: 3, kind: input, shape index: {}]
  %s4 = inlined_call_operand.vmem [shape: bf16[768,128], index: 4, kind: input, shape index: {}]
  %s5 = inlined_call_operand.vmem [shape: f32[3,128], index: 5, kind: input, shape index: {}]
  %s6 = inlined_call_operand.vmem [shape: bf16[768,128], index: 6, kind: input, shape index: {}]
  %s7 = inlined_call_operand.vmem [shape: f32[3,128], index: 7, kind: input, shape index: {}]
  %s8 = inlined_call_operand.vmem [shape: bf16[768,128], index: 8, kind: input, shape index: {}]
  %s9 = inlined_call_operand.vmem [shape: f32[3,128], index: 9, kind: input, shape index: {}]
  %s10 = inlined_call_operand.vmem [shape: f32[4,128], index: 10, kind: input, shape index: {}]
  %s11 = inlined_call_operand.vmem [shape: f32[1,128], index: 11, kind: input, shape index: {}]
  %s12 = inlined_call_operand.vmem [shape: f32[1,2,128], index: 12, kind: output, shape index: {}]
  %s13 = sld [smem:[#allocation0]]
  $region58: #{discriminator_forward.1} parent=0
    _
  %s15 = ssub.s32 1, %s13
  %s16 = scalar_select 0, %s15, %s13
  // Predicated region
  $region2: #{discriminator_forward.1} parent=0 // pred_check
    _
  $region3: #{discriminator_forward.1} parent=0 // pred_check_branch
    %18 = sbr.rel (0) target = $region5
  $region4: #{discriminator_forward.1} parent=0 // pred_region
    _
  $region5: #{discriminator_forward.1} parent=0 // pred_fallthru
    _
  // Predicated region
  $region6: #{discriminator_forward.1} parent=0 // pred_check
    _
  $region7: #{discriminator_forward.1} parent=0 // pred_check_branch
    %20 = sbr.rel (0) target = $region9
  $region8: #{discriminator_forward.1} parent=0 // pred_region
    _
  $region9: #{discriminator_forward.1} parent=0 // pred_fallthru
    _
  // Predicated region
  $region10: #{discriminator_forward.1} parent=0 // pred_check
    _
  $region11: #{discriminator_forward.1} parent=0 // pred_check_branch
    %22 = sbr.rel (0) target = $region13
  $region12: #{discriminator_forward.1} parent=0 // pred_region
    _
  $region13: #{discriminator_forward.1} parent=0 // pred_fallthru
    _
  // Predicated region
  $region14: #{discriminator_forward.1} parent=0 // pred_check
    _
  $region15: #{discriminator_forward.1} parent=0 // pred_check_branch
    %24 = sbr.rel (0) target = $region17
  $region16: #{discriminator_forward.1} parent=0 // pred_region
    _
  $region17: #{discriminator_forward.1} parent=0 // pred_fallthru
    _
  // Predicated region
  $region18: #{discriminator_forward.1} parent=0 // pred_check
    _
  $region19: #{discriminator_forward.1} parent=0 // pred_check_branch
    %26 = sbr.rel (0) target = $region21
  $region20: #{discriminator_forward.1} parent=0 // pred_region
    _
  $region21: #{discriminator_forward.1} parent=0 // pred_fallthru
    _
  // Predicated region
  $region22: #{discriminator_forward.1} parent=0 // pred_check
    _
  $region23: #{discriminator_forward.1} parent=0 // pred_check_branch
    %28 = sbr.rel (0) target = $region25
  $region24: #{discriminator_forward.1} parent=0 // pred_region
    _
  $region25: #{discriminator_forward.1} parent=0 // pred_fallthru
    _
  // Predicated region
  $region26: #{discriminator_forward.1} parent=0 // pred_check
    _
  $region27: #{discriminator_forward.1} parent=0 // pred_check_branch
    %30 = sbr.rel (0) target = $region29
  $region28: #{discriminator_forward.1} parent=0 // pred_region
    _
  $region29: #{discriminator_forward.1} parent=0 // pred_fallthru
    _
  // Predicated region
  $region30: #{discriminator_forward.1} parent=0 // pred_check
    _
  $region31: #{discriminator_forward.1} parent=0 // pred_check_branch
    %32 = sbr.rel (0) target = $region33
  $region32: #{discriminator_forward.1} parent=0 // pred_region
    _
  $region33: #{discriminator_forward.1} parent=0 // pred_fallthru
    _
  // Predicated region
  $region34: #{discriminator_forward.1} parent=0 // pred_check
    _
  $region35: #{discriminator_forward.1} parent=0 // pred_check_branch
    %34 = sbr.rel (0) target = $region37
  $region36: #{discriminator_forward.1} parent=0 // pred_region
    _
  $region37: #{discriminator_forward.1} parent=0 // pred_fallthru
    _
  // Predicated region
  $region38: #{discriminator_forward.1} parent=0 // pred_check
    _
  $region39: #{discriminator_forward.1} parent=0 // pred_check_branch
    %36 = sbr.rel (0) target = $region41
  $region40: #{discriminator_forward.1} parent=0 // pred_region
    _
  $region41: #{discriminator_forward.1} parent=0 // pred_fallthru
    _
  // Predicated region
  $region42: #{discriminator_forward.1} parent=0 // pred_check
    _
  $region43: #{discriminator_forward.1} parent=0 // pred_check_branch
    %38 = sbr.rel (0) target = $region45
  $region44: #{discriminator_forward.1} parent=0 // pred_region
    _
  $region45: #{discriminator_forward.1} parent=0 // pred_fallthru
    _
  // Predicated region
  $region46: #{discriminator_forward.1} parent=0 // pred_check
    _
  $region47: #{discriminator_forward.1} parent=0 // pred_check_branch
    %40 = sbr.rel (0) target = $region49
  $region48: #{discriminator_forward.1} parent=0 // pred_region
    _
  $region49: #{discriminator_forward.1} parent=0 // pred_fallthru
    _
  %v42 = vld [vmem:[%s0] sm:$0xf]
  %v43 = vld [vmem:[%s0 + $0x4] sm:$0xf]
  %v44 = vld [vmem:[%s0 + $0x8] sm:$0xf]
  %v45 = vld [vmem:[%s0 + $0xc] sm:$0xf]
  %v46 = vld [vmem:[%s0 + $0x10] sm:$0xf]
  %v47 = vld [vmem:[%s0 + $0x14] sm:$0xf]
  %v48 = vld [vmem:[%s0 + $0x18] sm:$0xf]
  %v49 = vld [vmem:[%s0 + $0x1c] sm:$0xf]
  %v50 = vld [vmem:[%s0 + $0x20] sm:$0xf]
  %v51 = vld [vmem:[%s0 + $0x24] sm:$0xf]
  %v52 = vld [vmem:[%s0 + $0x28] sm:$0xf]
  %v53 = vld [vmem:[%s0 + $0x2c] sm:$0xf]
  %v54 = vld [vmem:[%s0 + $0x30] sm:$0xf]
  %v55 = vld [vmem:[%s0 + $0x34] sm:$0xf]
  %v56 = vld [vmem:[%s0 + $0x38] sm:$0xf]
  %v57 = vld [vmem:[%s0 + $0x3c] sm:$0xf]
  %v58 = vld [vmem:[%s0 + $0x40] sm:$0xf]
  %v59 = vld [vmem:[%s0 + $0x44] sm:$0xf]
  %v60 = vld [vmem:[%s0 + $0x48] sm:$0xf]
  %v61 = vld [vmem:[%s0 + $0x4c] sm:$0xf]
  %v62 = vld [vmem:[%s0 + $0x50] sm:$0x1]
  %v63 = vld [vmem:[%s2] sm:$0xf]
  %v64 = vld [vmem:[%s2 + $0x4] sm:$0xf]
  %v65 = vld [vmem:[%s2 + $0x8] sm:$0xf]
  %v66 = vld [vmem:[%s2 + $0xc] sm:$0xf]
  %v67 = vld [vmem:[%s2 + $0x10] sm:$0xf]
  %v68 = vld [vmem:[%s2 + $0x14] sm:$0xf]
  %v69 = vld [vmem:[%s2 + $0x18] sm:$0xf]
  %v70 = vld [vmem:[%s2 + $0x1c] sm:$0xf]
  %v71 = vld [vmem:[%s2 + $0x20] sm:$0xf]
  %v72 = vld [vmem:[%s2 + $0x24] sm:$0xf]
  %v73 = vld [vmem:[%s2 + $0x28] sm:$0xf]
  %v74 = vld [vmem:[%s2 + $0x2c] sm:$0xf]
  %v75 = vld [vmem:[%s2 + $0x30] sm:$0xf]
  %v76 = vld [vmem:[%s2 + $0x34] sm:$0xf]
  %v77 = vld [vmem:[%s2 + $0x38] sm:$0xf]
  %v78 = vld [vmem:[%s2 + $0x3c] sm:$0xf]
  %v79 = vld [vmem:[%s0 + $0x50] sm:$0x3]
  %v80 = vld [vmem:[%s2 + $0x40] sm:$0xf]
  %v81 = vld [vmem:[%s2 + $0x44] sm:$0xf]
  %v82 = vld [vmem:[%s2 + $0x48] sm:$0xf]
  %v83 = vld [vmem:[%s2 + $0x4c] sm:$0xf]
  %v84 = vld [vmem:[%s2 + $0x50] sm:$0xf]
  %v85 = vld [vmem:[%s2 + $0x54] sm:$0xf]
  %v86 = vld [vmem:[%s2 + $0x58] sm:$0xf]
  %v87 = vld [vmem:[%s2 + $0x5c] sm:$0xf]
  %v88 = vld [vmem:[%s2 + $0x60] sm:$0xf]
  %v89 = vld [vmem:[%s2 + $0x64] sm:$0xf]
  %v90 = vld [vmem:[%s2 + $0x68] sm:$0xf]
  %v91 = vld [vmem:[%s2 + $0x6c] sm:$0xf]
  %v92 = vld [vmem:[%s2 + $0x70] sm:$0xf]
  %v93 = vld [vmem:[%s2 + $0x74] sm:$0xf]
  %v94 = vld [vmem:[%s2 + $0x78] sm:$0xf]
  %v95 = vld [vmem:[%s2 + $0x7c] sm:$0xf]
  %v117 = vunpack.c.l.b16 %v42
  %v118 = vunpack.c.l.b16 %v43
  %v119 = vunpack.c.l.b16 %v44
  %v120 = vunpack.c.l.b16 %v45
  %v121 = vunpack.c.l.b16 %v46
  %v122 = vunpack.c.l.b16 %v47
  %v123 = vunpack.c.l.b16 %v48
  %v124 = vunpack.c.l.b16 %v49
  %v125 = vunpack.c.l.b16 %v50
  %v126 = vunpack.c.l.b16 %v51
  %v127 = vunpack.c.l.b16 %v52
  %v128 = vunpack.c.l.b16 %v53
  %v129 = vunpack.c.l.b16 %v54
  %v130 = vunpack.c.l.b16 %v55
  %v131 = vunpack.c.l.b16 %v56
  %v132 = vunpack.c.l.b16 %v57
  %v133 = vunpack.c.l.b16 %v58
  %v134 = vunpack.c.l.b16 %v59
  %v135 = vunpack.c.l.b16 %v60
  %v136 = vunpack.c.l.b16 %v61
  %v137 = vunpack.c.l.b16 %v79
  %v138 = vpack.c.b16 %v118, %v117
  %v139 = vpack.c.b16 %v120, %v119
  %v140 = vpack.c.b16 %v122, %v121
  %v141 = vpack.c.b16 %v124, %v123
  %v142 = vpack.c.b16 %v126, %v125
  %v143 = vpack.c.b16 %v128, %v127
  %v144 = vpack.c.b16 %v130, %v129
  %v145 = vpack.c.b16 %v132, %v131
  %v146 = vpack.c.b16 %v134, %v133
  %v147 = vpack.c.b16 %v136, %v135
  %v148 = vpack.c.b16 %v137, %v137
  %vm149 = vsmask.f32 7424
  %v151 = vshrl.u32 %v138, 16
  %v153 = vshll.u32 %v138, 16
  %v155 = vrot.slane %v153, 1
  %v156 = vor.u32 %v151, %v155
  %v158 = vshll.u32 %v139, 16
  %v160 = vrot.slane %v158, 1
  %v161 = vsel %vm149, %v156, %v160
  %v162 = vshrl.u32 %v139, 16
  %v164 = vor.u32 %v162, %v160
  %v166 = vshll.u32 %v140, 16
  %v168 = vrot.slane %v166, 1
  %v169 = vsel %vm149, %v164, %v168
  %v170 = vshrl.u32 %v140, 16
  %v172 = vor.u32 %v170, %v168
  %v174 = vshll.u32 %v141, 16
  %v176 = vrot.slane %v174, 1
  %v177 = vsel %vm149, %v172, %v176
  %v178 = vshrl.u32 %v141, 16
  %v180 = vor.u32 %v178, %v176
  %v182 = vshll.u32 %v142, 16
  %v184 = vrot.slane %v182, 1
  %v185 = vsel %vm149, %v180, %v184
  %v186 = vshrl.u32 %v142, 16
  %v188 = vor.u32 %v186, %v184
  %v190 = vshll.u32 %v143, 16
  %v192 = vrot.slane %v190, 1
  %v193 = vsel %vm149, %v188, %v192
  %v194 = vshrl.u32 %v143, 16
  %v196 = vor.u32 %v194, %v192
  %v198 = vshll.u32 %v144, 16
  %v200 = vrot.slane %v198, 1
  %v201 = vsel %vm149, %v196, %v200
  %v202 = vshrl.u32 %v144, 16
  %v204 = vor.u32 %v202, %v200
  %v206 = vshll.u32 %v145, 16
  %v208 = vrot.slane %v206, 1
  %v209 = vsel %vm149, %v204, %v208
  %v210 = vshrl.u32 %v145, 16
  %v212 = vor.u32 %v210, %v208
  %v214 = vshll.u32 %v146, 16
  %v216 = vrot.slane %v214, 1
  %v217 = vsel %vm149, %v212, %v216
  %v218 = vshrl.u32 %v146, 16
  %v220 = vor.u32 %v218, %v216
  %v222 = vshll.u32 %v147, 16
  %v224 = vrot.slane %v222, 1
  %v225 = vsel %vm149, %v220, %v224
  %v226 = vshrl.u32 %v147, 16
  %v228 = vor.u32 %v226, %v224
  %v230 = vshll.u32 %v148, 16
  %v232 = vrot.slane %v230, 1
  %v233 = vsel %vm149, %v228, %v232
  %v234 = vshrl.u32 %v148, 16
  %v236 = vor.u32 %v234, %v232
  %v264 = vunpack.c.l.b16 %v80
  %v265 = vunpack.c.l.b16 %v81
  %v266 = vunpack.c.l.b16 %v82
  %v267 = vunpack.c.l.b16 %v83
  %v268 = vunpack.c.l.b16 %v84
  %v269 = vunpack.c.l.b16 %v85
  %v270 = vunpack.c.l.b16 %v86
  %v271 = vunpack.c.l.b16 %v87
  %v272 = vunpack.c.l.b16 %v88
  %v273 = vunpack.c.l.b16 %v89
  %v274 = vunpack.c.l.b16 %v90
  %v275 = vunpack.c.l.b16 %v91
  %v276 = vunpack.c.l.b16 %v92
  %v277 = vunpack.c.l.b16 %v93
  %v278 = vunpack.c.l.b16 %v94
  %v279 = vunpack.c.l.b16 %v95
  %v280 = vpack.c.b16 %v265, %v264
  %v281 = vpack.c.b16 %v267, %v266
  %v282 = vpack.c.b16 %v269, %v268
  %v283 = vpack.c.b16 %v271, %v270
  %v284 = vpack.c.b16 %v273, %v272
  %v285 = vpack.c.b16 %v275, %v274
  %v286 = vpack.c.b16 %v277, %v276
  %v287 = vpack.c.b16 %v279, %v278
  %296 = vmatprep.subr.bf16.mxu0 0
  %297 = vmatpush1.bf16.msra.mxu0 %v287
  %298 = vmatprep.subr.bf16.mxu0 0
  %299 = vmatpush1.bf16.msra.mxu0 %v286
  %300 = vmatprep.subr.bf16.mxu0 0
  %301 = vmatpush1.bf16.msra.mxu0 %v285
  %302 = vmatprep.subr.bf16.mxu0 0
  %303 = vmatpush1.bf16.msra.mxu0 %v284
  %304 = vmatprep.subr.bf16.mxu0 0
  %305 = vmatpush1.bf16.msra.mxu0 %v283
  %306 = vmatprep.subr.bf16.mxu0 0
  %307 = vmatpush1.bf16.msra.mxu0 %v282
  %308 = vmatprep.subr.bf16.mxu0 0
  %309 = vmatpush1.bf16.msra.mxu0 %v281
  %310 = vmatprep.subr.bf16.mxu0 0
  %311 = vmatpush1.bf16.msra.mxu0 %v280
  %312 = vmatprep.subr.bf16.mxu0 0
  %313 = vmatpush2.bf16.msra.mxu0 0
  %314 = vmatprep.subr.bf16.mxu0 0
  %315 = vmatpush2.bf16.msra.mxu0 0
  %316 = vmatprep.subr.bf16.mxu0 0
  %317 = vmatpush2.bf16.msra.mxu0 0
  %318 = vmatprep.subr.bf16.mxu0 0
  %319 = vmatpush2.bf16.msra.mxu0 0
  %320 = vmatprep.subr.bf16.mxu0 0
  %321 = vmatpush2.bf16.msra.mxu0 0
  %322 = vmatprep.subr.bf16.mxu0 0
  %323 = vmatpush2.bf16.msra.mxu0 0
  %324 = vmatprep.subr.bf16.mxu0 0
  %325 = vmatpush2.bf16.msra.mxu0 0
  %326 = vmatprep.subr.bf16.mxu0 0
  %327 = vmatpush2.bf16.msra.mxu0 0
  %328 = vmatprep.mubr.bf16.mxu0 0
  %329 = vmatmul.mubr.bf16.gmra.mxu0 %v161
  %v330 = vpop.f32.mrf.mxu0
  %v331 = vadd.f32 0.0, %v330
  %v332 = vpop.f32.mrf.mxu0
  %v333 = vpop.f32.mrf.mxu0
  %v334 = vadd.f32 0.0, %v333
  %v335 = vpop.f32.mrf.mxu0
  %336 = vmatprep.mubr.bf16.mxu0 0
  %337 = vmatmul.mubr.bf16.gmra.mxu0 %v169
  %v338 = vpop.f32.mrf.mxu0
  %v339 = vadd.f32 0.0, %v338
  %v340 = vpop.f32.mrf.mxu0
  %v341 = vpop.f32.mrf.mxu0
  %v342 = vadd.f32 0.0, %v341
  %v343 = vpop.f32.mrf.mxu0
  %344 = vmatprep.mubr.bf16.mxu0 0
  %345 = vmatmul.mubr.bf16.gmra.mxu0 %v177
  %v346 = vpop.f32.mrf.mxu0
  %v347 = vadd.f32 0.0, %v346
  %v348 = vpop.f32.mrf.mxu0
  %v349 = vpop.f32.mrf.mxu0
  %v350 = vadd.f32 0.0, %v349
  %v351 = vpop.f32.mrf.mxu0
  %352 = vmatprep.mubr.bf16.mxu0 0
  %353 = vmatmul.mubr.bf16.gmra.mxu0 %v185
  %v354 = vpop.f32.mrf.mxu0
  %v355 = vadd.f32 0.0, %v354
  %v356 = vpop.f32.mrf.mxu0
  %v357 = vpop.f32.mrf.mxu0
  %v358 = vadd.f32 0.0, %v357
  %v359 = vpop.f32.mrf.mxu0
  %360 = vmatprep.mubr.bf16.mxu0 0
  %361 = vmatmul.mubr.bf16.gmra.mxu0 %v193
  %v362 = vpop.f32.mrf.mxu0
  %v363 = vadd.f32 0.0, %v362
  %v364 = vpop.f32.mrf.mxu0
  %v365 = vpop.f32.mrf.mxu0
  %v366 = vadd.f32 0.0, %v365
  %v367 = vpop.f32.mrf.mxu0
  %368 = vmatprep.mubr.bf16.mxu0 0
  %369 = vmatmul.mubr.bf16.gmra.mxu0 %v201
  %v370 = vpop.f32.mrf.mxu0
  %v371 = vadd.f32 0.0, %v370
  %v372 = vpop.f32.mrf.mxu0
  %v373 = vpop.f32.mrf.mxu0
  %v374 = vadd.f32 0.0, %v373
  %v375 = vpop.f32.mrf.mxu0
  %376 = vmatprep.mubr.bf16.mxu0 0
  %377 = vmatmul.mubr.bf16.gmra.mxu0 %v209
  %v378 = vpop.f32.mrf.mxu0
  %v379 = vadd.f32 0.0, %v378
  %v380 = vpop.f32.mrf.mxu0
  %v381 = vpop.f32.mrf.mxu0
  %v382 = vadd.f32 0.0, %v381
  %v383 = vpop.f32.mrf.mxu0
  %384 = vmatprep.mubr.bf16.mxu0 0
  %385 = vmatmul.mubr.bf16.gmra.mxu0 %v217
  %v386 = vpop.f32.mrf.mxu0
  %v387 = vadd.f32 0.0, %v386
  %v388 = vpop.f32.mrf.mxu0
  %v389 = vpop.f32.mrf.mxu0
  %v390 = vadd.f32 0.0, %v389
  %v391 = vpop.f32.mrf.mxu0
  %392 = vmatprep.mubr.bf16.mxu0 0
  %393 = vmatmul.mubr.bf16.gmra.mxu0 %v225
  %v394 = vpop.f32.mrf.mxu0
  %v395 = vadd.f32 0.0, %v394
  %v396 = vpop.f32.mrf.mxu0
  %v397 = vpop.f32.mrf.mxu0
  %v398 = vadd.f32 0.0, %v397
  %v399 = vpop.f32.mrf.mxu0
  %400 = vmatprep.mubr.bf16.mxu0 0
  %401 = vmatmul.mubr.bf16.gmra.mxu0 %v233
  %v402 = vpop.f32.mrf.mxu0
  %v403 = vadd.f32 0.0, %v402
  %v404 = vpop.f32.mrf.mxu0
  %v405 = vpop.f32.mrf.mxu0
  %v406 = vadd.f32 0.0, %v405
  %v407 = vpop.f32.mrf.mxu0
  %408 = vmatprep.mubr.bf16.mxu0 0
  %409 = vmatmul.mubr.bf16.gmra.mxu0 %v236
  %v410 = vpop.f32.mrf.mxu0
  %v411 = vadd.f32 0.0, %v410
  %v412 = vpop.f32.mrf.mxu0
  %v413 = vpop.f32.mrf.mxu0
  %v414 = vpop.f32.mrf.mxu0
  %415 = vdwg.mxu0
  %v417 = vunpack.c.l.b16 %v62
  %v418 = vpack.c.b16 %v417, %v417
  %v446 = vunpack.c.l.b16 %v63
  %v447 = vunpack.c.l.b16 %v64
  %v448 = vunpack.c.l.b16 %v65
  %v449 = vunpack.c.l.b16 %v66
  %v450 = vunpack.c.l.b16 %v67
  %v451 = vunpack.c.l.b16 %v68
  %v452 = vunpack.c.l.b16 %v69
  %v453 = vunpack.c.l.b16 %v70
  %v454 = vunpack.c.l.b16 %v71
  %v455 = vunpack.c.l.b16 %v72
  %v456 = vunpack.c.l.b16 %v73
  %v457 = vunpack.c.l.b16 %v74
  %v458 = vunpack.c.l.b16 %v75
  %v459 = vunpack.c.l.b16 %v76
  %v460 = vunpack.c.l.b16 %v77
  %v461 = vunpack.c.l.b16 %v78
  %v462 = vpack.c.b16 %v447, %v446
  %v463 = vpack.c.b16 %v449, %v448
  %v464 = vpack.c.b16 %v451, %v450
  %v465 = vpack.c.b16 %v453, %v452
  %v466 = vpack.c.b16 %v455, %v454
  %v467 = vpack.c.b16 %v457, %v456
  %v468 = vpack.c.b16 %v459, %v458
  %v469 = vpack.c.b16 %v461, %v460
  %478 = vmatprep.subr.bf16.mxu0 0
  %479 = vmatpush1.bf16.msra.mxu0 %v469
  %480 = vmatprep.subr.bf16.mxu0 0
  %481 = vmatpush1.bf16.msra.mxu0 %v468
  %482 = vmatprep.subr.bf16.mxu0 0
  %483 = vmatpush1.bf16.msra.mxu0 %v467
  %484 = vmatprep.subr.bf16.mxu0 0
  %485 = vmatpush1.bf16.msra.mxu0 %v466
  %486 = vmatprep.subr.bf16.mxu0 0
  %487 = vmatpush1.bf16.msra.mxu0 %v465
  %488 = vmatprep.subr.bf16.mxu0 0
  %489 = vmatpush1.bf16.msra.mxu0 %v464
  %490 = vmatprep.subr.bf16.mxu0 0
  %491 = vmatpush1.bf16.msra.mxu0 %v463
  %492 = vmatprep.subr.bf16.mxu0 0
  %493 = vmatpush1.bf16.msra.mxu0 %v462
  %494 = vmatprep.subr.bf16.mxu0 0
  %495 = vmatpush2.bf16.msra.mxu0 0
  %496 = vmatprep.subr.bf16.mxu0 0
  %497 = vmatpush2.bf16.msra.mxu0 0
  %498 = vmatprep.subr.bf16.mxu0 0
  %499 = vmatpush2.bf16.msra.mxu0 0
  %500 = vmatprep.subr.bf16.mxu0 0
  %501 = vmatpush2.bf16.msra.mxu0 0
  %502 = vmatprep.subr.bf16.mxu0 0
  %503 = vmatpush2.bf16.msra.mxu0 0
  %504 = vmatprep.subr.bf16.mxu0 0
  %505 = vmatpush2.bf16.msra.mxu0 0
  %506 = vmatprep.subr.bf16.mxu0 0
  %507 = vmatpush2.bf16.msra.mxu0 0
  %508 = vmatprep.subr.bf16.mxu0 0
  %509 = vmatpush2.bf16.msra.mxu0 0
  %510 = vmatprep.mubr.bf16.mxu0 0
  %511 = vmatmul.mubr.bf16.gmra.mxu0 %v138
  %v512 = vpop.f32.mrf.mxu0
  %v513 = vadd.f32 %v331, %v512
  %v514 = vpop.f32.mrf.mxu0
  %v515 = vpop.f32.mrf.mxu0
  %v516 = vadd.f32 %v334, %v515
  %v517 = vpop.f32.mrf.mxu0
  %518 = vmatprep.mubr.bf16.mxu0 0
  %519 = vmatmul.mubr.bf16.gmra.mxu0 %v139
  %v520 = vpop.f32.mrf.mxu0
  %v521 = vadd.f32 %v339, %v520
  %v522 = vpop.f32.mrf.mxu0
  %v523 = vpop.f32.mrf.mxu0
  %v524 = vadd.f32 %v342, %v523
  %v525 = vpop.f32.mrf.mxu0
  %526 = vmatprep.mubr.bf16.mxu0 0
  %527 = vmatmul.mubr.bf16.gmra.mxu0 %v140
  %v528 = vpop.f32.mrf.mxu0
  %v529 = vadd.f32 %v347, %v528
  %v530 = vpop.f32.mrf.mxu0
  %v531 = vpop.f32.mrf.mxu0
  %v532 = vadd.f32 %v350, %v531
  %v533 = vpop.f32.mrf.mxu0
  %534 = vmatprep.mubr.bf16.mxu0 0
  %535 = vmatmul.mubr.bf16.gmra.mxu0 %v141
  %v536 = vpop.f32.mrf.mxu0
  %v537 = vadd.f32 %v355, %v536
  %v538 = vpop.f32.mrf.mxu0
  %v539 = vpop.f32.mrf.mxu0
  %v540 = vadd.f32 %v358, %v539
  %v541 = vpop.f32.mrf.mxu0
  %542 = vmatprep.mubr.bf16.mxu0 0
  %543 = vmatmul.mubr.bf16.gmra.mxu0 %v142
  %v544 = vpop.f32.mrf.mxu0
  %v545 = vadd.f32 %v363, %v544
  %v546 = vpop.f32.mrf.mxu0
  %v547 = vpop.f32.mrf.mxu0
  %v548 = vadd.f32 %v366, %v547
  %v549 = vpop.f32.mrf.mxu0
  %550 = vmatprep.mubr.bf16.mxu0 0
  %551 = vmatmul.mubr.bf16.gmra.mxu0 %v143
  %v552 = vpop.f32.mrf.mxu0
  %v553 = vadd.f32 %v371, %v552
  %v554 = vpop.f32.mrf.mxu0
  %v555 = vpop.f32.mrf.mxu0
  %v556 = vadd.f32 %v374, %v555
  %v557 = vpop.f32.mrf.mxu0
  %558 = vmatprep.mubr.bf16.mxu0 0
  %559 = vmatmul.mubr.bf16.gmra.mxu0 %v144
  %v560 = vpop.f32.mrf.mxu0
  %v561 = vadd.f32 %v379, %v560
  %v562 = vpop.f32.mrf.mxu0
  %v563 = vpop.f32.mrf.mxu0
  %v564 = vadd.f32 %v382, %v563
  %v565 = vpop.f32.mrf.mxu0
  %566 = vmatprep.mubr.bf16.mxu0 0
  %567 = vmatmul.mubr.bf16.gmra.mxu0 %v145
  %v568 = vpop.f32.mrf.mxu0
  %v569 = vadd.f32 %v387, %v568
  %v570 = vpop.f32.mrf.mxu0
  %v571 = vpop.f32.mrf.mxu0
  %v572 = vadd.f32 %v390, %v571
  %v573 = vpop.f32.mrf.mxu0
  %574 = vmatprep.mubr.bf16.mxu0 0
  %575 = vmatmul.mubr.bf16.gmra.mxu0 %v146
  %v576 = vpop.f32.mrf.mxu0
  %v577 = vadd.f32 %v395, %v576
  %v578 = vpop.f32.mrf.mxu0
  %v579 = vpop.f32.mrf.mxu0
  %v580 = vadd.f32 %v398, %v579
  %v581 = vpop.f32.mrf.mxu0
  %582 = vmatprep.mubr.bf16.mxu0 0
  %583 = vmatmul.mubr.bf16.gmra.mxu0 %v147
  %v584 = vpop.f32.mrf.mxu0
  %v585 = vadd.f32 %v403, %v584
  %v586 = vpop.f32.mrf.mxu0
  %v587 = vpop.f32.mrf.mxu0
  %v588 = vadd.f32 %v406, %v587
  %v589 = vpop.f32.mrf.mxu0
  %590 = vmatprep.mubr.bf16.mxu0 0
  %591 = vmatmul.mubr.bf16.gmra.mxu0 %v418
  %v592 = vpop.f32.mrf.mxu0
  %v593 = vadd.f32 %v411, %v592
  %v594 = vpop.f32.mrf.mxu0
  %v595 = vpop.f32.mrf.mxu0
  %v596 = vpop.f32.mrf.mxu0
  %597 = vdwg.mxu0
  %v598 = vld [vmem:[%s1] sm:$0xf]
  %v599 = vld [vmem:[%s1 + $0x4] sm:$0xf]
  %v600 = vld [vmem:[%s1 + $0x8] sm:$0xf]
  %v601 = vld [vmem:[%s1 + $0xc] sm:$0xf]
  %v602 = vld [vmem:[%s1 + $0x10] sm:$0xf]
  %v603 = vld [vmem:[%s1 + $0x14] sm:$0xf]
  %v604 = vld [vmem:[%s1 + $0x18] sm:$0xf]
  %v605 = vld [vmem:[%s1 + $0x1c] sm:$0xf]
  %v606 = vld [vmem:[%s1 + $0x20] sm:$0xf]
  %v607 = vld [vmem:[%s1 + $0x24] sm:$0xf]
  %v608 = vld [vmem:[%s1 + $0x28] sm:$0xf]
  %v609 = vld [vmem:[%s1 + $0x2c] sm:$0xf]
  %v610 = vld [vmem:[%s1 + $0x30] sm:$0xf]
  %v611 = vld [vmem:[%s1 + $0x34] sm:$0xf]
  %v612 = vld [vmem:[%s1 + $0x38] sm:$0xf]
  %v613 = vld [vmem:[%s1 + $0x3c] sm:$0xf]
  %v614 = vld [vmem:[%s1 + $0x40] sm:$0xf]
  %v615 = vld [vmem:[%s1 + $0x44] sm:$0xf]
  %v616 = vld [vmem:[%s1 + $0x48] sm:$0xf]
  %v617 = vld [vmem:[%s1 + $0x4c] sm:$0xf]
  %v618 = vld [vmem:[%s1 + $0x50] sm:$0x1]
  %v619 = vld [vmem:[%s2 + $0x80] sm:$0xf]
  %v620 = vld [vmem:[%s2 + $0x84] sm:$0xf]
  %v621 = vld [vmem:[%s2 + $0x88] sm:$0xf]
  %v622 = vld [vmem:[%s2 + $0x8c] sm:$0xf]
  %v623 = vld [vmem:[%s2 + $0x90] sm:$0xf]
  %v624 = vld [vmem:[%s2 + $0x94] sm:$0xf]
  %v625 = vld [vmem:[%s2 + $0x98] sm:$0xf]
  %v626 = vld [vmem:[%s2 + $0x9c] sm:$0xf]
  %v627 = vld [vmem:[%s2 + $0xa0] sm:$0xf]
  %v628 = vld [vmem:[%s2 + $0xa4] sm:$0xf]
  %v629 = vld [vmem:[%s2 + $0xa8] sm:$0xf]
  %v630 = vld [vmem:[%s2 + $0xac] sm:$0xf]
  %v631 = vld [vmem:[%s2 + $0xb0] sm:$0xf]
  %v632 = vld [vmem:[%s2 + $0xb4] sm:$0xf]
  %v633 = vld [vmem:[%s2 + $0xb8] sm:$0xf]
  %v634 = vld [vmem:[%s2 + $0xbc] sm:$0xf]
  %v656 = vunpack.c.l.b16 %v598
  %v657 = vunpack.c.l.b16 %v599
  %v658 = vunpack.c.l.b16 %v600
  %v659 = vunpack.c.l.b16 %v601
  %v660 = vunpack.c.l.b16 %v602
  %v661 = vunpack.c.l.b16 %v603
  %v662 = vunpack.c.l.b16 %v604
  %v663 = vunpack.c.l.b16 %v605
  %v664 = vunpack.c.l.b16 %v606
  %v665 = vunpack.c.l.b16 %v607
  %v666 = vunpack.c.l.b16 %v608
  %v667 = vunpack.c.l.b16 %v609
  %v668 = vunpack.c.l.b16 %v610
  %v669 = vunpack.c.l.b16 %v611
  %v670 = vunpack.c.l.b16 %v612
  %v671 = vunpack.c.l.b16 %v613
  %v672 = vunpack.c.l.b16 %v614
  %v673 = vunpack.c.l.b16 %v615
  %v674 = vunpack.c.l.b16 %v616
  %v675 = vunpack.c.l.b16 %v617
  %v676 = vunpack.c.l.b16 %v618
  %v677 = vpack.c.b16 %v657, %v656
  %v678 = vpack.c.b16 %v659, %v658
  %v679 = vpack.c.b16 %v661, %v660
  %v680 = vpack.c.b16 %v663, %v662
  %v681 = vpack.c.b16 %v665, %v664
  %v682 = vpack.c.b16 %v667, %v666
  %v683 = vpack.c.b16 %v669, %v668
  %v684 = vpack.c.b16 %v671, %v670
  %v685 = vpack.c.b16 %v673, %v672
  %v686 = vpack.c.b16 %v675, %v674
  %v687 = vpack.c.b16 %v676, %v676
  %v715 = vunpack.c.l.b16 %v619
  %v716 = vunpack.c.l.b16 %v620
  %v717 = vunpack.c.l.b16 %v621
  %v718 = vunpack.c.l.b16 %v622
  %v719 = vunpack.c.l.b16 %v623
  %v720 = vunpack.c.l.b16 %v624
  %v721 = vunpack.c.l.b16 %v625
  %v722 = vunpack.c.l.b16 %v626
  %v723 = vunpack.c.l.b16 %v627
  %v724 = vunpack.c.l.b16 %v628
  %v725 = vunpack.c.l.b16 %v629
  %v726 = vunpack.c.l.b16 %v630
  %v727 = vunpack.c.l.b16 %v631
  %v728 = vunpack.c.l.b16 %v632
  %v729 = vunpack.c.l.b16 %v633
  %v730 = vunpack.c.l.b16 %v634
  %v731 = vpack.c.b16 %v716, %v715
  %v732 = vpack.c.b16 %v718, %v717
  %v733 = vpack.c.b16 %v720, %v719
  %v734 = vpack.c.b16 %v722, %v721
  %v735 = vpack.c.b16 %v724, %v723
  %v736 = vpack.c.b16 %v726, %v725
  %v737 = vpack.c.b16 %v728, %v727
  %v738 = vpack.c.b16 %v730, %v729
  %747 = vmatprep.subr.bf16.mxu0 0
  %748 = vmatpush1.bf16.msra.mxu0 %v738
  %749 = vmatprep.subr.bf16.mxu0 0
  %750 = vmatpush1.bf16.msra.mxu0 %v737
  %751 = vmatprep.subr.bf16.mxu0 0
  %752 = vmatpush1.bf16.msra.mxu0 %v736
  %753 = vmatprep.subr.bf16.mxu0 0
  %754 = vmatpush1.bf16.msra.mxu0 %v735
  %755 = vmatprep.subr.bf16.mxu0 0
  %756 = vmatpush1.bf16.msra.mxu0 %v734
  %757 = vmatprep.subr.bf16.mxu0 0
  %758 = vmatpush1.bf16.msra.mxu0 %v733
  %759 = vmatprep.subr.bf16.mxu0 0
  %760 = vmatpush1.bf16.msra.mxu0 %v732
  %761 = vmatprep.subr.bf16.mxu0 0
  %762 = vmatpush1.bf16.msra.mxu0 %v731
  %763 = vmatprep.subr.bf16.mxu0 0
  %764 = vmatpush2.bf16.msra.mxu0 0
  %765 = vmatprep.subr.bf16.mxu0 0
  %766 = vmatpush2.bf16.msra.mxu0 0
  %767 = vmatprep.subr.bf16.mxu0 0
  %768 = vmatpush2.bf16.msra.mxu0 0
  %769 = vmatprep.subr.bf16.mxu0 0
  %770 = vmatpush2.bf16.msra.mxu0 0
  %771 = vmatprep.subr.bf16.mxu0 0
  %772 = vmatpush2.bf16.msra.mxu0 0
  %773 = vmatprep.subr.bf16.mxu0 0
  %774 = vmatpush2.bf16.msra.mxu0 0
  %775 = vmatprep.subr.bf16.mxu0 0
  %776 = vmatpush2.bf16.msra.mxu0 0
  %777 = vmatprep.subr.bf16.mxu0 0
  %778 = vmatpush2.bf16.msra.mxu0 0
  %779 = vmatprep.mubr.bf16.mxu0 0
  %780 = vmatmul.mubr.bf16.gmra.mxu0 %v677
  %v781 = vpop.f32.mrf.mxu0
  %v782 = vadd.f32 0.0, %v781
  %v783 = vpop.f32.mrf.mxu0
  %v784 = vpop.f32.mrf.mxu0
  %v785 = vadd.f32 0.0, %v784
  %v786 = vpop.f32.mrf.mxu0
  %787 = vmatprep.mubr.bf16.mxu0 0
  %788 = vmatmul.mubr.bf16.gmra.mxu0 %v678
  %v789 = vpop.f32.mrf.mxu0
  %v790 = vadd.f32 0.0, %v789
  %v791 = vpop.f32.mrf.mxu0
  %v792 = vpop.f32.mrf.mxu0
  %v793 = vadd.f32 0.0, %v792
  %v794 = vpop.f32.mrf.mxu0
  %795 = vmatprep.mubr.bf16.mxu0 0
  %796 = vmatmul.mubr.bf16.gmra.mxu0 %v679
  %v797 = vpop.f32.mrf.mxu0
  %v798 = vadd.f32 0.0, %v797
  %v799 = vpop.f32.mrf.mxu0
  %v800 = vpop.f32.mrf.mxu0
  %v801 = vadd.f32 0.0, %v800
  %v802 = vpop.f32.mrf.mxu0
  %803 = vmatprep.mubr.bf16.mxu0 0
  %804 = vmatmul.mubr.bf16.gmra.mxu0 %v680
  %v805 = vpop.f32.mrf.mxu0
  %v806 = vadd.f32 0.0, %v805
  %v807 = vpop.f32.mrf.mxu0
  %v808 = vpop.f32.mrf.mxu0
  %v809 = vadd.f32 0.0, %v808
  %v810 = vpop.f32.mrf.mxu0
  %811 = vmatprep.mubr.bf16.mxu0 0
  %812 = vmatmul.mubr.bf16.gmra.mxu0 %v681
  %v813 = vpop.f32.mrf.mxu0
  %v814 = vadd.f32 0.0, %v813
  %v815 = vpop.f32.mrf.mxu0
  %v816 = vpop.f32.mrf.mxu0
  %v817 = vadd.f32 0.0, %v816
  %v818 = vpop.f32.mrf.mxu0
  %819 = vmatprep.mubr.bf16.mxu0 0
  %820 = vmatmul.mubr.bf16.gmra.mxu0 %v682
  %v821 = vpop.f32.mrf.mxu0
  %v822 = vadd.f32 0.0, %v821
  %v823 = vpop.f32.mrf.mxu0
  %v824 = vpop.f32.mrf.mxu0
  %v825 = vadd.f32 0.0, %v824
  %v826 = vpop.f32.mrf.mxu0
  %827 = vmatprep.mubr.bf16.mxu0 0
  %828 = vmatmul.mubr.bf16.gmra.mxu0 %v683
  %v829 = vpop.f32.mrf.mxu0
  %v830 = vadd.f32 0.0, %v829
  %v831 = vpop.f32.mrf.mxu0
  %v832 = vpop.f32.mrf.mxu0
  %v833 = vadd.f32 0.0, %v832
  %v834 = vpop.f32.mrf.mxu0
  %835 = vmatprep.mubr.bf16.mxu0 0
  %836 = vmatmul.mubr.bf16.gmra.mxu0 %v684
  %v837 = vpop.f32.mrf.mxu0
  %v838 = vadd.f32 0.0, %v837
  %v839 = vpop.f32.mrf.mxu0
  %v840 = vpop.f32.mrf.mxu0
  %v841 = vadd.f32 0.0, %v840
  %v842 = vpop.f32.mrf.mxu0
  %843 = vmatprep.mubr.bf16.mxu0 0
  %844 = vmatmul.mubr.bf16.gmra.mxu0 %v685
  %v845 = vpop.f32.mrf.mxu0
  %v846 = vadd.f32 0.0, %v845
  %v847 = vpop.f32.mrf.mxu0
  %v848 = vpop.f32.mrf.mxu0
  %v849 = vadd.f32 0.0, %v848
  %v850 = vpop.f32.mrf.mxu0
  %851 = vmatprep.mubr.bf16.mxu0 0
  %852 = vmatmul.mubr.bf16.gmra.mxu0 %v686
  %v853 = vpop.f32.mrf.mxu0
  %v854 = vadd.f32 0.0, %v853
  %v855 = vpop.f32.mrf.mxu0
  %v856 = vpop.f32.mrf.mxu0
  %v857 = vadd.f32 0.0, %v856
  %v858 = vpop.f32.mrf.mxu0
  %859 = vmatprep.mubr.bf16.mxu0 0
  %860 = vmatmul.mubr.bf16.gmra.mxu0 %v687
  %v861 = vpop.f32.mrf.mxu0
  %v862 = vadd.f32 0.0, %v861
  %v863 = vpop.f32.mrf.mxu0
  %v864 = vpop.f32.mrf.mxu0
  %v865 = vpop.f32.mrf.mxu0
  %866 = vdwg.mxu0
  %v867 = vadd.f32 %v513, %v782
  %v868 = vadd.f32 %v516, %v785
  %v869 = vadd.f32 %v521, %v790
  %v870 = vadd.f32 %v524, %v793
  %v871 = vadd.f32 %v529, %v798
  %v872 = vadd.f32 %v532, %v801
  %v873 = vadd.f32 %v537, %v806
  %v874 = vadd.f32 %v540, %v809
  %v875 = vadd.f32 %v545, %v814
  %v876 = vadd.f32 %v548, %v817
  %v877 = vadd.f32 %v553, %v822
  %v878 = vadd.f32 %v556, %v825
  %v879 = vadd.f32 %v561, %v830
  %v880 = vadd.f32 %v564, %v833
  %v881 = vadd.f32 %v569, %v838
  %v882 = vadd.f32 %v572, %v841
  %v883 = vadd.f32 %v577, %v846
  %v884 = vadd.f32 %v580, %v849
  %v885 = vadd.f32 %v585, %v854
  %v886 = vadd.f32 %v588, %v857
  %v887 = vadd.f32 %v593, %v862
  %v888 = vld [vmem:[%s1 + $0x50] sm:$0x3]
  %v889 = vld [vmem:[%s2 + $0xc0] sm:$0xf]
  %v890 = vld [vmem:[%s2 + $0xc4] sm:$0xf]
  %v891 = vld [vmem:[%s2 + $0xc8] sm:$0xf]
  %v892 = vld [vmem:[%s2 + $0xcc] sm:$0xf]
  %v893 = vld [vmem:[%s2 + $0xd0] sm:$0xf]
  %v894 = vld [vmem:[%s2 + $0xd4] sm:$0xf]
  %v895 = vld [vmem:[%s2 + $0xd8] sm:$0xf]
  %v896 = vld [vmem:[%s2 + $0xdc] sm:$0xf]
  %v897 = vld [vmem:[%s2 + $0xe0] sm:$0xf]
  %v898 = vld [vmem:[%s2 + $0xe4] sm:$0xf]
  %v899 = vld [vmem:[%s2 + $0xe8] sm:$0xf]
  %v900 = vld [vmem:[%s2 + $0xec] sm:$0xf]
  %v901 = vld [vmem:[%s2 + $0xf0] sm:$0xf]
  %v902 = vld [vmem:[%s2 + $0xf4] sm:$0xf]
  %v903 = vld [vmem:[%s2 + $0xf8] sm:$0xf]
  %v904 = vld [vmem:[%s2 + $0xfc] sm:$0xf]
  %v906 = vunpack.c.l.b16 %v888
  %v907 = vpack.c.b16 %v906, %v906
  %v909 = vshrl.u32 %v677, 16
  %v911 = vshll.u32 %v677, 16
  %v913 = vrot.slane %v911, 1
  %v914 = vor.u32 %v909, %v913
  %v916 = vshll.u32 %v678, 16
  %v918 = vrot.slane %v916, 1
  %v919 = vsel %vm149, %v914, %v918
  %v920 = vshrl.u32 %v678, 16
  %v922 = vor.u32 %v920, %v918
  %v924 = vshll.u32 %v679, 16
  %v926 = vrot.slane %v924, 1
  %v927 = vsel %vm149, %v922, %v926
  %v928 = vshrl.u32 %v679, 16
  %v930 = vor.u32 %v928, %v926
  %v932 = vshll.u32 %v680, 16
  %v934 = vrot.slane %v932, 1
  %v935 = vsel %vm149, %v930, %v934
  %v936 = vshrl.u32 %v680, 16
  %v938 = vor.u32 %v936, %v934
  %v940 = vshll.u32 %v681, 16
  %v942 = vrot.slane %v940, 1
  %v943 = vsel %vm149, %v938, %v942
  %v944 = vshrl.u32 %v681, 16
  %v946 = vor.u32 %v944, %v942
  %v948 = vshll.u32 %v682, 16
  %v950 = vrot.slane %v948, 1
  %v951 = vsel %vm149, %v946, %v950
  %v952 = vshrl.u32 %v682, 16
  %v954 = vor.u32 %v952, %v950
  %v956 = vshll.u32 %v683, 16
  %v958 = vrot.slane %v956, 1
  %v959 = vsel %vm149, %v954, %v958
  %v960 = vshrl.u32 %v683, 16
  %v962 = vor.u32 %v960, %v958
  %v964 = vshll.u32 %v684, 16
  %v966 = vrot.slane %v964, 1
  %v967 = vsel %vm149, %v962, %v966
  %v968 = vshrl.u32 %v684, 16
  %v970 = vor.u32 %v968, %v966
  %v972 = vshll.u32 %v685, 16
  %v974 = vrot.slane %v972, 1
  %v975 = vsel %vm149, %v970, %v974
  %v976 = vshrl.u32 %v685, 16
  %v978 = vor.u32 %v976, %v974
  %v980 = vshll.u32 %v686, 16
  %v982 = vrot.slane %v980, 1
  %v983 = vsel %vm149, %v978, %v982
  %v984 = vshrl.u32 %v686, 16
  %v986 = vor.u32 %v984, %v982
  %v988 = vshll.u32 %v907, 16
  %v990 = vrot.slane %v988, 1
  %v991 = vsel %vm149, %v986, %v990
  %v992 = vshrl.u32 %v907, 16
  %v994 = vor.u32 %v992, %v990
  %v1022 = vunpack.c.l.b16 %v889
  %v1023 = vunpack.c.l.b16 %v890
  %v1024 = vunpack.c.l.b16 %v891
  %v1025 = vunpack.c.l.b16 %v892
  %v1026 = vunpack.c.l.b16 %v893
  %v1027 = vunpack.c.l.b16 %v894
  %v1028 = vunpack.c.l.b16 %v895
  %v1029 = vunpack.c.l.b16 %v896
  %v1030 = vunpack.c.l.b16 %v897
  %v1031 = vunpack.c.l.b16 %v898
  %v1032 = vunpack.c.l.b16 %v899
  %v1033 = vunpack.c.l.b16 %v900
  %v1034 = vunpack.c.l.b16 %v901
  %v1035 = vunpack.c.l.b16 %v902
  %v1036 = vunpack.c.l.b16 %v903
  %v1037 = vunpack.c.l.b16 %v904
  %v1038 = vpack.c.b16 %v1023, %v1022
  %v1039 = vpack.c.b16 %v1025, %v1024
  %v1040 = vpack.c.b16 %v1027, %v1026
  %v1041 = vpack.c.b16 %v1029, %v1028
  %v1042 = vpack.c.b16 %v1031, %v1030
  %v1043 = vpack.c.b16 %v1033, %v1032
  %v1044 = vpack.c.b16 %v1035, %v1034
  %v1045 = vpack.c.b16 %v1037, %v1036
  %1054 = vmatprep.subr.bf16.mxu0 0
  %1055 = vmatpush1.bf16.msra.mxu0 %v1045
  %1056 = vmatprep.subr.bf16.mxu0 0
  %1057 = vmatpush1.bf16.msra.mxu0 %v1044
  %1058 = vmatprep.subr.bf16.mxu0 0
  %1059 = vmatpush1.bf16.msra.mxu0 %v1043
  %1060 = vmatprep.subr.bf16.mxu0 0
  %1061 = vmatpush1.bf16.msra.mxu0 %v1042
  %1062 = vmatprep.subr.bf16.mxu0 0
  %1063 = vmatpush1.bf16.msra.mxu0 %v1041
  %1064 = vmatprep.subr.bf16.mxu0 0
  %1065 = vmatpush1.bf16.msra.mxu0 %v1040
  %1066 = vmatprep.subr.bf16.mxu0 0
  %1067 = vmatpush1.bf16.msra.mxu0 %v1039
  %1068 = vmatprep.subr.bf16.mxu0 0
  %1069 = vmatpush1.bf16.msra.mxu0 %v1038
  %1070 = vmatprep.subr.bf16.mxu0 0
  %1071 = vmatpush2.bf16.msra.mxu0 0
  %1072 = vmatprep.subr.bf16.mxu0 0
  %1073 = vmatpush2.bf16.msra.mxu0 0
  %1074 = vmatprep.subr.bf16.mxu0 0
  %1075 = vmatpush2.bf16.msra.mxu0 0
  %1076 = vmatprep.subr.bf16.mxu0 0
  %1077 = vmatpush2.bf16.msra.mxu0 0
  %1078 = vmatprep.subr.bf16.mxu0 0
  %1079 = vmatpush2.bf16.msra.mxu0 0
  %1080 = vmatprep.subr.bf16.mxu0 0
  %1081 = vmatpush2.bf16.msra.mxu0 0
  %1082 = vmatprep.subr.bf16.mxu0 0
  %1083 = vmatpush2.bf16.msra.mxu0 0
  %1084 = vmatprep.subr.bf16.mxu0 0
  %1085 = vmatpush2.bf16.msra.mxu0 0
  %1086 = vmatprep.mubr.bf16.mxu0 0
  %1087 = vmatmul.mubr.bf16.gmra.mxu0 %v919
  %v1088 = vpop.f32.mrf.mxu0
  %v1089 = vadd.f32 0.0, %v1088
  %v1090 = vpop.f32.mrf.mxu0
  %v1091 = vpop.f32.mrf.mxu0
  %v1092 = vadd.f32 0.0, %v1091
  %v1093 = vpop.f32.mrf.mxu0
  %1094 = vmatprep.mubr.bf16.mxu0 0
  %1095 = vmatmul.mubr.bf16.gmra.mxu0 %v927
  %v1096 = vpop.f32.mrf.mxu0
  %v1097 = vadd.f32 0.0, %v1096
  %v1098 = vpop.f32.mrf.mxu0
  %v1099 = vpop.f32.mrf.mxu0
  %v1100 = vadd.f32 0.0, %v1099
  %v1101 = vpop.f32.mrf.mxu0
  %1102 = vmatprep.mubr.bf16.mxu0 0
  %1103 = vmatmul.mubr.bf16.gmra.mxu0 %v935
  %v1104 = vpop.f32.mrf.mxu0
  %v1105 = vadd.f32 0.0, %v1104
  %v1106 = vpop.f32.mrf.mxu0
  %v1107 = vpop.f32.mrf.mxu0
  %v1108 = vadd.f32 0.0, %v1107
  %v1109 = vpop.f32.mrf.mxu0
  %1110 = vmatprep.mubr.bf16.mxu0 0
  %1111 = vmatmul.mubr.bf16.gmra.mxu0 %v943
  %v1112 = vpop.f32.mrf.mxu0
  %v1113 = vadd.f32 0.0, %v1112
  %v1114 = vpop.f32.mrf.mxu0
  %v1115 = vpop.f32.mrf.mxu0
  %v1116 = vadd.f32 0.0, %v1115
  %v1117 = vpop.f32.mrf.mxu0
  %1118 = vmatprep.mubr.bf16.mxu0 0
  %1119 = vmatmul.mubr.bf16.gmra.mxu0 %v951
  %v1120 = vpop.f32.mrf.mxu0
  %v1121 = vadd.f32 0.0, %v1120
  %v1122 = vpop.f32.mrf.mxu0
  %v1123 = vpop.f32.mrf.mxu0
  %v1124 = vadd.f32 0.0, %v1123
  %v1125 = vpop.f32.mrf.mxu0
  %1126 = vmatprep.mubr.bf16.mxu0 0
  %1127 = vmatmul.mubr.bf16.gmra.mxu0 %v959
  %v1128 = vpop.f32.mrf.mxu0
  %v1129 = vadd.f32 0.0, %v1128
  %v1130 = vpop.f32.mrf.mxu0
  %v1131 = vpop.f32.mrf.mxu0
  %v1132 = vadd.f32 0.0, %v1131
  %v1133 = vpop.f32.mrf.mxu0
  %1134 = vmatprep.mubr.bf16.mxu0 0
  %1135 = vmatmul.mubr.bf16.gmra.mxu0 %v967
  %v1136 = vpop.f32.mrf.mxu0
  %v1137 = vadd.f32 0.0, %v1136
  %v1138 = vpop.f32.mrf.mxu0
  %v1139 = vpop.f32.mrf.mxu0
  %v1140 = vadd.f32 0.0, %v1139
  %v1141 = vpop.f32.mrf.mxu0
  %1142 = vmatprep.mubr.bf16.mxu0 0
  %1143 = vmatmul.mubr.bf16.gmra.mxu0 %v975
  %v1144 = vpop.f32.mrf.mxu0
  %v1145 = vadd.f32 0.0, %v1144
  %v1146 = vpop.f32.mrf.mxu0
  %v1147 = vpop.f32.mrf.mxu0
  %v1148 = vadd.f32 0.0, %v1147
  %v1149 = vpop.f32.mrf.mxu0
  %1150 = vmatprep.mubr.bf16.mxu0 0
  %1151 = vmatmul.mubr.bf16.gmra.mxu0 %v983
  %v1152 = vpop.f32.mrf.mxu0
  %v1153 = vadd.f32 0.0, %v1152
  %v1154 = vpop.f32.mrf.mxu0
  %v1155 = vpop.f32.mrf.mxu0
  %v1156 = vadd.f32 0.0, %v1155
  %v1157 = vpop.f32.mrf.mxu0
  %1158 = vmatprep.mubr.bf16.mxu0 0
  %1159 = vmatmul.mubr.bf16.gmra.mxu0 %v991
  %v1160 = vpop.f32.mrf.mxu0
  %v1161 = vadd.f32 0.0, %v1160
  %v1162 = vpop.f32.mrf.mxu0
  %v1163 = vpop.f32.mrf.mxu0
  %v1164 = vadd.f32 0.0, %v1163
  %v1165 = vpop.f32.mrf.mxu0
  %1166 = vmatprep.mubr.bf16.mxu0 0
  %1167 = vmatmul.mubr.bf16.gmra.mxu0 %v994
  %v1168 = vpop.f32.mrf.mxu0
  %v1169 = vadd.f32 0.0, %v1168
  %v1170 = vpop.f32.mrf.mxu0
  %v1171 = vpop.f32.mrf.mxu0
  %v1172 = vpop.f32.mrf.mxu0
  %1173 = vdwg.mxu0
  %v1174 = vadd.f32 %v867, %v1089
  %v1175 = vadd.f32 %v868, %v1092
  %v1176 = vadd.f32 %v869, %v1097
  %v1177 = vadd.f32 %v870, %v1100
  %v1178 = vadd.f32 %v871, %v1105
  %v1179 = vadd.f32 %v872, %v1108
  %v1180 = vadd.f32 %v873, %v1113
  %v1181 = vadd.f32 %v874, %v1116
  %v1182 = vadd.f32 %v875, %v1121
  %v1183 = vadd.f32 %v876, %v1124
  %v1184 = vadd.f32 %v877, %v1129
  %v1185 = vadd.f32 %v878, %v1132
  %v1186 = vadd.f32 %v879, %v1137
  %v1187 = vadd.f32 %v880, %v1140
  %v1188 = vadd.f32 %v881, %v1145
  %v1189 = vadd.f32 %v882, %v1148
  %v1190 = vadd.f32 %v883, %v1153
  %v1191 = vadd.f32 %v884, %v1156
  %v1192 = vadd.f32 %v885, %v1161
  %v1193 = vadd.f32 %v886, %v1164
  %v1194 = vadd.f32 %v887, %v1169
  %v1195 = vld [vmem:[%s0 + $0x4] sm:$0xf]
  %v1196 = vld [vmem:[%s0 + $0x8] sm:$0xf]
  %v1197 = vld [vmem:[%s0 + $0xc] sm:$0xf]
  %v1198 = vld [vmem:[%s0 + $0x10] sm:$0xf]
  %v1199 = vld [vmem:[%s0 + $0x14] sm:$0xf]
  %v1200 = vld [vmem:[%s0 + $0x18] sm:$0xf]
  %v1201 = vld [vmem:[%s0 + $0x1c] sm:$0xf]
  %v1202 = vld [vmem:[%s0 + $0x20] sm:$0xf]
  %v1203 = vld [vmem:[%s0 + $0x24] sm:$0xf]
  %v1204 = vld [vmem:[%s0 + $0x28] sm:$0xf]
  %v1205 = vld [vmem:[%s0 + $0x2c] sm:$0xf]
  %v1206 = vld [vmem:[%s0 + $0x30] sm:$0xf]
  %v1207 = vld [vmem:[%s0 + $0x34] sm:$0xf]
  %v1208 = vld [vmem:[%s0 + $0x38] sm:$0xf]
  %v1209 = vld [vmem:[%s0 + $0x3c] sm:$0xf]
  %v1210 = vld [vmem:[%s0 + $0x40] sm:$0xf]
  %v1211 = vld [vmem:[%s0 + $0x44] sm:$0xf]
  %v1212 = vld [vmem:[%s0 + $0x48] sm:$0xf]
  %v1213 = vld [vmem:[%s0 + $0x4c] sm:$0xf]
  %v1214 = vld [vmem:[%s0 + $0x50] sm:$0xf]
  %v1215 = vld [vmem:[%s0 + $0x54] sm:$0x3]
  %v1216 = vld [vmem:[%s2 + $0x100] sm:$0xf]
  %v1217 = vld [vmem:[%s2 + $0x104] sm:$0xf]
  %v1218 = vld [vmem:[%s2 + $0x108] sm:$0xf]
  %v1219 = vld [vmem:[%s2 + $0x10c] sm:$0xf]
  %v1220 = vld [vmem:[%s2 + $0x110] sm:$0xf]
  %v1221 = vld [vmem:[%s2 + $0x114] sm:$0xf]
  %v1222 = vld [vmem:[%s2 + $0x118] sm:$0xf]
  %v1223 = vld [vmem:[%s2 + $0x11c] sm:$0xf]
  %v1224 = vld [vmem:[%s2 + $0x120] sm:$0xf]
  %v1225 = vld [vmem:[%s2 + $0x124] sm:$0xf]
  %v1226 = vld [vmem:[%s2 + $0x128] sm:$0xf]
  %v1227 = vld [vmem:[%s2 + $0x12c] sm:$0xf]
  %v1228 = vld [vmem:[%s2 + $0x130] sm:$0xf]
  %v1229 = vld [vmem:[%s2 + $0x134] sm:$0xf]
  %v1230 = vld [vmem:[%s2 + $0x138] sm:$0xf]
  %v1231 = vld [vmem:[%s2 + $0x13c] sm:$0xf]
  %v1253 = vunpack.c.l.b16 %v1195
  %v1254 = vunpack.c.l.b16 %v1196
  %v1255 = vunpack.c.l.b16 %v1197
  %v1256 = vunpack.c.l.b16 %v1198
  %v1257 = vunpack.c.l.b16 %v1199
  %v1258 = vunpack.c.l.b16 %v1200
  %v1259 = vunpack.c.l.b16 %v1201
  %v1260 = vunpack.c.l.b16 %v1202
  %v1261 = vunpack.c.l.b16 %v1203
  %v1262 = vunpack.c.l.b16 %v1204
  %v1263 = vunpack.c.l.b16 %v1205
  %v1264 = vunpack.c.l.b16 %v1206
  %v1265 = vunpack.c.l.b16 %v1207
  %v1266 = vunpack.c.l.b16 %v1208
  %v1267 = vunpack.c.l.b16 %v1209
  %v1268 = vunpack.c.l.b16 %v1210
  %v1269 = vunpack.c.l.b16 %v1211
  %v1270 = vunpack.c.l.b16 %v1212
  %v1271 = vunpack.c.l.b16 %v1213
  %v1272 = vunpack.c.l.b16 %v1214
  %v1273 = vunpack.c.l.b16 %v1215
  %v1274 = vpack.c.b16 %v1254, %v1253
  %v1275 = vpack.c.b16 %v1256, %v1255
  %v1276 = vpack.c.b16 %v1258, %v1257
  %v1277 = vpack.c.b16 %v1260, %v1259
  %v1278 = vpack.c.b16 %v1262, %v1261
  %v1279 = vpack.c.b16 %v1264, %v1263
  %v1280 = vpack.c.b16 %v1266, %v1265
  %v1281 = vpack.c.b16 %v1268, %v1267
  %v1282 = vpack.c.b16 %v1270, %v1269
  %v1283 = vpack.c.b16 %v1272, %v1271
  %v1284 = vpack.c.b16 %v1273, %v1273
  %v1286 = vshrl.u32 %v1274, 16
  %v1288 = vshll.u32 %v1274, 16
  %v1290 = vrot.slane %v1288, 1
  %v1291 = vor.u32 %v1286, %v1290
  %v1293 = vshll.u32 %v1275, 16
  %v1295 = vrot.slane %v1293, 1
  %v1296 = vsel %vm149, %v1291, %v1295
  %v1297 = vshrl.u32 %v1275, 16
  %v1299 = vor.u32 %v1297, %v1295
  %v1301 = vshll.u32 %v1276, 16
  %v1303 = vrot.slane %v1301, 1
  %v1304 = vsel %vm149, %v1299, %v1303
  %v1305 = vshrl.u32 %v1276, 16
  %v1307 = vor.u32 %v1305, %v1303
  %v1309 = vshll.u32 %v1277, 16
  %v1311 = vrot.slane %v1309, 1
  %v1312 = vsel %vm149, %v1307, %v1311
  %v1313 = vshrl.u32 %v1277, 16
  %v1315 = vor.u32 %v1313, %v1311
  %v1317 = vshll.u32 %v1278, 16
  %v1319 = vrot.slane %v1317, 1
  %v1320 = vsel %vm149, %v1315, %v1319
  %v1321 = vshrl.u32 %v1278, 16
  %v1323 = vor.u32 %v1321, %v1319
  %v1325 = vshll.u32 %v1279, 16
  %v1327 = vrot.slane %v1325, 1
  %v1328 = vsel %vm149, %v1323, %v1327
  %v1329 = vshrl.u32 %v1279, 16
  %v1331 = vor.u32 %v1329, %v1327
  %v1333 = vshll.u32 %v1280, 16
  %v1335 = vrot.slane %v1333, 1
  %v1336 = vsel %vm149, %v1331, %v1335
  %v1337 = vshrl.u32 %v1280, 16
  %v1339 = vor.u32 %v1337, %v1335
  %v1341 = vshll.u32 %v1281, 16
  %v1343 = vrot.slane %v1341, 1
  %v1344 = vsel %vm149, %v1339, %v1343
  %v1345 = vshrl.u32 %v1281, 16
  %v1347 = vor.u32 %v1345, %v1343
  %v1349 = vshll.u32 %v1282, 16
  %v1351 = vrot.slane %v1349, 1
  %v1352 = vsel %vm149, %v1347, %v1351
  %v1353 = vshrl.u32 %v1282, 16
  %v1355 = vor.u32 %v1353, %v1351
  %v1357 = vshll.u32 %v1283, 16
  %v1359 = vrot.slane %v1357, 1
  %v1360 = vsel %vm149, %v1355, %v1359
  %v1361 = vshrl.u32 %v1283, 16
  %v1363 = vor.u32 %v1361, %v1359
  %v1365 = vshll.u32 %v1284, 16
  %v1367 = vrot.slane %v1365, 1
  %v1368 = vsel %vm149, %v1363, %v1367
  %v1369 = vshrl.u32 %v1284, 16
  %v1371 = vor.u32 %v1369, %v1367
  %v1399 = vunpack.c.l.b16 %v1216
  %v1400 = vunpack.c.l.b16 %v1217
  %v1401 = vunpack.c.l.b16 %v1218
  %v1402 = vunpack.c.l.b16 %v1219
  %v1403 = vunpack.c.l.b16 %v1220
  %v1404 = vunpack.c.l.b16 %v1221
  %v1405 = vunpack.c.l.b16 %v1222
  %v1406 = vunpack.c.l.b16 %v1223
  %v1407 = vunpack.c.l.b16 %v1224
  %v1408 = vunpack.c.l.b16 %v1225
  %v1409 = vunpack.c.l.b16 %v1226
  %v1410 = vunpack.c.l.b16 %v1227
  %v1411 = vunpack.c.l.b16 %v1228
  %v1412 = vunpack.c.l.b16 %v1229
  %v1413 = vunpack.c.l.b16 %v1230
  %v1414 = vunpack.c.l.b16 %v1231
  %v1415 = vpack.c.b16 %v1400, %v1399
  %v1416 = vpack.c.b16 %v1402, %v1401
  %v1417 = vpack.c.b16 %v1404, %v1403
  %v1418 = vpack.c.b16 %v1406, %v1405
  %v1419 = vpack.c.b16 %v1408, %v1407
  %v1420 = vpack.c.b16 %v1410, %v1409
  %v1421 = vpack.c.b16 %v1412, %v1411
  %v1422 = vpack.c.b16 %v1414, %v1413
  %1431 = vmatprep.subr.bf16.mxu0 0
  %1432 = vmatpush1.bf16.msra.mxu0 %v1422
  %1433 = vmatprep.subr.bf16.mxu0 0
  %1434 = vmatpush1.bf16.msra.mxu0 %v1421
  %1435 = vmatprep.subr.bf16.mxu0 0
  %1436 = vmatpush1.bf16.msra.mxu0 %v1420
  %1437 = vmatprep.subr.bf16.mxu0 0
  %1438 = vmatpush1.bf16.msra.mxu0 %v1419
  %1439 = vmatprep.subr.bf16.mxu0 0
  %1440 = vmatpush1.bf16.msra.mxu0 %v1418
  %1441 = vmatprep.subr.bf16.mxu0 0
  %1442 = vmatpush1.bf16.msra.mxu0 %v1417
  %1443 = vmatprep.subr.bf16.mxu0 0
  %1444 = vmatpush1.bf16.msra.mxu0 %v1416
  %1445 = vmatprep.subr.bf16.mxu0 0
  %1446 = vmatpush1.bf16.msra.mxu0 %v1415
  %1447 = vmatprep.subr.bf16.mxu0 0
  %1448 = vmatpush2.bf16.msra.mxu0 0
  %1449 = vmatprep.subr.bf16.mxu0 0
  %1450 = vmatpush2.bf16.msra.mxu0 0
  %1451 = vmatprep.subr.bf16.mxu0 0
  %1452 = vmatpush2.bf16.msra.mxu0 0
  %1453 = vmatprep.subr.bf16.mxu0 0
  %1454 = vmatpush2.bf16.msra.mxu0 0
  %1455 = vmatprep.subr.bf16.mxu0 0
  %1456 = vmatpush2.bf16.msra.mxu0 0
  %1457 = vmatprep.subr.bf16.mxu0 0
  %1458 = vmatpush2.bf16.msra.mxu0 0
  %1459 = vmatprep.subr.bf16.mxu0 0
  %1460 = vmatpush2.bf16.msra.mxu0 0
  %1461 = vmatprep.subr.bf16.mxu0 0
  %1462 = vmatpush2.bf16.msra.mxu0 0
  %1463 = vmatprep.mubr.bf16.mxu0 0
  %1464 = vmatmul.mubr.bf16.gmra.mxu0 %v1296
  %v1465 = vpop.f32.mrf.mxu0
  %v1466 = vadd.f32 0.0, %v1465
  %v1467 = vpop.f32.mrf.mxu0
  %v1468 = vpop.f32.mrf.mxu0
  %v1469 = vadd.f32 0.0, %v1468
  %v1470 = vpop.f32.mrf.mxu0
  %1471 = vmatprep.mubr.bf16.mxu0 0
  %1472 = vmatmul.mubr.bf16.gmra.mxu0 %v1304
  %v1473 = vpop.f32.mrf.mxu0
  %v1474 = vadd.f32 0.0, %v1473
  %v1475 = vpop.f32.mrf.mxu0
  %v1476 = vpop.f32.mrf.mxu0
  %v1477 = vadd.f32 0.0, %v1476
  %v1478 = vpop.f32.mrf.mxu0
  %1479 = vmatprep.mubr.bf16.mxu0 0
  %1480 = vmatmul.mubr.bf16.gmra.mxu0 %v1312
  %v1481 = vpop.f32.mrf.mxu0
  %v1482 = vadd.f32 0.0, %v1481
  %v1483 = vpop.f32.mrf.mxu0
  %v1484 = vpop.f32.mrf.mxu0
  %v1485 = vadd.f32 0.0, %v1484
  %v1486 = vpop.f32.mrf.mxu0
  %1487 = vmatprep.mubr.bf16.mxu0 0
  %1488 = vmatmul.mubr.bf16.gmra.mxu0 %v1320
  %v1489 = vpop.f32.mrf.mxu0
  %v1490 = vadd.f32 0.0, %v1489
  %v1491 = vpop.f32.mrf.mxu0
  %v1492 = vpop.f32.mrf.mxu0
  %v1493 = vadd.f32 0.0, %v1492
  %v1494 = vpop.f32.mrf.mxu0
  %1495 = vmatprep.mubr.bf16.mxu0 0
  %1496 = vmatmul.mubr.bf16.gmra.mxu0 %v1328
  %v1497 = vpop.f32.mrf.mxu0
  %v1498 = vadd.f32 0.0, %v1497
  %v1499 = vpop.f32.mrf.mxu0
  %v1500 = vpop.f32.mrf.mxu0
  %v1501 = vadd.f32 0.0, %v1500
  %v1502 = vpop.f32.mrf.mxu0
  %1503 = vmatprep.mubr.bf16.mxu0 0
  %1504 = vmatmul.mubr.bf16.gmra.mxu0 %v1336
  %v1505 = vpop.f32.mrf.mxu0
  %v1506 = vadd.f32 0.0, %v1505
  %v1507 = vpop.f32.mrf.mxu0
  %v1508 = vpop.f32.mrf.mxu0
  %v1509 = vadd.f32 0.0, %v1508
  %v1510 = vpop.f32.mrf.mxu0
  %1511 = vmatprep.mubr.bf16.mxu0 0
  %1512 = vmatmul.mubr.bf16.gmra.mxu0 %v1344
  %v1513 = vpop.f32.mrf.mxu0
  %v1514 = vadd.f32 0.0, %v1513
  %v1515 = vpop.f32.mrf.mxu0
  %v1516 = vpop.f32.mrf.mxu0
  %v1517 = vadd.f32 0.0, %v1516
  %v1518 = vpop.f32.mrf.mxu0
  %1519 = vmatprep.mubr.bf16.mxu0 0
  %1520 = vmatmul.mubr.bf16.gmra.mxu0 %v1352
  %v1521 = vpop.f32.mrf.mxu0
  %v1522 = vadd.f32 0.0, %v1521
  %v1523 = vpop.f32.mrf.mxu0
  %v1524 = vpop.f32.mrf.mxu0
  %v1525 = vadd.f32 0.0, %v1524
  %v1526 = vpop.f32.mrf.mxu0
  %1527 = vmatprep.mubr.bf16.mxu0 0
  %1528 = vmatmul.mubr.bf16.gmra.mxu0 %v1360
  %v1529 = vpop.f32.mrf.mxu0
  %v1530 = vadd.f32 0.0, %v1529
  %v1531 = vpop.f32.mrf.mxu0
  %v1532 = vpop.f32.mrf.mxu0
  %v1533 = vadd.f32 0.0, %v1532
  %v1534 = vpop.f32.mrf.mxu0
  %1535 = vmatprep.mubr.bf16.mxu0 0
  %1536 = vmatmul.mubr.bf16.gmra.mxu0 %v1368
  %v1537 = vpop.f32.mrf.mxu0
  %v1538 = vadd.f32 0.0, %v1537
  %v1539 = vpop.f32.mrf.mxu0
  %v1540 = vpop.f32.mrf.mxu0
  %v1541 = vadd.f32 0.0, %v1540
  %v1542 = vpop.f32.mrf.mxu0
  %1543 = vmatprep.mubr.bf16.mxu0 0
  %1544 = vmatmul.mubr.bf16.gmra.mxu0 %v1371
  %v1545 = vpop.f32.mrf.mxu0
  %v1546 = vadd.f32 0.0, %v1545
  %v1547 = vpop.f32.mrf.mxu0
  %v1548 = vpop.f32.mrf.mxu0
  %v1549 = vpop.f32.mrf.mxu0
  %1550 = vdwg.mxu0
  %v1551 = vadd.f32 %v1174, %v1466
  %v1552 = vadd.f32 %v1175, %v1469
  %v1553 = vadd.f32 %v1176, %v1474
  %v1554 = vadd.f32 %v1177, %v1477
  %v1555 = vadd.f32 %v1178, %v1482
  %v1556 = vadd.f32 %v1179, %v1485
  %v1557 = vadd.f32 %v1180, %v1490
  %v1558 = vadd.f32 %v1181, %v1493
  %v1559 = vadd.f32 %v1182, %v1498
  %v1560 = vadd.f32 %v1183, %v1501
  %v1561 = vadd.f32 %v1184, %v1506
  %v1562 = vadd.f32 %v1185, %v1509
  %v1563 = vadd.f32 %v1186, %v1514
  %v1564 = vadd.f32 %v1187, %v1517
  %v1565 = vadd.f32 %v1188, %v1522
  %v1566 = vadd.f32 %v1189, %v1525
  %v1567 = vadd.f32 %v1190, %v1530
  %v1568 = vadd.f32 %v1191, %v1533
  %v1569 = vadd.f32 %v1192, %v1538
  %v1570 = vadd.f32 %v1193, %v1541
  %v1571 = vadd.f32 %v1194, %v1546
  %v1572 = vld [vmem:[%s0 + $0x4] sm:$0xe]
  %v1573 = vld [vmem:[%s2 + $0x140] sm:$0xf]
  %v1574 = vld [vmem:[%s2 + $0x144] sm:$0xf]
  %v1575 = vld [vmem:[%s2 + $0x148] sm:$0xf]
  %v1576 = vld [vmem:[%s2 + $0x14c] sm:$0xf]
  %v1577 = vld [vmem:[%s2 + $0x150] sm:$0xf]
  %v1578 = vld [vmem:[%s2 + $0x154] sm:$0xf]
  %v1579 = vld [vmem:[%s2 + $0x158] sm:$0xf]
  %v1580 = vld [vmem:[%s2 + $0x15c] sm:$0xf]
  %v1581 = vld [vmem:[%s2 + $0x160] sm:$0xf]
  %v1582 = vld [vmem:[%s2 + $0x164] sm:$0xf]
  %v1583 = vld [vmem:[%s2 + $0x168] sm:$0xf]
  %v1584 = vld [vmem:[%s2 + $0x16c] sm:$0xf]
  %v1585 = vld [vmem:[%s2 + $0x170] sm:$0xf]
  %v1586 = vld [vmem:[%s2 + $0x174] sm:$0xf]
  %v1587 = vld [vmem:[%s2 + $0x178] sm:$0xf]
  %v1588 = vld [vmem:[%s2 + $0x17c] sm:$0xf]
  %v1590 = vunpack.c.l.b16 %v1572
  %v1591 = vpack.c.b16 %v1254, %v1590
  %vm1592 = vcmask 1046528
  %v1593 = vrot.slane %v1591, 1
  %v1594 = vrot.slane %v1275, 1
  %v1595 = vsel %vm1592, %v1593, %v1594
  %v1596 = vrot.slane %v1276, 1
  %v1597 = vsel %vm1592, %v1594, %v1596
  %v1598 = vrot.slane %v1277, 1
  %v1599 = vsel %vm1592, %v1596, %v1598
  %v1600 = vrot.slane %v1278, 1
  %v1601 = vsel %vm1592, %v1598, %v1600
  %v1602 = vrot.slane %v1279, 1
  %v1603 = vsel %vm1592, %v1600, %v1602
  %v1604 = vrot.slane %v1280, 1
  %v1605 = vsel %vm1592, %v1602, %v1604
  %v1606 = vrot.slane %v1281, 1
  %v1607 = vsel %vm1592, %v1604, %v1606
  %v1608 = vrot.slane %v1282, 1
  %v1609 = vsel %vm1592, %v1606, %v1608
  %v1610 = vrot.slane %v1283, 1
  %v1611 = vsel %vm1592, %v1608, %v1610
  %v1612 = vrot.slane %v1284, 1
  %v1613 = vsel %vm1592, %v1610, %v1612
  %v1641 = vunpack.c.l.b16 %v1573
  %v1642 = vunpack.c.l.b16 %v1574
  %v1643 = vunpack.c.l.b16 %v1575
  %v1644 = vunpack.c.l.b16 %v1576
  %v1645 = vunpack.c.l.b16 %v1577
  %v1646 = vunpack.c.l.b16 %v1578
  %v1647 = vunpack.c.l.b16 %v1579
  %v1648 = vunpack.c.l.b16 %v1580
  %v1649 = vunpack.c.l.b16 %v1581
  %v1650 = vunpack.c.l.b16 %v1582
  %v1651 = vunpack.c.l.b16 %v1583
  %v1652 = vunpack.c.l.b16 %v1584
  %v1653 = vunpack.c.l.b16 %v1585
  %v1654 = vunpack.c.l.b16 %v1586
  %v1655 = vunpack.c.l.b16 %v1587
  %v1656 = vunpack.c.l.b16 %v1588
  %v1657 = vpack.c.b16 %v1642, %v1641
  %v1658 = vpack.c.b16 %v1644, %v1643
  %v1659 = vpack.c.b16 %v1646, %v1645
  %v1660 = vpack.c.b16 %v1648, %v1647
  %v1661 = vpack.c.b16 %v1650, %v1649
  %v1662 = vpack.c.b16 %v1652, %v1651
  %v1663 = vpack.c.b16 %v1654, %v1653
  %v1664 = vpack.c.b16 %v1656, %v1655
  %1673 = vmatprep.subr.bf16.mxu0 0
  %1674 = vmatpush1.bf16.msra.mxu0 %v1664
  %1675 = vmatprep.subr.bf16.mxu0 0
  %1676 = vmatpush1.bf16.msra.mxu0 %v1663
  %1677 = vmatprep.subr.bf16.mxu0 0
  %1678 = vmatpush1.bf16.msra.mxu0 %v1662
  %1679 = vmatprep.subr.bf16.mxu0 0
  %1680 = vmatpush1.bf16.msra.mxu0 %v1661
  %1681 = vmatprep.subr.bf16.mxu0 0
  %1682 = vmatpush1.bf16.msra.mxu0 %v1660
  %1683 = vmatprep.subr.bf16.mxu0 0
  %1684 = vmatpush1.bf16.msra.mxu0 %v1659
  %1685 = vmatprep.subr.bf16.mxu0 0
  %1686 = vmatpush1.bf16.msra.mxu0 %v1658
  %1687 = vmatprep.subr.bf16.mxu0 0
  %1688 = vmatpush1.bf16.msra.mxu0 %v1657
  %1689 = vmatprep.subr.bf16.mxu0 0
  %1690 = vmatpush2.bf16.msra.mxu0 0
  %1691 = vmatprep.subr.bf16.mxu0 0
  %1692 = vmatpush2.bf16.msra.mxu0 0
  %1693 = vmatprep.subr.bf16.mxu0 0
  %1694 = vmatpush2.bf16.msra.mxu0 0
  %1695 = vmatprep.subr.bf16.mxu0 0
  %1696 = vmatpush2.bf16.msra.mxu0 0
  %1697 = vmatprep.subr.bf16.mxu0 0
  %1698 = vmatpush2.bf16.msra.mxu0 0
  %1699 = vmatprep.subr.bf16.mxu0 0
  %1700 = vmatpush2.bf16.msra.mxu0 0
  %1701 = vmatprep.subr.bf16.mxu0 0
  %1702 = vmatpush2.bf16.msra.mxu0 0
  %1703 = vmatprep.subr.bf16.mxu0 0
  %1704 = vmatpush2.bf16.msra.mxu0 0
  %1705 = vmatprep.mubr.bf16.mxu0 0
  %1706 = vmatmul.mubr.bf16.gmra.mxu0 %v1595
  %v1707 = vpop.f32.mrf.mxu0
  %v1708 = vadd.f32 0.0, %v1707
  %v1709 = vpop.f32.mrf.mxu0
  %v1710 = vpop.f32.mrf.mxu0
  %v1711 = vadd.f32 0.0, %v1710
  %v1712 = vpop.f32.mrf.mxu0
  %1713 = vmatprep.mubr.bf16.mxu0 0
  %1714 = vmatmul.mubr.bf16.gmra.mxu0 %v1597
  %v1715 = vpop.f32.mrf.mxu0
  %v1716 = vadd.f32 0.0, %v1715
  %v1717 = vpop.f32.mrf.mxu0
  %v1718 = vpop.f32.mrf.mxu0
  %v1719 = vadd.f32 0.0, %v1718
  %v1720 = vpop.f32.mrf.mxu0
  %1721 = vmatprep.mubr.bf16.mxu0 0
  %1722 = vmatmul.mubr.bf16.gmra.mxu0 %v1599
  %v1723 = vpop.f32.mrf.mxu0
  %v1724 = vadd.f32 0.0, %v1723
  %v1725 = vpop.f32.mrf.mxu0
  %v1726 = vpop.f32.mrf.mxu0
  %v1727 = vadd.f32 0.0, %v1726
  %v1728 = vpop.f32.mrf.mxu0
  %1729 = vmatprep.mubr.bf16.mxu0 0
  %1730 = vmatmul.mubr.bf16.gmra.mxu0 %v1601
  %v1731 = vpop.f32.mrf.mxu0
  %v1732 = vadd.f32 0.0, %v1731
  %v1733 = vpop.f32.mrf.mxu0
  %v1734 = vpop.f32.mrf.mxu0
  %v1735 = vadd.f32 0.0, %v1734
  %v1736 = vpop.f32.mrf.mxu0
  %1737 = vmatprep.mubr.bf16.mxu0 0
  %1738 = vmatmul.mubr.bf16.gmra.mxu0 %v1603
  %v1739 = vpop.f32.mrf.mxu0
  %v1740 = vadd.f32 0.0, %v1739
  %v1741 = vpop.f32.mrf.mxu0
  %v1742 = vpop.f32.mrf.mxu0
  %v1743 = vadd.f32 0.0, %v1742
  %v1744 = vpop.f32.mrf.mxu0
  %1745 = vmatprep.mubr.bf16.mxu0 0
  %1746 = vmatmul.mubr.bf16.gmra.mxu0 %v1605
  %v1747 = vpop.f32.mrf.mxu0
  %v1748 = vadd.f32 0.0, %v1747
  %v1749 = vpop.f32.mrf.mxu0
  %v1750 = vpop.f32.mrf.mxu0
  %v1751 = vadd.f32 0.0, %v1750
  %v1752 = vpop.f32.mrf.mxu0
  %1753 = vmatprep.mubr.bf16.mxu0 0
  %1754 = vmatmul.mubr.bf16.gmra.mxu0 %v1607
  %v1755 = vpop.f32.mrf.mxu0
  %v1756 = vadd.f32 0.0, %v1755
  %v1757 = vpop.f32.mrf.mxu0
  %v1758 = vpop.f32.mrf.mxu0
  %v1759 = vadd.f32 0.0, %v1758
  %v1760 = vpop.f32.mrf.mxu0
  %1761 = vmatprep.mubr.bf16.mxu0 0
  %1762 = vmatmul.mubr.bf16.gmra.mxu0 %v1609
  %v1763 = vpop.f32.mrf.mxu0
  %v1764 = vadd.f32 0.0, %v1763
  %v1765 = vpop.f32.mrf.mxu0
  %v1766 = vpop.f32.mrf.mxu0
  %v1767 = vadd.f32 0.0, %v1766
  %v1768 = vpop.f32.mrf.mxu0
  %1769 = vmatprep.mubr.bf16.mxu0 0
  %1770 = vmatmul.mubr.bf16.gmra.mxu0 %v1611
  %v1771 = vpop.f32.mrf.mxu0
  %v1772 = vadd.f32 0.0, %v1771
  %v1773 = vpop.f32.mrf.mxu0
  %v1774 = vpop.f32.mrf.mxu0
  %v1775 = vadd.f32 0.0, %v1774
  %v1776 = vpop.f32.mrf.mxu0
  %1777 = vmatprep.mubr.bf16.mxu0 0
  %1778 = vmatmul.mubr.bf16.gmra.mxu0 %v1613
  %v1779 = vpop.f32.mrf.mxu0
  %v1780 = vadd.f32 0.0, %v1779
  %v1781 = vpop.f32.mrf.mxu0
  %v1782 = vpop.f32.mrf.mxu0
  %v1783 = vadd.f32 0.0, %v1782
  %v1784 = vpop.f32.mrf.mxu0
  %1785 = vmatprep.mubr.bf16.mxu0 0
  %1786 = vmatmul.mubr.bf16.gmra.mxu0 %v1612
  %v1787 = vpop.f32.mrf.mxu0
  %v1788 = vadd.f32 0.0, %v1787
  %v1789 = vpop.f32.mrf.mxu0
  %v1790 = vpop.f32.mrf.mxu0
  %v1791 = vpop.f32.mrf.mxu0
  %1792 = vdwg.mxu0
  %v1793 = vadd.f32 %v1551, %v1708
  %v1794 = vadd.f32 %v1552, %v1711
  %v1795 = vadd.f32 %v1553, %v1716
  %v1796 = vadd.f32 %v1554, %v1719
  %v1797 = vadd.f32 %v1555, %v1724
  %v1798 = vadd.f32 %v1556, %v1727
  %v1799 = vadd.f32 %v1557, %v1732
  %v1800 = vadd.f32 %v1558, %v1735
  %v1801 = vadd.f32 %v1559, %v1740
  %v1802 = vadd.f32 %v1560, %v1743
  %v1803 = vadd.f32 %v1561, %v1748
  %v1804 = vadd.f32 %v1562, %v1751
  %v1805 = vadd.f32 %v1563, %v1756
  %v1806 = vadd.f32 %v1564, %v1759
  %v1807 = vadd.f32 %v1565, %v1764
  %v1808 = vadd.f32 %v1566, %v1767
  %v1809 = vadd.f32 %v1567, %v1772
  %v1810 = vadd.f32 %v1568, %v1775
  %v1811 = vadd.f32 %v1569, %v1780
  %v1812 = vadd.f32 %v1570, %v1783
  %v1813 = vadd.f32 %v1571, %v1788
  %v1814 = vld [vmem:[%s3] sm:$0x1]
  %v1815 = vld [vmem:[%s3 + $0x1] sm:$0x1]
  %v1816 = vld [vmem:[%s3 + $0x2] sm:$0x1]
  %v1817 = vlaneseq
  %v1818 = vshrl.u32 %v1817, 7
  %v1819 = vsub.s32 0, %v1818
  %v1820 = vrot.slane %v1814, %v1819
  %v1821 = vadd.f32 %v1793, %v1820
  %v1822 = vadd.f32 %v1794, %v1820
  %v1823 = vadd.f32 %v1795, %v1820
  %v1824 = vadd.f32 %v1796, %v1820
  %v1825 = vadd.f32 %v1797, %v1820
  %v1826 = vadd.f32 %v1798, %v1820
  %v1827 = vadd.f32 %v1799, %v1820
  %v1828 = vadd.f32 %v1800, %v1820
  %v1829 = vadd.f32 %v1801, %v1820
  %v1830 = vadd.f32 %v1802, %v1820
  %v1831 = vadd.f32 %v1803, %v1820
  %v1832 = vadd.f32 %v1804, %v1820
  %v1833 = vadd.f32 %v1805, %v1820
  %v1834 = vadd.f32 %v1806, %v1820
  %v1835 = vadd.f32 %v1807, %v1820
  %v1836 = vadd.f32 %v1808, %v1820
  %v1837 = vadd.f32 %v1809, %v1820
  %v1838 = vadd.f32 %v1810, %v1820
  %v1839 = vadd.f32 %v1811, %v1820
  %v1840 = vadd.f32 %v1812, %v1820
  %v1841 = vadd.f32 %v1813, %v1820
  %v1842 = vmul.f32 %v1821, 0.2
  %v1843 = vmul.f32 %v1822, 0.2
  %v1844 = vmul.f32 %v1823, 0.2
  %v1845 = vmul.f32 %v1824, 0.2
  %v1846 = vmul.f32 %v1825, 0.2
  %v1847 = vmul.f32 %v1826, 0.2
  %v1848 = vmul.f32 %v1827, 0.2
  %v1849 = vmul.f32 %v1828, 0.2
  %v1850 = vmul.f32 %v1829, 0.2
  %v1851 = vmul.f32 %v1830, 0.2
  %v1852 = vmul.f32 %v1831, 0.2
  %v1853 = vmul.f32 %v1832, 0.2
  %v1854 = vmul.f32 %v1833, 0.2
  %v1855 = vmul.f32 %v1834, 0.2
  %v1856 = vmul.f32 %v1835, 0.2
  %v1857 = vmul.f32 %v1836, 0.2
  %v1858 = vmul.f32 %v1837, 0.2
  %v1859 = vmul.f32 %v1838, 0.2
  %v1860 = vmul.f32 %v1839, 0.2
  %v1861 = vmul.f32 %v1840, 0.2
  %v1862 = vmul.f32 %v1841, 0.2
  %v1863 = vmax.f32 %v1821, %v1842
  %v1864 = vmax.f32 %v1822, %v1843
  %v1865 = vmax.f32 %v1823, %v1844
  %v1866 = vmax.f32 %v1824, %v1845
  %v1867 = vmax.f32 %v1825, %v1846
  %v1868 = vmax.f32 %v1826, %v1847
  %v1869 = vmax.f32 %v1827, %v1848
  %v1870 = vmax.f32 %v1828, %v1849
  %v1871 = vmax.f32 %v1829, %v1850
  %v1872 = vmax.f32 %v1830, %v1851
  %v1873 = vmax.f32 %v1831, %v1852
  %v1874 = vmax.f32 %v1832, %v1853
  %v1875 = vmax.f32 %v1833, %v1854
  %v1876 = vmax.f32 %v1834, %v1855
  %v1877 = vmax.f32 %v1835, %v1856
  %v1878 = vmax.f32 %v1836, %v1857
  %v1879 = vmax.f32 %v1837, %v1858
  %v1880 = vmax.f32 %v1838, %v1859
  %v1881 = vmax.f32 %v1839, %v1860
  %v1882 = vmax.f32 %v1840, %v1861
  %v1883 = vmax.f32 %v1841, %v1862
  %v1884 = vlaneseq
  %v1885 = vshrl.u32 %v1884, 7
  %v1886 = vsub.s32 0, %v1885
  %v1887 = vrot.slane %v1815, %v1886
  %v1888 = vmul.f32 %v1863, %v1887
  %v1889 = vmul.f32 %v1864, %v1887
  %v1890 = vmul.f32 %v1865, %v1887
  %v1891 = vmul.f32 %v1866, %v1887
  %v1892 = vmul.f32 %v1867, %v1887
  %v1893 = vmul.f32 %v1868, %v1887
  %v1894 = vmul.f32 %v1869, %v1887
  %v1895 = vmul.f32 %v1870, %v1887
  %v1896 = vmul.f32 %v1871, %v1887
  %v1897 = vmul.f32 %v1872, %v1887
  %v1898 = vmul.f32 %v1873, %v1887
  %v1899 = vmul.f32 %v1874, %v1887
  %v1900 = vmul.f32 %v1875, %v1887
  %v1901 = vmul.f32 %v1876, %v1887
  %v1902 = vmul.f32 %v1877, %v1887
  %v1903 = vmul.f32 %v1878, %v1887
  %v1904 = vmul.f32 %v1879, %v1887
  %v1905 = vmul.f32 %v1880, %v1887
  %v1906 = vmul.f32 %v1881, %v1887
  %v1907 = vmul.f32 %v1882, %v1887
  %v1908 = vmul.f32 %v1883, %v1887
  %v1909 = vlaneseq
  %v1910 = vshrl.u32 %v1909, 7
  %v1911 = vsub.s32 0, %v1910
  %v1912 = vrot.slane %v1816, %v1911
  %v1913 = vadd.f32 %v1888, %v1912
  %v1914 = vadd.f32 %v1889, %v1912
  %v1915 = vadd.f32 %v1890, %v1912
  %v1916 = vadd.f32 %v1891, %v1912
  %v1917 = vadd.f32 %v1892, %v1912
  %v1918 = vadd.f32 %v1893, %v1912
  %v1919 = vadd.f32 %v1894, %v1912
  %v1920 = vadd.f32 %v1895, %v1912
  %v1921 = vadd.f32 %v1896, %v1912
  %v1922 = vadd.f32 %v1897, %v1912
  %v1923 = vadd.f32 %v1898, %v1912
  %v1924 = vadd.f32 %v1899, %v1912
  %v1925 = vadd.f32 %v1900, %v1912
  %v1926 = vadd.f32 %v1901, %v1912
  %v1927 = vadd.f32 %v1902, %v1912
  %v1928 = vadd.f32 %v1903, %v1912
  %v1929 = vadd.f32 %v1904, %v1912
  %v1930 = vadd.f32 %v1905, %v1912
  %v1931 = vadd.f32 %v1906, %v1912
  %v1932 = vadd.f32 %v1907, %v1912
  %v1933 = vadd.f32 %v1908, %v1912
  %1934 = vst [vmem:[#allocation2] sm:$0xff] %v1913
  %1935 = vst [vmem:[#allocation2 + $0x8] sm:$0xff] %v1914
  %1936 = vst [vmem:[#allocation2 + $0x10] sm:$0xff] %v1915
  %1937 = vst [vmem:[#allocation2 + $0x18] sm:$0xff] %v1916
  %1938 = vst [vmem:[#allocation2 + $0x20] sm:$0xff] %v1917
  %1939 = vst [vmem:[#allocation2 + $0x28] sm:$0xff] %v1918
  %1940 = vst [vmem:[#allocation2 + $0x30] sm:$0xff] %v1919
  %1941 = vst [vmem:[#allocation2 + $0x38] sm:$0xff] %v1920
  %1942 = vst [vmem:[#allocation2 + $0x40] sm:$0xff] %v1921
  %1943 = vst [vmem:[#allocation2 + $0x48] sm:$0xff] %v1922
  %1944 = vst [vmem:[#allocation2 + $0x50] sm:$0xff] %v1923
  %1945 = vst [vmem:[#allocation2 + $0x58] sm:$0xff] %v1924
  %1946 = vst [vmem:[#allocation2 + $0x60] sm:$0xff] %v1925
  %1947 = vst [vmem:[#allocation2 + $0x68] sm:$0xff] %v1926
  %1948 = vst [vmem:[#allocation2 + $0x70] sm:$0xff] %v1927
  %1949 = vst [vmem:[#allocation2 + $0x78] sm:$0xff] %v1928
  %1950 = vst [vmem:[#allocation2 + $0x80] sm:$0xff] %v1929
  %1951 = vst [vmem:[#allocation2 + $0x88] sm:$0xff] %v1930
  %1952 = vst [vmem:[#allocation2 + $0x90] sm:$0xff] %v1931
  %1953 = vst [vmem:[#allocation2 + $0x98] sm:$0xff] %v1932
  %1954 = vst [vmem:[#allocation2 + $0xa0] sm:$0x3] %v1933
  %1955 = vst [vmem:[#allocation5] sm:$0xff] 0.0
  %1956 = vst [vmem:[#allocation5 + $0x8] sm:$0xff] 0.0
  %1957 = vst [vmem:[#allocation5 + $0x10] sm:$0xff] 0.0
  %1958 = vst [vmem:[#allocation5 + $0x18] sm:$0xff] 0.0
  %1959 = vst [vmem:[#allocation5 + $0x20] sm:$0xff] 0.0
  %1960 = vst [vmem:[#allocation5 + $0x28] sm:$0xff] 0.0
  %1961 = vst [vmem:[#allocation5 + $0x30] sm:$0xff] 0.0
  %1962 = vst [vmem:[#allocation5 + $0x38] sm:$0xff] 0.0
  %1963 = vst [vmem:[#allocation5 + $0x40] sm:$0x3] 0.0
  %1964 = vst [vmem:[#allocation6] sm:$0xff] 0.0
  %1965 = vst [vmem:[#allocation6 + $0x8] sm:$0xff] 0.0
  %1966 = vst [vmem:[#allocation6 + $0x10] sm:$0xff] 0.0
  %1967 = vst [vmem:[#allocation6 + $0x18] sm:$0xff] 0.0
  %1968 = vst [vmem:[#allocation6 + $0x20] sm:$0xff] 0.0
  %1969 = vst [vmem:[#allocation6 + $0x28] sm:$0xff] 0.0
  %1970 = vst [vmem:[#allocation6 + $0x30] sm:$0xff] 0.0
  %1971 = vst [vmem:[#allocation6 + $0x38] sm:$0xff] 0.0
  %1972 = vst [vmem:[#allocation6 + $0x40] sm:$0x3] 0.0
  %v1973 = vld [vmem:[#allocation2] ss:$2 sm:$0xf]
  %1975 = vrot.lane.b32.xlu0 %v1973, 64
  %v1976 = vpop.permute.xlu0 %1975
  %vm1978 = vcmask 1043968
  %1979 = vst.msk [vmem:[#allocation6] sm:$0xf] %vm1978, %v1976
  %s1980 = scalar_lea.vmem [#allocation2], 18
  %v1981 = vld [vmem:[%s1980] ss:$2 sm:$0xf]
  %1983 = vrot.lane.b32.xlu0 %v1981, 64
  %v1984 = vpop.permute.xlu0 %1983
  %1986 = vst.msk [vmem:[#allocation6 + $0x5] sm:$0xf] %vm1978, %v1984
  %s1987 = scalar_lea.vmem [#allocation2], 36
  %v1988 = vld [vmem:[%s1987] ss:$2 sm:$0xf]
  %1990 = vrot.lane.b32.xlu0 %v1988, 64
  %v1991 = vpop.permute.xlu0 %1990
  %1993 = vst.msk [vmem:[#allocation6 + $0xa] sm:$0xf] %vm1978, %v1991
  %s1994 = scalar_lea.vmem [#allocation2], 54
  %v1995 = vld [vmem:[%s1994] ss:$2 sm:$0xf]
  %1997 = vrot.lane.b32.xlu0 %v1995, 64
  %v1998 = vpop.permute.xlu0 %1997
  %2000 = vst.msk [vmem:[#allocation6 + $0xf] sm:$0xf] %vm1978, %v1998
  %s2001 = scalar_lea.vmem [#allocation2], 1
  %v2002 = vld [vmem:[%s2001] ss:$2 sm:$0xf]
  %vm2003 = vcmask 519168
  %2004 = vst.msk [vmem:[#allocation6 + $0x1] sm:$0xf] %vm2003, %v2002
  %s2005 = scalar_lea.vmem [#allocation2], 19
  %v2006 = vld [vmem:[%s2005] ss:$2 sm:$0xf]
  %2007 = vst.msk [vmem:[#allocation6 + $0x6] sm:$0xf] %vm2003, %v2006
  %s2008 = scalar_lea.vmem [#allocation2], 37
  %v2009 = vld [vmem:[%s2008] ss:$2 sm:$0xf]
  %2010 = vst.msk [vmem:[#allocation6 + $0xb] sm:$0xf] %vm2003, %v2009
  %s2011 = scalar_lea.vmem [#allocation2], 55
  %v2012 = vld [vmem:[%s2011] ss:$2 sm:$0xf]
  %2013 = vst.msk [vmem:[#allocation6 + $0x10] sm:$0xf] %vm2003, %v2012
  %s2014 = scalar_lea.vmem [#allocation2], 9
  %v2015 = vld [vmem:[%s2014] ss:$2 sm:$0xf]
  %2017 = vrot.lane.b32.xlu0 %v2015, 64
  %v2018 = vpop.permute.xlu0 %2017
  %2020 = vst.msk [vmem:[#allocation5 + $0x5] sm:$0xf] %vm1978, %v2018
  %s2021 = scalar_lea.vmem [#allocation2], 27
  %v2022 = vld [vmem:[%s2021] ss:$2 sm:$0xf]
  %2024 = vrot.lane.b32.xlu0 %v2022, 64
  %v2025 = vpop.permute.xlu0 %2024
  %2027 = vst.msk [vmem:[#allocation5 + $0xa] sm:$0xf] %vm1978, %v2025
  %s2028 = scalar_lea.vmem [#allocation2], 45
  %v2029 = vld [vmem:[%s2028] ss:$2 sm:$0xf]
  %2031 = vrot.lane.b32.xlu0 %v2029, 64
  %v2032 = vpop.permute.xlu0 %2031
  %2034 = vst.msk [vmem:[#allocation5 + $0xf] sm:$0xf] %vm1978, %v2032
  %s2035 = scalar_lea.vmem [#allocation2], 63
  %v2036 = vld [vmem:[%s2035] ss:$2 sm:$0xf]
  %2038 = vrot.lane.b32.xlu0 %v2036, 64
  %v2039 = vpop.permute.xlu0 %2038
  %2041 = vst.msk [vmem:[#allocation5 + $0x14] sm:$0xf] %vm1978, %v2039
  %s2042 = scalar_lea.vmem [#allocation2], 10
  %v2043 = vld [vmem:[%s2042] ss:$2 sm:$0xf]
  %2044 = vst.msk [vmem:[#allocation5 + $0x6] sm:$0xf] %vm2003, %v2043
  %s2045 = scalar_lea.vmem [#allocation2], 28
  %v2046 = vld [vmem:[%s2045] ss:$2 sm:$0xf]
  %2047 = vst.msk [vmem:[#allocation5 + $0xb] sm:$0xf] %vm2003, %v2046
  %s2048 = scalar_lea.vmem [#allocation2], 46
  %v2049 = vld [vmem:[%s2048] ss:$2 sm:$0xf]
  %2050 = vst.msk [vmem:[#allocation5 + $0x10] sm:$0xf] %vm2003, %v2049
  %s2051 = scalar_lea.vmem [#allocation2], 64
  %v2052 = vld [vmem:[%s2051] ss:$2 sm:$0xf]
  %2053 = vst.msk [vmem:[#allocation5 + $0x15] sm:$0xf] %vm2003, %v2052
  %s2054 = scalar_lea.vmem [#allocation2], 81
  %v2055 = vld [vmem:[%s2054] ss:$2 sm:$0xf]
  %2057 = vrot.lane.b32.xlu0 %v2055, 64
  %v2058 = vpop.permute.xlu0 %2057
  %2060 = vst.msk [vmem:[#allocation6 + $0x19] sm:$0xf] %vm1978, %v2058
  %s2061 = scalar_lea.vmem [#allocation2], 99
  %v2062 = vld [vmem:[%s2061] ss:$2 sm:$0xf]
  %2064 = vrot.lane.b32.xlu0 %v2062, 64
  %v2065 = vpop.permute.xlu0 %2064
  %2067 = vst.msk [vmem:[#allocation6 + $0x1e] sm:$0xf] %vm1978, %v2065
  %s2068 = scalar_lea.vmem [#allocation2], 117
  %v2069 = vld [vmem:[%s2068] ss:$2 sm:$0xf]
  %2071 = vrot.lane.b32.xlu0 %v2069, 64
  %v2072 = vpop.permute.xlu0 %2071
  %2074 = vst.msk [vmem:[#allocation6 + $0x23] sm:$0xf] %vm1978, %v2072
  %s2075 = scalar_lea.vmem [#allocation2], 135
  %v2076 = vld [vmem:[%s2075] ss:$2 sm:$0xf]
  %2078 = vrot.lane.b32.xlu0 %v2076, 64
  %v2079 = vpop.permute.xlu0 %2078
  %2081 = vst.msk [vmem:[#allocation6 + $0x28] sm:$0xf] %vm1978, %v2079
  %s2082 = scalar_lea.vmem [#allocation2], 82
  %v2083 = vld [vmem:[%s2082] ss:$2 sm:$0xf]
  %2084 = vst.msk [vmem:[#allocation6 + $0x1a] sm:$0xf] %vm2003, %v2083
  %s2085 = scalar_lea.vmem [#allocation2], 100
  %v2086 = vld [vmem:[%s2085] ss:$2 sm:$0xf]
  %2087 = vst.msk [vmem:[#allocation6 + $0x1f] sm:$0xf] %vm2003, %v2086
  %s2088 = scalar_lea.vmem [#allocation2], 118
  %v2089 = vld [vmem:[%s2088] ss:$2 sm:$0xf]
  %2090 = vst.msk [vmem:[#allocation6 + $0x24] sm:$0xf] %vm2003, %v2089
  %s2091 = scalar_lea.vmem [#allocation2], 136
  %v2092 = vld [vmem:[%s2091] ss:$2 sm:$0xf]
  %2093 = vst.msk [vmem:[#allocation6 + $0x29] sm:$0xf] %vm2003, %v2092
  %s2094 = scalar_lea.vmem [#allocation2], 90
  %v2095 = vld [vmem:[%s2094] ss:$2 sm:$0xf]
  %2097 = vrot.lane.b32.xlu0 %v2095, 64
  %v2098 = vpop.permute.xlu0 %2097
  %2100 = vst.msk [vmem:[#allocation5 + $0x1e] sm:$0xf] %vm1978, %v2098
  %s2101 = scalar_lea.vmem [#allocation2], 108
  %v2102 = vld [vmem:[%s2101] ss:$2 sm:$0xf]
  %2104 = vrot.lane.b32.xlu0 %v2102, 64
  %v2105 = vpop.permute.xlu0 %2104
  %2107 = vst.msk [vmem:[#allocation5 + $0x23] sm:$0xf] %vm1978, %v2105
  %s2108 = scalar_lea.vmem [#allocation2], 126
  %v2109 = vld [vmem:[%s2108] ss:$2 sm:$0xf]
  %2111 = vrot.lane.b32.xlu0 %v2109, 64
  %v2112 = vpop.permute.xlu0 %2111
  %2114 = vst.msk [vmem:[#allocation5 + $0x28] sm:$0xf] %vm1978, %v2112
  %s2115 = scalar_lea.vmem [#allocation2], 144
  %v2116 = vld [vmem:[%s2115] ss:$2 sm:$0xf]
  %2118 = vrot.lane.b32.xlu0 %v2116, 64
  %v2119 = vpop.permute.xlu0 %2118
  %2121 = vst.msk [vmem:[#allocation5 + $0x2d] sm:$0xf] %vm1978, %v2119
  %s2122 = scalar_lea.vmem [#allocation2], 91
  %v2123 = vld [vmem:[%s2122] ss:$2 sm:$0xf]
  %2124 = vst.msk [vmem:[#allocation5 + $0x1f] sm:$0xf] %vm2003, %v2123
  %s2125 = scalar_lea.vmem [#allocation2], 109
  %v2126 = vld [vmem:[%s2125] ss:$2 sm:$0xf]
  %2127 = vst.msk [vmem:[#allocation5 + $0x24] sm:$0xf] %vm2003, %v2126
  %s2128 = scalar_lea.vmem [#allocation2], 127
  %v2129 = vld [vmem:[%s2128] ss:$2 sm:$0xf]
  %2130 = vst.msk [vmem:[#allocation5 + $0x29] sm:$0xf] %vm2003, %v2129
  %s2131 = scalar_lea.vmem [#allocation2], 145
  %v2132 = vld [vmem:[%s2131] ss:$2 sm:$0xf]
  %2133 = vst.msk [vmem:[#allocation5 + $0x2e] sm:$0xf] %vm2003, %v2132
  %v2134 = vld [vmem:[#allocation5] sm:$0xff]
  %v2135 = vld [vmem:[#allocation5 + $0x8] sm:$0xff]
  %v2136 = vld [vmem:[#allocation5 + $0x10] sm:$0xff]
  %v2137 = vld [vmem:[#allocation5 + $0x18] sm:$0xff]
  %v2138 = vld [vmem:[#allocation5 + $0x20] sm:$0xff]
  %v2139 = vld [vmem:[#allocation5 + $0x28] sm:$0xff]
  %v2140 = vld [vmem:[#allocation5 + $0x30] sm:$0x3]
  %v2141 = vpack.c.bf16 %v2135, %v2134
  %v2142 = vpack.c.bf16 %v2137, %v2136
  %v2143 = vpack.c.bf16 %v2139, %v2138
  %v2144 = vpack.c.bf16 %v2140, %v2140
  %v2145 = vld [vmem:[%s4] sm:$0xf]
  %v2146 = vld [vmem:[%s4 + $0x4] sm:$0xf]
  %v2147 = vld [vmem:[%s4 + $0x8] sm:$0xf]
  %v2148 = vld [vmem:[%s4 + $0xc] sm:$0xf]
  %v2149 = vld [vmem:[%s4 + $0x10] sm:$0xf]
  %v2150 = vld [vmem:[%s4 + $0x14] sm:$0xf]
  %v2151 = vld [vmem:[%s4 + $0x18] sm:$0xf]
  %v2152 = vld [vmem:[%s4 + $0x1c] sm:$0xf]
  %v2153 = vld [vmem:[%s4 + $0x20] sm:$0xf]
  %v2154 = vld [vmem:[%s4 + $0x24] sm:$0xf]
  %v2155 = vld [vmem:[%s4 + $0x28] sm:$0xf]
  %v2156 = vld [vmem:[%s4 + $0x2c] sm:$0xf]
  %v2157 = vld [vmem:[%s4 + $0x30] sm:$0xf]
  %v2158 = vld [vmem:[%s4 + $0x34] sm:$0xf]
  %v2159 = vld [vmem:[%s4 + $0x38] sm:$0xf]
  %v2160 = vld [vmem:[%s4 + $0x3c] sm:$0xf]
  %v2161 = vld [vmem:[#allocation5 + $0x1] sm:$0xff]
  %v2162 = vld [vmem:[#allocation5 + $0x9] sm:$0xff]
  %v2163 = vld [vmem:[#allocation5 + $0x11] sm:$0xff]
  %v2164 = vld [vmem:[#allocation5 + $0x19] sm:$0xff]
  %v2165 = vld [vmem:[#allocation5 + $0x21] sm:$0xff]
  %v2166 = vld [vmem:[#allocation5 + $0x29] sm:$0xff]
  %v2167 = vld [vmem:[#allocation5 + $0x31] sm:$0x3]
  %v2168 = vpack.c.bf16 %v2162, %v2161
  %v2169 = vpack.c.bf16 %v2164, %v2163
  %v2170 = vpack.c.bf16 %v2166, %v2165
  %v2171 = vpack.c.bf16 %v2167, %v2167
  %v2172 = vld [vmem:[%s4 + $0x40] sm:$0xf]
  %v2173 = vld [vmem:[%s4 + $0x44] sm:$0xf]
  %v2174 = vld [vmem:[%s4 + $0x48] sm:$0xf]
  %v2175 = vld [vmem:[%s4 + $0x4c] sm:$0xf]
  %v2176 = vld [vmem:[%s4 + $0x50] sm:$0xf]
  %v2177 = vld [vmem:[%s4 + $0x54] sm:$0xf]
  %v2178 = vld [vmem:[%s4 + $0x58] sm:$0xf]
  %v2179 = vld [vmem:[%s4 + $0x5c] sm:$0xf]
  %v2180 = vld [vmem:[%s4 + $0x60] sm:$0xf]
  %v2181 = vld [vmem:[%s4 + $0x64] sm:$0xf]
  %v2182 = vld [vmem:[%s4 + $0x68] sm:$0xf]
  %v2183 = vld [vmem:[%s4 + $0x6c] sm:$0xf]
  %v2184 = vld [vmem:[%s4 + $0x70] sm:$0xf]
  %v2185 = vld [vmem:[%s4 + $0x74] sm:$0xf]
  %v2186 = vld [vmem:[%s4 + $0x78] sm:$0xf]
  %v2187 = vld [vmem:[%s4 + $0x7c] sm:$0xf]
  %v2204 = vunpack.c.l.b16 %v2172
  %v2205 = vunpack.c.l.b16 %v2173
  %v2206 = vunpack.c.l.b16 %v2174
  %v2207 = vunpack.c.l.b16 %v2175
  %v2208 = vunpack.c.l.b16 %v2176
  %v2209 = vunpack.c.l.b16 %v2177
  %v2210 = vunpack.c.l.b16 %v2178
  %v2211 = vunpack.c.l.b16 %v2179
  %v2212 = vunpack.c.l.b16 %v2180
  %v2213 = vunpack.c.l.b16 %v2181
  %v2214 = vunpack.c.l.b16 %v2182
  %v2215 = vunpack.c.l.b16 %v2183
  %v2216 = vunpack.c.l.b16 %v2184
  %v2217 = vunpack.c.l.b16 %v2185
  %v2218 = vunpack.c.l.b16 %v2186
  %v2219 = vunpack.c.l.b16 %v2187
  %v2220 = vpack.c.b16 %v2205, %v2204
  %v2221 = vpack.c.b16 %v2207, %v2206
  %v2222 = vpack.c.b16 %v2209, %v2208
  %v2223 = vpack.c.b16 %v2211, %v2210
  %v2224 = vpack.c.b16 %v2213, %v2212
  %v2225 = vpack.c.b16 %v2215, %v2214
  %v2226 = vpack.c.b16 %v2217, %v2216
  %v2227 = vpack.c.b16 %v2219, %v2218
  %2236 = vmatprep.subr.bf16.mxu0 0
  %2237 = vmatpush1.bf16.msra.mxu0 %v2227
  %2238 = vmatprep.subr.bf16.mxu0 0
  %2239 = vmatpush1.bf16.msra.mxu0 %v2226
  %2240 = vmatprep.subr.bf16.mxu0 0
  %2241 = vmatpush1.bf16.msra.mxu0 %v2225
  %2242 = vmatprep.subr.bf16.mxu0 0
  %2243 = vmatpush1.bf16.msra.mxu0 %v2224
  %2244 = vmatprep.subr.bf16.mxu0 0
  %2245 = vmatpush1.bf16.msra.mxu0 %v2223
  %2246 = vmatprep.subr.bf16.mxu0 0
  %2247 = vmatpush1.bf16.msra.mxu0 %v2222
  %2248 = vmatprep.subr.bf16.mxu0 0
  %2249 = vmatpush1.bf16.msra.mxu0 %v2221
  %2250 = vmatprep.subr.bf16.mxu0 0
  %2251 = vmatpush1.bf16.msra.mxu0 %v2220
  %2252 = vmatprep.subr.bf16.mxu0 0
  %2253 = vmatpush2.bf16.msra.mxu0 0
  %2254 = vmatprep.subr.bf16.mxu0 0
  %2255 = vmatpush2.bf16.msra.mxu0 0
  %2256 = vmatprep.subr.bf16.mxu0 0
  %2257 = vmatpush2.bf16.msra.mxu0 0
  %2258 = vmatprep.subr.bf16.mxu0 0
  %2259 = vmatpush2.bf16.msra.mxu0 0
  %2260 = vmatprep.subr.bf16.mxu0 0
  %2261 = vmatpush2.bf16.msra.mxu0 0
  %2262 = vmatprep.subr.bf16.mxu0 0
  %2263 = vmatpush2.bf16.msra.mxu0 0
  %2264 = vmatprep.subr.bf16.mxu0 0
  %2265 = vmatpush2.bf16.msra.mxu0 0
  %2266 = vmatprep.subr.bf16.mxu0 0
  %2267 = vmatpush2.bf16.msra.mxu0 0
  %2268 = vmatprep.mubr.bf16.mxu0 0
  %2269 = vmatmul.mubr.bf16.gmra.mxu0 %v2168
  %v2270 = vpop.f32.mrf.mxu0
  %v2271 = vadd.f32 0.0, %v2270
  %v2272 = vpop.f32.mrf.mxu0
  %v2273 = vpop.f32.mrf.mxu0
  %v2274 = vadd.f32 0.0, %v2273
  %v2275 = vpop.f32.mrf.mxu0
  %2276 = vmatprep.mubr.bf16.mxu0 0
  %2277 = vmatmul.mubr.bf16.gmra.mxu0 %v2169
  %v2278 = vpop.f32.mrf.mxu0
  %v2279 = vadd.f32 0.0, %v2278
  %v2280 = vpop.f32.mrf.mxu0
  %v2281 = vpop.f32.mrf.mxu0
  %v2282 = vadd.f32 0.0, %v2281
  %v2283 = vpop.f32.mrf.mxu0
  %2284 = vmatprep.mubr.bf16.mxu0 0
  %2285 = vmatmul.mubr.bf16.gmra.mxu0 %v2170
  %v2286 = vpop.f32.mrf.mxu0
  %v2287 = vadd.f32 0.0, %v2286
  %v2288 = vpop.f32.mrf.mxu0
  %v2289 = vpop.f32.mrf.mxu0
  %v2290 = vadd.f32 0.0, %v2289
  %v2291 = vpop.f32.mrf.mxu0
  %2292 = vmatprep.mubr.bf16.mxu0 0
  %2293 = vmatmul.mubr.bf16.gmra.mxu0 %v2171
  %v2294 = vpop.f32.mrf.mxu0
  %v2295 = vadd.f32 0.0, %v2294
  %v2296 = vpop.f32.mrf.mxu0
  %v2297 = vpop.f32.mrf.mxu0
  %v2298 = vpop.f32.mrf.mxu0
  %2299 = vdwg.mxu0
  %v2316 = vunpack.c.l.b16 %v2145
  %v2317 = vunpack.c.l.b16 %v2146
  %v2318 = vunpack.c.l.b16 %v2147
  %v2319 = vunpack.c.l.b16 %v2148
  %v2320 = vunpack.c.l.b16 %v2149
  %v2321 = vunpack.c.l.b16 %v2150
  %v2322 = vunpack.c.l.b16 %v2151
  %v2323 = vunpack.c.l.b16 %v2152
  %v2324 = vunpack.c.l.b16 %v2153
  %v2325 = vunpack.c.l.b16 %v2154
  %v2326 = vunpack.c.l.b16 %v2155
  %v2327 = vunpack.c.l.b16 %v2156
  %v2328 = vunpack.c.l.b16 %v2157
  %v2329 = vunpack.c.l.b16 %v2158
  %v2330 = vunpack.c.l.b16 %v2159
  %v2331 = vunpack.c.l.b16 %v2160
  %v2332 = vpack.c.b16 %v2317, %v2316
  %v2333 = vpack.c.b16 %v2319, %v2318
  %v2334 = vpack.c.b16 %v2321, %v2320
  %v2335 = vpack.c.b16 %v2323, %v2322
  %v2336 = vpack.c.b16 %v2325, %v2324
  %v2337 = vpack.c.b16 %v2327, %v2326
  %v2338 = vpack.c.b16 %v2329, %v2328
  %v2339 = vpack.c.b16 %v2331, %v2330
  %2348 = vmatprep.subr.bf16.mxu0 0
  %2349 = vmatpush1.bf16.msra.mxu0 %v2339
  %2350 = vmatprep.subr.bf16.mxu0 0
  %2351 = vmatpush1.bf16.msra.mxu0 %v2338
  %2352 = vmatprep.subr.bf16.mxu0 0
  %2353 = vmatpush1.bf16.msra.mxu0 %v2337
  %2354 = vmatprep.subr.bf16.mxu0 0
  %2355 = vmatpush1.bf16.msra.mxu0 %v2336
  %2356 = vmatprep.subr.bf16.mxu0 0
  %2357 = vmatpush1.bf16.msra.mxu0 %v2335
  %2358 = vmatprep.subr.bf16.mxu0 0
  %2359 = vmatpush1.bf16.msra.mxu0 %v2334
  %2360 = vmatprep.subr.bf16.mxu0 0
  %2361 = vmatpush1.bf16.msra.mxu0 %v2333
  %2362 = vmatprep.subr.bf16.mxu0 0
  %2363 = vmatpush1.bf16.msra.mxu0 %v2332
  %2364 = vmatprep.subr.bf16.mxu0 0
  %2365 = vmatpush2.bf16.msra.mxu0 0
  %2366 = vmatprep.subr.bf16.mxu0 0
  %2367 = vmatpush2.bf16.msra.mxu0 0
  %2368 = vmatprep.subr.bf16.mxu0 0
  %2369 = vmatpush2.bf16.msra.mxu0 0
  %2370 = vmatprep.subr.bf16.mxu0 0
  %2371 = vmatpush2.bf16.msra.mxu0 0
  %2372 = vmatprep.subr.bf16.mxu0 0
  %2373 = vmatpush2.bf16.msra.mxu0 0
  %2374 = vmatprep.subr.bf16.mxu0 0
  %2375 = vmatpush2.bf16.msra.mxu0 0
  %2376 = vmatprep.subr.bf16.mxu0 0
  %2377 = vmatpush2.bf16.msra.mxu0 0
  %2378 = vmatprep.subr.bf16.mxu0 0
  %2379 = vmatpush2.bf16.msra.mxu0 0
  %2380 = vmatprep.mubr.bf16.mxu0 0
  %2381 = vmatmul.mubr.bf16.gmra.mxu0 %v2141
  %v2382 = vpop.f32.mrf.mxu0
  %v2383 = vadd.f32 %v2271, %v2382
  %v2384 = vpop.f32.mrf.mxu0
  %v2385 = vpop.f32.mrf.mxu0
  %v2386 = vadd.f32 %v2274, %v2385
  %v2387 = vpop.f32.mrf.mxu0
  %2388 = vmatprep.mubr.bf16.mxu0 0
  %2389 = vmatmul.mubr.bf16.gmra.mxu0 %v2142
  %v2390 = vpop.f32.mrf.mxu0
  %v2391 = vadd.f32 %v2279, %v2390
  %v2392 = vpop.f32.mrf.mxu0
  %v2393 = vpop.f32.mrf.mxu0
  %v2394 = vadd.f32 %v2282, %v2393
  %v2395 = vpop.f32.mrf.mxu0
  %2396 = vmatprep.mubr.bf16.mxu0 0
  %2397 = vmatmul.mubr.bf16.gmra.mxu0 %v2143
  %v2398 = vpop.f32.mrf.mxu0
  %v2399 = vadd.f32 %v2287, %v2398
  %v2400 = vpop.f32.mrf.mxu0
  %v2401 = vpop.f32.mrf.mxu0
  %v2402 = vadd.f32 %v2290, %v2401
  %v2403 = vpop.f32.mrf.mxu0
  %2404 = vmatprep.mubr.bf16.mxu0 0
  %2405 = vmatmul.mubr.bf16.gmra.mxu0 %v2144
  %v2406 = vpop.f32.mrf.mxu0
  %v2407 = vadd.f32 %v2295, %v2406
  %v2408 = vpop.f32.mrf.mxu0
  %v2409 = vpop.f32.mrf.mxu0
  %v2410 = vpop.f32.mrf.mxu0
  %2411 = vdwg.mxu0
  %v2412 = vld [vmem:[#allocation6] sm:$0xff]
  %v2413 = vld [vmem:[#allocation6 + $0x8] sm:$0xff]
  %v2414 = vld [vmem:[#allocation6 + $0x10] sm:$0xff]
  %v2415 = vld [vmem:[#allocation6 + $0x18] sm:$0xff]
  %v2416 = vld [vmem:[#allocation6 + $0x20] sm:$0xff]
  %v2417 = vld [vmem:[#allocation6 + $0x28] sm:$0xff]
  %v2418 = vld [vmem:[#allocation6 + $0x30] sm:$0x3]
  %v2419 = vpack.c.bf16 %v2413, %v2412
  %v2420 = vpack.c.bf16 %v2415, %v2414
  %v2421 = vpack.c.bf16 %v2417, %v2416
  %v2422 = vpack.c.bf16 %v2418, %v2418
  %v2423 = vld [vmem:[%s4 + $0x80] sm:$0xf]
  %v2424 = vld [vmem:[%s4 + $0x84] sm:$0xf]
  %v2425 = vld [vmem:[%s4 + $0x88] sm:$0xf]
  %v2426 = vld [vmem:[%s4 + $0x8c] sm:$0xf]
  %v2427 = vld [vmem:[%s4 + $0x90] sm:$0xf]
  %v2428 = vld [vmem:[%s4 + $0x94] sm:$0xf]
  %v2429 = vld [vmem:[%s4 + $0x98] sm:$0xf]
  %v2430 = vld [vmem:[%s4 + $0x9c] sm:$0xf]
  %v2431 = vld [vmem:[%s4 + $0xa0] sm:$0xf]
  %v2432 = vld [vmem:[%s4 + $0xa4] sm:$0xf]
  %v2433 = vld [vmem:[%s4 + $0xa8] sm:$0xf]
  %v2434 = vld [vmem:[%s4 + $0xac] sm:$0xf]
  %v2435 = vld [vmem:[%s4 + $0xb0] sm:$0xf]
  %v2436 = vld [vmem:[%s4 + $0xb4] sm:$0xf]
  %v2437 = vld [vmem:[%s4 + $0xb8] sm:$0xf]
  %v2438 = vld [vmem:[%s4 + $0xbc] sm:$0xf]
  %v2455 = vunpack.c.l.b16 %v2423
  %v2456 = vunpack.c.l.b16 %v2424
  %v2457 = vunpack.c.l.b16 %v2425
  %v2458 = vunpack.c.l.b16 %v2426
  %v2459 = vunpack.c.l.b16 %v2427
  %v2460 = vunpack.c.l.b16 %v2428
  %v2461 = vunpack.c.l.b16 %v2429
  %v2462 = vunpack.c.l.b16 %v2430
  %v2463 = vunpack.c.l.b16 %v2431
  %v2464 = vunpack.c.l.b16 %v2432
  %v2465 = vunpack.c.l.b16 %v2433
  %v2466 = vunpack.c.l.b16 %v2434
  %v2467 = vunpack.c.l.b16 %v2435
  %v2468 = vunpack.c.l.b16 %v2436
  %v2469 = vunpack.c.l.b16 %v2437
  %v2470 = vunpack.c.l.b16 %v2438
  %v2471 = vpack.c.b16 %v2456, %v2455
  %v2472 = vpack.c.b16 %v2458, %v2457
  %v2473 = vpack.c.b16 %v2460, %v2459
  %v2474 = vpack.c.b16 %v2462, %v2461
  %v2475 = vpack.c.b16 %v2464, %v2463
  %v2476 = vpack.c.b16 %v2466, %v2465
  %v2477 = vpack.c.b16 %v2468, %v2467
  %v2478 = vpack.c.b16 %v2470, %v2469
  %2487 = vmatprep.subr.bf16.mxu0 0
  %2488 = vmatpush1.bf16.msra.mxu0 %v2478
  %2489 = vmatprep.subr.bf16.mxu0 0
  %2490 = vmatpush1.bf16.msra.mxu0 %v2477
  %2491 = vmatprep.subr.bf16.mxu0 0
  %2492 = vmatpush1.bf16.msra.mxu0 %v2476
  %2493 = vmatprep.subr.bf16.mxu0 0
  %2494 = vmatpush1.bf16.msra.mxu0 %v2475
  %2495 = vmatprep.subr.bf16.mxu0 0
  %2496 = vmatpush1.bf16.msra.mxu0 %v2474
  %2497 = vmatprep.subr.bf16.mxu0 0
  %2498 = vmatpush1.bf16.msra.mxu0 %v2473
  %2499 = vmatprep.subr.bf16.mxu0 0
  %2500 = vmatpush1.bf16.msra.mxu0 %v2472
  %2501 = vmatprep.subr.bf16.mxu0 0
  %2502 = vmatpush1.bf16.msra.mxu0 %v2471
  %2503 = vmatprep.subr.bf16.mxu0 0
  %2504 = vmatpush2.bf16.msra.mxu0 0
  %2505 = vmatprep.subr.bf16.mxu0 0
  %2506 = vmatpush2.bf16.msra.mxu0 0
  %2507 = vmatprep.subr.bf16.mxu0 0
  %2508 = vmatpush2.bf16.msra.mxu0 0
  %2509 = vmatprep.subr.bf16.mxu0 0
  %2510 = vmatpush2.bf16.msra.mxu0 0
  %2511 = vmatprep.subr.bf16.mxu0 0
  %2512 = vmatpush2.bf16.msra.mxu0 0
  %2513 = vmatprep.subr.bf16.mxu0 0
  %2514 = vmatpush2.bf16.msra.mxu0 0
  %2515 = vmatprep.subr.bf16.mxu0 0
  %2516 = vmatpush2.bf16.msra.mxu0 0
  %2517 = vmatprep.subr.bf16.mxu0 0
  %2518 = vmatpush2.bf16.msra.mxu0 0
  %2519 = vmatprep.mubr.bf16.mxu0 0
  %2520 = vmatmul.mubr.bf16.gmra.mxu0 %v2419
  %v2521 = vpop.f32.mrf.mxu0
  %v2522 = vadd.f32 0.0, %v2521
  %v2523 = vpop.f32.mrf.mxu0
  %v2524 = vpop.f32.mrf.mxu0
  %v2525 = vadd.f32 0.0, %v2524
  %v2526 = vpop.f32.mrf.mxu0
  %2527 = vmatprep.mubr.bf16.mxu0 0
  %2528 = vmatmul.mubr.bf16.gmra.mxu0 %v2420
  %v2529 = vpop.f32.mrf.mxu0
  %v2530 = vadd.f32 0.0, %v2529
  %v2531 = vpop.f32.mrf.mxu0
  %v2532 = vpop.f32.mrf.mxu0
  %v2533 = vadd.f32 0.0, %v2532
  %v2534 = vpop.f32.mrf.mxu0
  %2535 = vmatprep.mubr.bf16.mxu0 0
  %2536 = vmatmul.mubr.bf16.gmra.mxu0 %v2421
  %v2537 = vpop.f32.mrf.mxu0
  %v2538 = vadd.f32 0.0, %v2537
  %v2539 = vpop.f32.mrf.mxu0
  %v2540 = vpop.f32.mrf.mxu0
  %v2541 = vadd.f32 0.0, %v2540
  %v2542 = vpop.f32.mrf.mxu0
  %2543 = vmatprep.mubr.bf16.mxu0 0
  %2544 = vmatmul.mubr.bf16.gmra.mxu0 %v2422
  %v2545 = vpop.f32.mrf.mxu0
  %v2546 = vadd.f32 0.0, %v2545
  %v2547 = vpop.f32.mrf.mxu0
  %v2548 = vpop.f32.mrf.mxu0
  %v2549 = vpop.f32.mrf.mxu0
  %2550 = vdwg.mxu0
  %v2551 = vadd.f32 %v2383, %v2522
  %v2552 = vadd.f32 %v2386, %v2525
  %v2553 = vadd.f32 %v2391, %v2530
  %v2554 = vadd.f32 %v2394, %v2533
  %v2555 = vadd.f32 %v2399, %v2538
  %v2556 = vadd.f32 %v2402, %v2541
  %v2557 = vadd.f32 %v2407, %v2546
  %v2558 = vld [vmem:[#allocation6 + $0x1] sm:$0xff]
  %v2559 = vld [vmem:[#allocation6 + $0x9] sm:$0xff]
  %v2560 = vld [vmem:[#allocation6 + $0x11] sm:$0xff]
  %v2561 = vld [vmem:[#allocation6 + $0x19] sm:$0xff]
  %v2562 = vld [vmem:[#allocation6 + $0x21] sm:$0xff]
  %v2563 = vld [vmem:[#allocation6 + $0x29] sm:$0xff]
  %v2564 = vld [vmem:[#allocation6 + $0x31] sm:$0x3]
  %v2565 = vpack.c.bf16 %v2559, %v2558
  %v2566 = vpack.c.bf16 %v2561, %v2560
  %v2567 = vpack.c.bf16 %v2563, %v2562
  %v2568 = vpack.c.bf16 %v2564, %v2564
  %v2569 = vld [vmem:[%s4 + $0xc0] sm:$0xf]
  %v2570 = vld [vmem:[%s4 + $0xc4] sm:$0xf]
  %v2571 = vld [vmem:[%s4 + $0xc8] sm:$0xf]
  %v2572 = vld [vmem:[%s4 + $0xcc] sm:$0xf]
  %v2573 = vld [vmem:[%s4 + $0xd0] sm:$0xf]
  %v2574 = vld [vmem:[%s4 + $0xd4] sm:$0xf]
  %v2575 = vld [vmem:[%s4 + $0xd8] sm:$0xf]
  %v2576 = vld [vmem:[%s4 + $0xdc] sm:$0xf]
  %v2577 = vld [vmem:[%s4 + $0xe0] sm:$0xf]
  %v2578 = vld [vmem:[%s4 + $0xe4] sm:$0xf]
  %v2579 = vld [vmem:[%s4 + $0xe8] sm:$0xf]
  %v2580 = vld [vmem:[%s4 + $0xec] sm:$0xf]
  %v2581 = vld [vmem:[%s4 + $0xf0] sm:$0xf]
  %v2582 = vld [vmem:[%s4 + $0xf4] sm:$0xf]
  %v2583 = vld [vmem:[%s4 + $0xf8] sm:$0xf]
  %v2584 = vld [vmem:[%s4 + $0xfc] sm:$0xf]
  %v2601 = vunpack.c.l.b16 %v2569
  %v2602 = vunpack.c.l.b16 %v2570
  %v2603 = vunpack.c.l.b16 %v2571
  %v2604 = vunpack.c.l.b16 %v2572
  %v2605 = vunpack.c.l.b16 %v2573
  %v2606 = vunpack.c.l.b16 %v2574
  %v2607 = vunpack.c.l.b16 %v2575
  %v2608 = vunpack.c.l.b16 %v2576
  %v2609 = vunpack.c.l.b16 %v2577
  %v2610 = vunpack.c.l.b16 %v2578
  %v2611 = vunpack.c.l.b16 %v2579
  %v2612 = vunpack.c.l.b16 %v2580
  %v2613 = vunpack.c.l.b16 %v2581
  %v2614 = vunpack.c.l.b16 %v2582
  %v2615 = vunpack.c.l.b16 %v2583
  %v2616 = vunpack.c.l.b16 %v2584
  %v2617 = vpack.c.b16 %v2602, %v2601
  %v2618 = vpack.c.b16 %v2604, %v2603
  %v2619 = vpack.c.b16 %v2606, %v2605
  %v2620 = vpack.c.b16 %v2608, %v2607
  %v2621 = vpack.c.b16 %v2610, %v2609
  %v2622 = vpack.c.b16 %v2612, %v2611
  %v2623 = vpack.c.b16 %v2614, %v2613
  %v2624 = vpack.c.b16 %v2616, %v2615
  %2633 = vmatprep.subr.bf16.mxu0 0
  %2634 = vmatpush1.bf16.msra.mxu0 %v2624
  %2635 = vmatprep.subr.bf16.mxu0 0
  %2636 = vmatpush1.bf16.msra.mxu0 %v2623
  %2637 = vmatprep.subr.bf16.mxu0 0
  %2638 = vmatpush1.bf16.msra.mxu0 %v2622
  %2639 = vmatprep.subr.bf16.mxu0 0
  %2640 = vmatpush1.bf16.msra.mxu0 %v2621
  %2641 = vmatprep.subr.bf16.mxu0 0
  %2642 = vmatpush1.bf16.msra.mxu0 %v2620
  %2643 = vmatprep.subr.bf16.mxu0 0
  %2644 = vmatpush1.bf16.msra.mxu0 %v2619
  %2645 = vmatprep.subr.bf16.mxu0 0
  %2646 = vmatpush1.bf16.msra.mxu0 %v2618
  %2647 = vmatprep.subr.bf16.mxu0 0
  %2648 = vmatpush1.bf16.msra.mxu0 %v2617
  %2649 = vmatprep.subr.bf16.mxu0 0
  %2650 = vmatpush2.bf16.msra.mxu0 0
  %2651 = vmatprep.subr.bf16.mxu0 0
  %2652 = vmatpush2.bf16.msra.mxu0 0
  %2653 = vmatprep.subr.bf16.mxu0 0
  %2654 = vmatpush2.bf16.msra.mxu0 0
  %2655 = vmatprep.subr.bf16.mxu0 0
  %2656 = vmatpush2.bf16.msra.mxu0 0
  %2657 = vmatprep.subr.bf16.mxu0 0
  %2658 = vmatpush2.bf16.msra.mxu0 0
  %2659 = vmatprep.subr.bf16.mxu0 0
  %2660 = vmatpush2.bf16.msra.mxu0 0
  %2661 = vmatprep.subr.bf16.mxu0 0
  %2662 = vmatpush2.bf16.msra.mxu0 0
  %2663 = vmatprep.subr.bf16.mxu0 0
  %2664 = vmatpush2.bf16.msra.mxu0 0
  %2665 = vmatprep.mubr.bf16.mxu0 0
  %2666 = vmatmul.mubr.bf16.gmra.mxu0 %v2565
  %v2667 = vpop.f32.mrf.mxu0
  %v2668 = vadd.f32 0.0, %v2667
  %v2669 = vpop.f32.mrf.mxu0
  %v2670 = vpop.f32.mrf.mxu0
  %v2671 = vadd.f32 0.0, %v2670
  %v2672 = vpop.f32.mrf.mxu0
  %2673 = vmatprep.mubr.bf16.mxu0 0
  %2674 = vmatmul.mubr.bf16.gmra.mxu0 %v2566
  %v2675 = vpop.f32.mrf.mxu0
  %v2676 = vadd.f32 0.0, %v2675
  %v2677 = vpop.f32.mrf.mxu0
  %v2678 = vpop.f32.mrf.mxu0
  %v2679 = vadd.f32 0.0, %v2678
  %v2680 = vpop.f32.mrf.mxu0
  %2681 = vmatprep.mubr.bf16.mxu0 0
  %2682 = vmatmul.mubr.bf16.gmra.mxu0 %v2567
  %v2683 = vpop.f32.mrf.mxu0
  %v2684 = vadd.f32 0.0, %v2683
  %v2685 = vpop.f32.mrf.mxu0
  %v2686 = vpop.f32.mrf.mxu0
  %v2687 = vadd.f32 0.0, %v2686
  %v2688 = vpop.f32.mrf.mxu0
  %2689 = vmatprep.mubr.bf16.mxu0 0
  %2690 = vmatmul.mubr.bf16.gmra.mxu0 %v2568
  %v2691 = vpop.f32.mrf.mxu0
  %v2692 = vadd.f32 0.0, %v2691
  %v2693 = vpop.f32.mrf.mxu0
  %v2694 = vpop.f32.mrf.mxu0
  %v2695 = vpop.f32.mrf.mxu0
  %2696 = vdwg.mxu0
  %v2697 = vadd.f32 %v2551, %v2668
  %v2698 = vadd.f32 %v2552, %v2671
  %v2699 = vadd.f32 %v2553, %v2676
  %v2700 = vadd.f32 %v2554, %v2679
  %v2701 = vadd.f32 %v2555, %v2684
  %v2702 = vadd.f32 %v2556, %v2687
  %v2703 = vadd.f32 %v2557, %v2692
  %v2704 = vld [vmem:[#allocation5 + $0x5] sm:$0xff]
  %v2705 = vld [vmem:[#allocation5 + $0xd] sm:$0xff]
  %v2706 = vld [vmem:[#allocation5 + $0x15] sm:$0xff]
  %v2707 = vld [vmem:[#allocation5 + $0x1d] sm:$0xff]
  %v2708 = vld [vmem:[#allocation5 + $0x25] sm:$0xff]
  %v2709 = vld [vmem:[#allocation5 + $0x2d] sm:$0xff]
  %v2710 = vld [vmem:[#allocation5 + $0x35] sm:$0x3]
  %v2711 = vpack.c.bf16 %v2705, %v2704
  %v2712 = vpack.c.bf16 %v2707, %v2706
  %v2713 = vpack.c.bf16 %v2709, %v2708
  %v2714 = vpack.c.bf16 %v2710, %v2710
  %v2715 = vld [vmem:[%s4 + $0x100] sm:$0xf]
  %v2716 = vld [vmem:[%s4 + $0x104] sm:$0xf]
  %v2717 = vld [vmem:[%s4 + $0x108] sm:$0xf]
  %v2718 = vld [vmem:[%s4 + $0x10c] sm:$0xf]
  %v2719 = vld [vmem:[%s4 + $0x110] sm:$0xf]
  %v2720 = vld [vmem:[%s4 + $0x114] sm:$0xf]
  %v2721 = vld [vmem:[%s4 + $0x118] sm:$0xf]
  %v2722 = vld [vmem:[%s4 + $0x11c] sm:$0xf]
  %v2723 = vld [vmem:[%s4 + $0x120] sm:$0xf]
  %v2724 = vld [vmem:[%s4 + $0x124] sm:$0xf]
  %v2725 = vld [vmem:[%s4 + $0x128] sm:$0xf]
  %v2726 = vld [vmem:[%s4 + $0x12c] sm:$0xf]
  %v2727 = vld [vmem:[%s4 + $0x130] sm:$0xf]
  %v2728 = vld [vmem:[%s4 + $0x134] sm:$0xf]
  %v2729 = vld [vmem:[%s4 + $0x138] sm:$0xf]
  %v2730 = vld [vmem:[%s4 + $0x13c] sm:$0xf]
  %v2747 = vunpack.c.l.b16 %v2715
  %v2748 = vunpack.c.l.b16 %v2716
  %v2749 = vunpack.c.l.b16 %v2717
  %v2750 = vunpack.c.l.b16 %v2718
  %v2751 = vunpack.c.l.b16 %v2719
  %v2752 = vunpack.c.l.b16 %v2720
  %v2753 = vunpack.c.l.b16 %v2721
  %v2754 = vunpack.c.l.b16 %v2722
  %v2755 = vunpack.c.l.b16 %v2723
  %v2756 = vunpack.c.l.b16 %v2724
  %v2757 = vunpack.c.l.b16 %v2725
  %v2758 = vunpack.c.l.b16 %v2726
  %v2759 = vunpack.c.l.b16 %v2727
  %v2760 = vunpack.c.l.b16 %v2728
  %v2761 = vunpack.c.l.b16 %v2729
  %v2762 = vunpack.c.l.b16 %v2730
  %v2763 = vpack.c.b16 %v2748, %v2747
  %v2764 = vpack.c.b16 %v2750, %v2749
  %v2765 = vpack.c.b16 %v2752, %v2751
  %v2766 = vpack.c.b16 %v2754, %v2753
  %v2767 = vpack.c.b16 %v2756, %v2755
  %v2768 = vpack.c.b16 %v2758, %v2757
  %v2769 = vpack.c.b16 %v2760, %v2759
  %v2770 = vpack.c.b16 %v2762, %v2761
  %2779 = vmatprep.subr.bf16.mxu0 0
  %2780 = vmatpush1.bf16.msra.mxu0 %v2770
  %2781 = vmatprep.subr.bf16.mxu0 0
  %2782 = vmatpush1.bf16.msra.mxu0 %v2769
  %2783 = vmatprep.subr.bf16.mxu0 0
  %2784 = vmatpush1.bf16.msra.mxu0 %v2768
  %2785 = vmatprep.subr.bf16.mxu0 0
  %2786 = vmatpush1.bf16.msra.mxu0 %v2767
  %2787 = vmatprep.subr.bf16.mxu0 0
  %2788 = vmatpush1.bf16.msra.mxu0 %v2766
  %2789 = vmatprep.subr.bf16.mxu0 0
  %2790 = vmatpush1.bf16.msra.mxu0 %v2765
  %2791 = vmatprep.subr.bf16.mxu0 0
  %2792 = vmatpush1.bf16.msra.mxu0 %v2764
  %2793 = vmatprep.subr.bf16.mxu0 0
  %2794 = vmatpush1.bf16.msra.mxu0 %v2763
  %2795 = vmatprep.subr.bf16.mxu0 0
  %2796 = vmatpush2.bf16.msra.mxu0 0
  %2797 = vmatprep.subr.bf16.mxu0 0
  %2798 = vmatpush2.bf16.msra.mxu0 0
  %2799 = vmatprep.subr.bf16.mxu0 0
  %2800 = vmatpush2.bf16.msra.mxu0 0
  %2801 = vmatprep.subr.bf16.mxu0 0
  %2802 = vmatpush2.bf16.msra.mxu0 0
  %2803 = vmatprep.subr.bf16.mxu0 0
  %2804 = vmatpush2.bf16.msra.mxu0 0
  %2805 = vmatprep.subr.bf16.mxu0 0
  %2806 = vmatpush2.bf16.msra.mxu0 0
  %2807 = vmatprep.subr.bf16.mxu0 0
  %2808 = vmatpush2.bf16.msra.mxu0 0
  %2809 = vmatprep.subr.bf16.mxu0 0
  %2810 = vmatpush2.bf16.msra.mxu0 0
  %2811 = vmatprep.mubr.bf16.mxu0 0
  %2812 = vmatmul.mubr.bf16.gmra.mxu0 %v2711
  %v2813 = vpop.f32.mrf.mxu0
  %v2814 = vadd.f32 0.0, %v2813
  %v2815 = vpop.f32.mrf.mxu0
  %v2816 = vpop.f32.mrf.mxu0
  %v2817 = vadd.f32 0.0, %v2816
  %v2818 = vpop.f32.mrf.mxu0
  %2819 = vmatprep.mubr.bf16.mxu0 0
  %2820 = vmatmul.mubr.bf16.gmra.mxu0 %v2712
  %v2821 = vpop.f32.mrf.mxu0
  %v2822 = vadd.f32 0.0, %v2821
  %v2823 = vpop.f32.mrf.mxu0
  %v2824 = vpop.f32.mrf.mxu0
  %v2825 = vadd.f32 0.0, %v2824
  %v2826 = vpop.f32.mrf.mxu0
  %2827 = vmatprep.mubr.bf16.mxu0 0
  %2828 = vmatmul.mubr.bf16.gmra.mxu0 %v2713
  %v2829 = vpop.f32.mrf.mxu0
  %v2830 = vadd.f32 0.0, %v2829
  %v2831 = vpop.f32.mrf.mxu0
  %v2832 = vpop.f32.mrf.mxu0
  %v2833 = vadd.f32 0.0, %v2832
  %v2834 = vpop.f32.mrf.mxu0
  %2835 = vmatprep.mubr.bf16.mxu0 0
  %2836 = vmatmul.mubr.bf16.gmra.mxu0 %v2714
  %v2837 = vpop.f32.mrf.mxu0
  %v2838 = vadd.f32 0.0, %v2837
  %v2839 = vpop.f32.mrf.mxu0
  %v2840 = vpop.f32.mrf.mxu0
  %v2841 = vpop.f32.mrf.mxu0
  %2842 = vdwg.mxu0
  %v2843 = vadd.f32 %v2697, %v2814
  %v2844 = vadd.f32 %v2698, %v2817
  %v2845 = vadd.f32 %v2699, %v2822
  %v2846 = vadd.f32 %v2700, %v2825
  %v2847 = vadd.f32 %v2701, %v2830
  %v2848 = vadd.f32 %v2702, %v2833
  %v2849 = vadd.f32 %v2703, %v2838
  %v2850 = vld [vmem:[#allocation5 + $0x6] sm:$0xff]
  %v2851 = vld [vmem:[#allocation5 + $0xe] sm:$0xff]
  %v2852 = vld [vmem:[#allocation5 + $0x16] sm:$0xff]
  %v2853 = vld [vmem:[#allocation5 + $0x1e] sm:$0xff]
  %v2854 = vld [vmem:[#allocation5 + $0x26] sm:$0xff]
  %v2855 = vld [vmem:[#allocation5 + $0x2e] sm:$0xff]
  %v2856 = vld [vmem:[#allocation5 + $0x36] sm:$0x3]
  %v2857 = vpack.c.bf16 %v2851, %v2850
  %v2858 = vpack.c.bf16 %v2853, %v2852
  %v2859 = vpack.c.bf16 %v2855, %v2854
  %v2860 = vpack.c.bf16 %v2856, %v2856
  %v2861 = vld [vmem:[%s4 + $0x140] sm:$0xf]
  %v2862 = vld [vmem:[%s4 + $0x144] sm:$0xf]
  %v2863 = vld [vmem:[%s4 + $0x148] sm:$0xf]
  %v2864 = vld [vmem:[%s4 + $0x14c] sm:$0xf]
  %v2865 = vld [vmem:[%s4 + $0x150] sm:$0xf]
  %v2866 = vld [vmem:[%s4 + $0x154] sm:$0xf]
  %v2867 = vld [vmem:[%s4 + $0x158] sm:$0xf]
  %v2868 = vld [vmem:[%s4 + $0x15c] sm:$0xf]
  %v2869 = vld [vmem:[%s4 + $0x160] sm:$0xf]
  %v2870 = vld [vmem:[%s4 + $0x164] sm:$0xf]
  %v2871 = vld [vmem:[%s4 + $0x168] sm:$0xf]
  %v2872 = vld [vmem:[%s4 + $0x16c] sm:$0xf]
  %v2873 = vld [vmem:[%s4 + $0x170] sm:$0xf]
  %v2874 = vld [vmem:[%s4 + $0x174] sm:$0xf]
  %v2875 = vld [vmem:[%s4 + $0x178] sm:$0xf]
  %v2876 = vld [vmem:[%s4 + $0x17c] sm:$0xf]
  %v2893 = vunpack.c.l.b16 %v2861
  %v2894 = vunpack.c.l.b16 %v2862
  %v2895 = vunpack.c.l.b16 %v2863
  %v2896 = vunpack.c.l.b16 %v2864
  %v2897 = vunpack.c.l.b16 %v2865
  %v2898 = vunpack.c.l.b16 %v2866
  %v2899 = vunpack.c.l.b16 %v2867
  %v2900 = vunpack.c.l.b16 %v2868
  %v2901 = vunpack.c.l.b16 %v2869
  %v2902 = vunpack.c.l.b16 %v2870
  %v2903 = vunpack.c.l.b16 %v2871
  %v2904 = vunpack.c.l.b16 %v2872
  %v2905 = vunpack.c.l.b16 %v2873
  %v2906 = vunpack.c.l.b16 %v2874
  %v2907 = vunpack.c.l.b16 %v2875
  %v2908 = vunpack.c.l.b16 %v2876
  %v2909 = vpack.c.b16 %v2894, %v2893
  %v2910 = vpack.c.b16 %v2896, %v2895
  %v2911 = vpack.c.b16 %v2898, %v2897
  %v2912 = vpack.c.b16 %v2900, %v2899
  %v2913 = vpack.c.b16 %v2902, %v2901
  %v2914 = vpack.c.b16 %v2904, %v2903
  %v2915 = vpack.c.b16 %v2906, %v2905
  %v2916 = vpack.c.b16 %v2908, %v2907
  %2925 = vmatprep.subr.bf16.mxu0 0
  %2926 = vmatpush1.bf16.msra.mxu0 %v2916
  %2927 = vmatprep.subr.bf16.mxu0 0
  %2928 = vmatpush1.bf16.msra.mxu0 %v2915
  %2929 = vmatprep.subr.bf16.mxu0 0
  %2930 = vmatpush1.bf16.msra.mxu0 %v2914
  %2931 = vmatprep.subr.bf16.mxu0 0
  %2932 = vmatpush1.bf16.msra.mxu0 %v2913
  %2933 = vmatprep.subr.bf16.mxu0 0
  %2934 = vmatpush1.bf16.msra.mxu0 %v2912
  %2935 = vmatprep.subr.bf16.mxu0 0
  %2936 = vmatpush1.bf16.msra.mxu0 %v2911
  %2937 = vmatprep.subr.bf16.mxu0 0
  %2938 = vmatpush1.bf16.msra.mxu0 %v2910
  %2939 = vmatprep.subr.bf16.mxu0 0
  %2940 = vmatpush1.bf16.msra.mxu0 %v2909
  %2941 = vmatprep.subr.bf16.mxu0 0
  %2942 = vmatpush2.bf16.msra.mxu0 0
  %2943 = vmatprep.subr.bf16.mxu0 0
  %2944 = vmatpush2.bf16.msra.mxu0 0
  %2945 = vmatprep.subr.bf16.mxu0 0
  %2946 = vmatpush2.bf16.msra.mxu0 0
  %2947 = vmatprep.subr.bf16.mxu0 0
  %2948 = vmatpush2.bf16.msra.mxu0 0
  %2949 = vmatprep.subr.bf16.mxu0 0
  %2950 = vmatpush2.bf16.msra.mxu0 0
  %2951 = vmatprep.subr.bf16.mxu0 0
  %2952 = vmatpush2.bf16.msra.mxu0 0
  %2953 = vmatprep.subr.bf16.mxu0 0
  %2954 = vmatpush2.bf16.msra.mxu0 0
  %2955 = vmatprep.subr.bf16.mxu0 0
  %2956 = vmatpush2.bf16.msra.mxu0 0
  %2957 = vmatprep.mubr.bf16.mxu0 0
  %2958 = vmatmul.mubr.bf16.gmra.mxu0 %v2857
  %v2959 = vpop.f32.mrf.mxu0
  %v2960 = vadd.f32 0.0, %v2959
  %v2961 = vpop.f32.mrf.mxu0
  %v2962 = vpop.f32.mrf.mxu0
  %v2963 = vadd.f32 0.0, %v2962
  %v2964 = vpop.f32.mrf.mxu0
  %2965 = vmatprep.mubr.bf16.mxu0 0
  %2966 = vmatmul.mubr.bf16.gmra.mxu0 %v2858
  %v2967 = vpop.f32.mrf.mxu0
  %v2968 = vadd.f32 0.0, %v2967
  %v2969 = vpop.f32.mrf.mxu0
  %v2970 = vpop.f32.mrf.mxu0
  %v2971 = vadd.f32 0.0, %v2970
  %v2972 = vpop.f32.mrf.mxu0
  %2973 = vmatprep.mubr.bf16.mxu0 0
  %2974 = vmatmul.mubr.bf16.gmra.mxu0 %v2859
  %v2975 = vpop.f32.mrf.mxu0
  %v2976 = vadd.f32 0.0, %v2975
  %v2977 = vpop.f32.mrf.mxu0
  %v2978 = vpop.f32.mrf.mxu0
  %v2979 = vadd.f32 0.0, %v2978
  %v2980 = vpop.f32.mrf.mxu0
  %2981 = vmatprep.mubr.bf16.mxu0 0
  %2982 = vmatmul.mubr.bf16.gmra.mxu0 %v2860
  %v2983 = vpop.f32.mrf.mxu0
  %v2984 = vadd.f32 0.0, %v2983
  %v2985 = vpop.f32.mrf.mxu0
  %v2986 = vpop.f32.mrf.mxu0
  %v2987 = vpop.f32.mrf.mxu0
  %2988 = vdwg.mxu0
  %v2989 = vadd.f32 %v2843, %v2960
  %v2990 = vadd.f32 %v2844, %v2963
  %v2991 = vadd.f32 %v2845, %v2968
  %v2992 = vadd.f32 %v2846, %v2971
  %v2993 = vadd.f32 %v2847, %v2976
  %v2994 = vadd.f32 %v2848, %v2979
  %v2995 = vadd.f32 %v2849, %v2984
  %v2996 = vld [vmem:[%s5] sm:$0x1]
  %v2997 = vld [vmem:[%s5 + $0x1] sm:$0x1]
  %v2998 = vld [vmem:[%s5 + $0x2] sm:$0x1]
  %v2999 = vlaneseq
  %v3000 = vshrl.u32 %v2999, 7
  %v3001 = vsub.s32 0, %v3000
  %v3002 = vrot.slane %v2996, %v3001
  %v3003 = vadd.f32 %v2989, %v3002
  %v3004 = vadd.f32 %v2990, %v3002
  %v3005 = vadd.f32 %v2991, %v3002
  %v3006 = vadd.f32 %v2992, %v3002
  %v3007 = vadd.f32 %v2993, %v3002
  %v3008 = vadd.f32 %v2994, %v3002
  %v3009 = vadd.f32 %v2995, %v3002
  %v3010 = vmul.f32 %v3003, 0.2
  %v3011 = vmul.f32 %v3004, 0.2
  %v3012 = vmul.f32 %v3005, 0.2
  %v3013 = vmul.f32 %v3006, 0.2
  %v3014 = vmul.f32 %v3007, 0.2
  %v3015 = vmul.f32 %v3008, 0.2
  %v3016 = vmul.f32 %v3009, 0.2
  %v3017 = vmax.f32 %v3003, %v3010
  %v3018 = vmax.f32 %v3004, %v3011
  %v3019 = vmax.f32 %v3005, %v3012
  %v3020 = vmax.f32 %v3006, %v3013
  %v3021 = vmax.f32 %v3007, %v3014
  %v3022 = vmax.f32 %v3008, %v3015
  %v3023 = vmax.f32 %v3009, %v3016
  %v3024 = vlaneseq
  %v3025 = vshrl.u32 %v3024, 7
  %v3026 = vsub.s32 0, %v3025
  %v3027 = vrot.slane %v2997, %v3026
  %v3028 = vmul.f32 %v3017, %v3027
  %v3029 = vmul.f32 %v3018, %v3027
  %v3030 = vmul.f32 %v3019, %v3027
  %v3031 = vmul.f32 %v3020, %v3027
  %v3032 = vmul.f32 %v3021, %v3027
  %v3033 = vmul.f32 %v3022, %v3027
  %v3034 = vmul.f32 %v3023, %v3027
  %v3035 = vlaneseq
  %v3036 = vshrl.u32 %v3035, 7
  %v3037 = vsub.s32 0, %v3036
  %v3038 = vrot.slane %v2998, %v3037
  %v3039 = vadd.f32 %v3028, %v3038
  %v3040 = vadd.f32 %v3029, %v3038
  %v3041 = vadd.f32 %v3030, %v3038
  %v3042 = vadd.f32 %v3031, %v3038
  %v3043 = vadd.f32 %v3032, %v3038
  %v3044 = vadd.f32 %v3033, %v3038
  %v3045 = vadd.f32 %v3034, %v3038
  %3046 = vst [vmem:[#allocation3] sm:$0xff] %v3039
  %3047 = vst [vmem:[#allocation3 + $0x8] sm:$0xff] %v3040
  %3048 = vst [vmem:[#allocation3 + $0x10] sm:$0xff] %v3041
  %3049 = vst [vmem:[#allocation3 + $0x18] sm:$0xff] %v3042
  %3050 = vst [vmem:[#allocation3 + $0x20] sm:$0xff] %v3043
  %3051 = vst [vmem:[#allocation3 + $0x28] sm:$0xff] %v3044
  %3052 = vst [vmem:[#allocation3 + $0x30] sm:$0x3] %v3045
  %3053 = vst [vmem:[#allocation7] sm:$0xff] 0.0
  %3054 = vst [vmem:[#allocation7 + $0x8] sm:$0xff] 0.0
  %3055 = vst [vmem:[#allocation7 + $0x10] sm:$0xff] 0.0
  %3056 = vst [vmem:[#allocation7 + $0x18] sm:$0xff] 0.0
  %3057 = vst [vmem:[#allocation7 + $0x20] sm:$0x3] 0.0
  %3058 = vst [vmem:[#allocation8] sm:$0xff] 0.0
  %3059 = vst [vmem:[#allocation8 + $0x8] sm:$0xff] 0.0
  %3060 = vst [vmem:[#allocation8 + $0x10] sm:$0xff] 0.0
  %3061 = vst [vmem:[#allocation8 + $0x18] sm:$0xff] 0.0
  %3062 = vst [vmem:[#allocation8 + $0x20] sm:$0x3] 0.0
  %v3063 = vld [vmem:[#allocation3] ss:$2 sm:$0x3]
  %3065 = vrot.lane.b32.xlu0 %v3063, 64
  %v3066 = vpop.permute.xlu0 %3065
  %vm3068 = vcmask 1041920
  %3069 = vst.msk [vmem:[#allocation8] sm:$0x3] %vm3068, %v3066
  %s3070 = scalar_lea.vmem [#allocation3], 10
  %v3071 = vld [vmem:[%s3070] ss:$2 sm:$0x3]
  %3073 = vrot.lane.b32.xlu0 %v3071, 64
  %v3074 = vpop.permute.xlu0 %3073
  %3076 = vst.msk [vmem:[#allocation8 + $0x3] sm:$0x3] %vm3068, %v3074
  %s3077 = scalar_lea.vmem [#allocation3], 1
  %v3078 = vld [vmem:[%s3077] ss:$2 sm:$0x3]
  %vm3079 = vcmask 517120
  %3080 = vst.msk [vmem:[#allocation8 + $0x1] sm:$0x3] %vm3079, %v3078
  %s3081 = scalar_lea.vmem [#allocation3], 11
  %v3082 = vld [vmem:[%s3081] ss:$2 sm:$0x3]
  %3083 = vst.msk [vmem:[#allocation8 + $0x4] sm:$0x3] %vm3079, %v3082
  %s3084 = scalar_lea.vmem [#allocation3], 5
  %v3085 = vld [vmem:[%s3084] ss:$2 sm:$0x3]
  %3087 = vrot.lane.b32.xlu0 %v3085, 64
  %v3088 = vpop.permute.xlu0 %3087
  %3090 = vst.msk [vmem:[#allocation7 + $0x3] sm:$0x3] %vm3068, %v3088
  %s3091 = scalar_lea.vmem [#allocation3], 15
  %v3092 = vld [vmem:[%s3091] ss:$2 sm:$0x3]
  %3094 = vrot.lane.b32.xlu0 %v3092, 64
  %v3095 = vpop.permute.xlu0 %3094
  %3097 = vst.msk [vmem:[#allocation7 + $0x6] sm:$0x3] %vm3068, %v3095
  %s3098 = scalar_lea.vmem [#allocation3], 6
  %v3099 = vld [vmem:[%s3098] ss:$2 sm:$0x3]
  %3100 = vst.msk [vmem:[#allocation7 + $0x4] sm:$0x3] %vm3079, %v3099
  %s3101 = scalar_lea.vmem [#allocation3], 16
  %v3102 = vld [vmem:[%s3101] ss:$2 sm:$0x3]
  %3103 = vst.msk [vmem:[#allocation7 + $0x7] sm:$0x3] %vm3079, %v3102
  %s3104 = scalar_lea.vmem [#allocation3], 25
  %v3105 = vld [vmem:[%s3104] ss:$2 sm:$0x3]
  %3107 = vrot.lane.b32.xlu0 %v3105, 64
  %v3108 = vpop.permute.xlu0 %3107
  %3110 = vst.msk [vmem:[#allocation8 + $0x9] sm:$0x3] %vm3068, %v3108
  %s3111 = scalar_lea.vmem [#allocation3], 35
  %v3112 = vld [vmem:[%s3111] ss:$2 sm:$0x3]
  %3114 = vrot.lane.b32.xlu0 %v3112, 64
  %v3115 = vpop.permute.xlu0 %3114
  %3117 = vst.msk [vmem:[#allocation8 + $0xc] sm:$0x3] %vm3068, %v3115
  %s3118 = scalar_lea.vmem [#allocation3], 26
  %v3119 = vld [vmem:[%s3118] ss:$2 sm:$0x3]
  %3120 = vst.msk [vmem:[#allocation8 + $0xa] sm:$0x3] %vm3079, %v3119
  %s3121 = scalar_lea.vmem [#allocation3], 36
  %v3122 = vld [vmem:[%s3121] ss:$2 sm:$0x3]
  %3123 = vst.msk [vmem:[#allocation8 + $0xd] sm:$0x3] %vm3079, %v3122
  %s3124 = scalar_lea.vmem [#allocation3], 30
  %v3125 = vld [vmem:[%s3124] ss:$2 sm:$0x3]
  %3127 = vrot.lane.b32.xlu0 %v3125, 64
  %v3128 = vpop.permute.xlu0 %3127
  %3130 = vst.msk [vmem:[#allocation7 + $0xc] sm:$0x3] %vm3068, %v3128
  %s3131 = scalar_lea.vmem [#allocation3], 40
  %v3132 = vld [vmem:[%s3131] ss:$2 sm:$0x3]
  %3134 = vrot.lane.b32.xlu0 %v3132, 64
  %v3135 = vpop.permute.xlu0 %3134
  %3137 = vst.msk [vmem:[#allocation7 + $0xf] sm:$0x3] %vm3068, %v3135
  %s3138 = scalar_lea.vmem [#allocation3], 31
  %v3139 = vld [vmem:[%s3138] ss:$2 sm:$0x3]
  %3140 = vst.msk [vmem:[#allocation7 + $0xd] sm:$0x3] %vm3079, %v3139
  %s3141 = scalar_lea.vmem [#allocation3], 41
  %v3142 = vld [vmem:[%s3141] ss:$2 sm:$0x3]
  %3143 = vst.msk [vmem:[#allocation7 + $0x10] sm:$0x3] %vm3079, %v3142
  %v3144 = vld [vmem:[#allocation7] sm:$0xff]
  %v3145 = vld [vmem:[#allocation7 + $0x8] sm:$0xff]
  %v3146 = vld [vmem:[#allocation7 + $0x10] sm:$0x3]
  %v3147 = vpack.c.bf16 %v3145, %v3144
  %v3148 = vpack.c.bf16 %v3146, %v3146
  %v3149 = vld [vmem:[%s6] sm:$0xf]
  %v3150 = vld [vmem:[%s6 + $0x4] sm:$0xf]
  %v3151 = vld [vmem:[%s6 + $0x8] sm:$0xf]
  %v3152 = vld [vmem:[%s6 + $0xc] sm:$0xf]
  %v3153 = vld [vmem:[%s6 + $0x10] sm:$0xf]
  %v3154 = vld [vmem:[%s6 + $0x14] sm:$0xf]
  %v3155 = vld [vmem:[%s6 + $0x18] sm:$0xf]
  %v3156 = vld [vmem:[%s6 + $0x1c] sm:$0xf]
  %v3157 = vld [vmem:[%s6 + $0x20] sm:$0xf]
  %v3158 = vld [vmem:[%s6 + $0x24] sm:$0xf]
  %v3159 = vld [vmem:[%s6 + $0x28] sm:$0xf]
  %v3160 = vld [vmem:[%s6 + $0x2c] sm:$0xf]
  %v3161 = vld [vmem:[%s6 + $0x30] sm:$0xf]
  %v3162 = vld [vmem:[%s6 + $0x34] sm:$0xf]
  %v3163 = vld [vmem:[%s6 + $0x38] sm:$0xf]
  %v3164 = vld [vmem:[%s6 + $0x3c] sm:$0xf]
  %v3165 = vld [vmem:[#allocation7 + $0x1] sm:$0xff]
  %v3166 = vld [vmem:[#allocation7 + $0x9] sm:$0xff]
  %v3167 = vld [vmem:[#allocation7 + $0x11] sm:$0x3]
  %v3168 = vpack.c.bf16 %v3166, %v3165
  %v3169 = vpack.c.bf16 %v3167, %v3167
  %v3170 = vld [vmem:[%s6 + $0x40] sm:$0xf]
  %v3171 = vld [vmem:[%s6 + $0x44] sm:$0xf]
  %v3172 = vld [vmem:[%s6 + $0x48] sm:$0xf]
  %v3173 = vld [vmem:[%s6 + $0x4c] sm:$0xf]
  %v3174 = vld [vmem:[%s6 + $0x50] sm:$0xf]
  %v3175 = vld [vmem:[%s6 + $0x54] sm:$0xf]
  %v3176 = vld [vmem:[%s6 + $0x58] sm:$0xf]
  %v3177 = vld [vmem:[%s6 + $0x5c] sm:$0xf]
  %v3178 = vld [vmem:[%s6 + $0x60] sm:$0xf]
  %v3179 = vld [vmem:[%s6 + $0x64] sm:$0xf]
  %v3180 = vld [vmem:[%s6 + $0x68] sm:$0xf]
  %v3181 = vld [vmem:[%s6 + $0x6c] sm:$0xf]
  %v3182 = vld [vmem:[%s6 + $0x70] sm:$0xf]
  %v3183 = vld [vmem:[%s6 + $0x74] sm:$0xf]
  %v3184 = vld [vmem:[%s6 + $0x78] sm:$0xf]
  %v3185 = vld [vmem:[%s6 + $0x7c] sm:$0xf]
  %v3202 = vunpack.c.l.b16 %v3170
  %v3203 = vunpack.c.l.b16 %v3171
  %v3204 = vunpack.c.l.b16 %v3172
  %v3205 = vunpack.c.l.b16 %v3173
  %v3206 = vunpack.c.l.b16 %v3174
  %v3207 = vunpack.c.l.b16 %v3175
  %v3208 = vunpack.c.l.b16 %v3176
  %v3209 = vunpack.c.l.b16 %v3177
  %v3210 = vunpack.c.l.b16 %v3178
  %v3211 = vunpack.c.l.b16 %v3179
  %v3212 = vunpack.c.l.b16 %v3180
  %v3213 = vunpack.c.l.b16 %v3181
  %v3214 = vunpack.c.l.b16 %v3182
  %v3215 = vunpack.c.l.b16 %v3183
  %v3216 = vunpack.c.l.b16 %v3184
  %v3217 = vunpack.c.l.b16 %v3185
  %v3218 = vpack.c.b16 %v3203, %v3202
  %v3219 = vpack.c.b16 %v3205, %v3204
  %v3220 = vpack.c.b16 %v3207, %v3206
  %v3221 = vpack.c.b16 %v3209, %v3208
  %v3222 = vpack.c.b16 %v3211, %v3210
  %v3223 = vpack.c.b16 %v3213, %v3212
  %v3224 = vpack.c.b16 %v3215, %v3214
  %v3225 = vpack.c.b16 %v3217, %v3216
  %3234 = vmatprep.subr.bf16.mxu0 0
  %3235 = vmatpush1.bf16.msra.mxu0 %v3225
  %3236 = vmatprep.subr.bf16.mxu0 0
  %3237 = vmatpush1.bf16.msra.mxu0 %v3224
  %3238 = vmatprep.subr.bf16.mxu0 0
  %3239 = vmatpush1.bf16.msra.mxu0 %v3223
  %3240 = vmatprep.subr.bf16.mxu0 0
  %3241 = vmatpush1.bf16.msra.mxu0 %v3222
  %3242 = vmatprep.subr.bf16.mxu0 0
  %3243 = vmatpush1.bf16.msra.mxu0 %v3221
  %3244 = vmatprep.subr.bf16.mxu0 0
  %3245 = vmatpush1.bf16.msra.mxu0 %v3220
  %3246 = vmatprep.subr.bf16.mxu0 0
  %3247 = vmatpush1.bf16.msra.mxu0 %v3219
  %3248 = vmatprep.subr.bf16.mxu0 0
  %3249 = vmatpush1.bf16.msra.mxu0 %v3218
  %3250 = vmatprep.subr.bf16.mxu0 0
  %3251 = vmatpush2.bf16.msra.mxu0 0
  %3252 = vmatprep.subr.bf16.mxu0 0
  %3253 = vmatpush2.bf16.msra.mxu0 0
  %3254 = vmatprep.subr.bf16.mxu0 0
  %3255 = vmatpush2.bf16.msra.mxu0 0
  %3256 = vmatprep.subr.bf16.mxu0 0
  %3257 = vmatpush2.bf16.msra.mxu0 0
  %3258 = vmatprep.subr.bf16.mxu0 0
  %3259 = vmatpush2.bf16.msra.mxu0 0
  %3260 = vmatprep.subr.bf16.mxu0 0
  %3261 = vmatpush2.bf16.msra.mxu0 0
  %3262 = vmatprep.subr.bf16.mxu0 0
  %3263 = vmatpush2.bf16.msra.mxu0 0
  %3264 = vmatprep.subr.bf16.mxu0 0
  %3265 = vmatpush2.bf16.msra.mxu0 0
  %3266 = vmatprep.mubr.bf16.mxu0 0
  %3267 = vmatmul.mubr.bf16.gmra.mxu0 %v3168
  %v3268 = vpop.f32.mrf.mxu0
  %v3269 = vadd.f32 0.0, %v3268
  %v3270 = vpop.f32.mrf.mxu0
  %v3271 = vpop.f32.mrf.mxu0
  %v3272 = vadd.f32 0.0, %v3271
  %v3273 = vpop.f32.mrf.mxu0
  %3274 = vmatprep.mubr.bf16.mxu0 0
  %3275 = vmatmul.mubr.bf16.gmra.mxu0 %v3169
  %v3276 = vpop.f32.mrf.mxu0
  %v3277 = vadd.f32 0.0, %v3276
  %v3278 = vpop.f32.mrf.mxu0
  %v3279 = vpop.f32.mrf.mxu0
  %v3280 = vpop.f32.mrf.mxu0
  %3281 = vdwg.mxu0
  %v3298 = vunpack.c.l.b16 %v3149
  %v3299 = vunpack.c.l.b16 %v3150
  %v3300 = vunpack.c.l.b16 %v3151
  %v3301 = vunpack.c.l.b16 %v3152
  %v3302 = vunpack.c.l.b16 %v3153
  %v3303 = vunpack.c.l.b16 %v3154
  %v3304 = vunpack.c.l.b16 %v3155
  %v3305 = vunpack.c.l.b16 %v3156
  %v3306 = vunpack.c.l.b16 %v3157
  %v3307 = vunpack.c.l.b16 %v3158
  %v3308 = vunpack.c.l.b16 %v3159
  %v3309 = vunpack.c.l.b16 %v3160
  %v3310 = vunpack.c.l.b16 %v3161
  %v3311 = vunpack.c.l.b16 %v3162
  %v3312 = vunpack.c.l.b16 %v3163
  %v3313 = vunpack.c.l.b16 %v3164
  %v3314 = vpack.c.b16 %v3299, %v3298
  %v3315 = vpack.c.b16 %v3301, %v3300
  %v3316 = vpack.c.b16 %v3303, %v3302
  %v3317 = vpack.c.b16 %v3305, %v3304
  %v3318 = vpack.c.b16 %v3307, %v3306
  %v3319 = vpack.c.b16 %v3309, %v3308
  %v3320 = vpack.c.b16 %v3311, %v3310
  %v3321 = vpack.c.b16 %v3313, %v3312
  %3330 = vmatprep.subr.bf16.mxu0 0
  %3331 = vmatpush1.bf16.msra.mxu0 %v3321
  %3332 = vmatprep.subr.bf16.mxu0 0
  %3333 = vmatpush1.bf16.msra.mxu0 %v3320
  %3334 = vmatprep.subr.bf16.mxu0 0
  %3335 = vmatpush1.bf16.msra.mxu0 %v3319
  %3336 = vmatprep.subr.bf16.mxu0 0
  %3337 = vmatpush1.bf16.msra.mxu0 %v3318
  %3338 = vmatprep.subr.bf16.mxu0 0
  %3339 = vmatpush1.bf16.msra.mxu0 %v3317
  %3340 = vmatprep.subr.bf16.mxu0 0
  %3341 = vmatpush1.bf16.msra.mxu0 %v3316
  %3342 = vmatprep.subr.bf16.mxu0 0
  %3343 = vmatpush1.bf16.msra.mxu0 %v3315
  %3344 = vmatprep.subr.bf16.mxu0 0
  %3345 = vmatpush1.bf16.msra.mxu0 %v3314
  %3346 = vmatprep.subr.bf16.mxu0 0
  %3347 = vmatpush2.bf16.msra.mxu0 0
  %3348 = vmatprep.subr.bf16.mxu0 0
  %3349 = vmatpush2.bf16.msra.mxu0 0
  %3350 = vmatprep.subr.bf16.mxu0 0
  %3351 = vmatpush2.bf16.msra.mxu0 0
  %3352 = vmatprep.subr.bf16.mxu0 0
  %3353 = vmatpush2.bf16.msra.mxu0 0
  %3354 = vmatprep.subr.bf16.mxu0 0
  %3355 = vmatpush2.bf16.msra.mxu0 0
  %3356 = vmatprep.subr.bf16.mxu0 0
  %3357 = vmatpush2.bf16.msra.mxu0 0
  %3358 = vmatprep.subr.bf16.mxu0 0
  %3359 = vmatpush2.bf16.msra.mxu0 0
  %3360 = vmatprep.subr.bf16.mxu0 0
  %3361 = vmatpush2.bf16.msra.mxu0 0
  %3362 = vmatprep.mubr.bf16.mxu0 0
  %3363 = vmatmul.mubr.bf16.gmra.mxu0 %v3147
  %v3364 = vpop.f32.mrf.mxu0
  %v3365 = vadd.f32 %v3269, %v3364
  %v3366 = vpop.f32.mrf.mxu0
  %v3367 = vpop.f32.mrf.mxu0
  %v3368 = vadd.f32 %v3272, %v3367
  %v3369 = vpop.f32.mrf.mxu0
  %3370 = vmatprep.mubr.bf16.mxu0 0
  %3371 = vmatmul.mubr.bf16.gmra.mxu0 %v3148
  %v3372 = vpop.f32.mrf.mxu0
  %v3373 = vadd.f32 %v3277, %v3372
  %v3374 = vpop.f32.mrf.mxu0
  %v3375 = vpop.f32.mrf.mxu0
  %v3376 = vpop.f32.mrf.mxu0
  %3377 = vdwg.mxu0
  %v3378 = vld [vmem:[#allocation8] sm:$0xff]
  %v3379 = vld [vmem:[#allocation8 + $0x8] sm:$0xff]
  %v3380 = vld [vmem:[#allocation8 + $0x10] sm:$0x3]
  %v3381 = vpack.c.bf16 %v3379, %v3378
  %v3382 = vpack.c.bf16 %v3380, %v3380
  %v3383 = vld [vmem:[%s6 + $0x80] sm:$0xf]
  %v3384 = vld [vmem:[%s6 + $0x84] sm:$0xf]
  %v3385 = vld [vmem:[%s6 + $0x88] sm:$0xf]
  %v3386 = vld [vmem:[%s6 + $0x8c] sm:$0xf]
  %v3387 = vld [vmem:[%s6 + $0x90] sm:$0xf]
  %v3388 = vld [vmem:[%s6 + $0x94] sm:$0xf]
  %v3389 = vld [vmem:[%s6 + $0x98] sm:$0xf]
  %v3390 = vld [vmem:[%s6 + $0x9c] sm:$0xf]
  %v3391 = vld [vmem:[%s6 + $0xa0] sm:$0xf]
  %v3392 = vld [vmem:[%s6 + $0xa4] sm:$0xf]
  %v3393 = vld [vmem:[%s6 + $0xa8] sm:$0xf]
  %v3394 = vld [vmem:[%s6 + $0xac] sm:$0xf]
  %v3395 = vld [vmem:[%s6 + $0xb0] sm:$0xf]
  %v3396 = vld [vmem:[%s6 + $0xb4] sm:$0xf]
  %v3397 = vld [vmem:[%s6 + $0xb8] sm:$0xf]
  %v3398 = vld [vmem:[%s6 + $0xbc] sm:$0xf]
  %v3415 = vunpack.c.l.b16 %v3383
  %v3416 = vunpack.c.l.b16 %v3384
  %v3417 = vunpack.c.l.b16 %v3385
  %v3418 = vunpack.c.l.b16 %v3386
  %v3419 = vunpack.c.l.b16 %v3387
  %v3420 = vunpack.c.l.b16 %v3388
  %v3421 = vunpack.c.l.b16 %v3389
  %v3422 = vunpack.c.l.b16 %v3390
  %v3423 = vunpack.c.l.b16 %v3391
  %v3424 = vunpack.c.l.b16 %v3392
  %v3425 = vunpack.c.l.b16 %v3393
  %v3426 = vunpack.c.l.b16 %v3394
  %v3427 = vunpack.c.l.b16 %v3395
  %v3428 = vunpack.c.l.b16 %v3396
  %v3429 = vunpack.c.l.b16 %v3397
  %v3430 = vunpack.c.l.b16 %v3398
  %v3431 = vpack.c.b16 %v3416, %v3415
  %v3432 = vpack.c.b16 %v3418, %v3417
  %v3433 = vpack.c.b16 %v3420, %v3419
  %v3434 = vpack.c.b16 %v3422, %v3421
  %v3435 = vpack.c.b16 %v3424, %v3423
  %v3436 = vpack.c.b16 %v3426, %v3425
  %v3437 = vpack.c.b16 %v3428, %v3427
  %v3438 = vpack.c.b16 %v3430, %v3429
  %3447 = vmatprep.subr.bf16.mxu0 0
  %3448 = vmatpush1.bf16.msra.mxu0 %v3438
  %3449 = vmatprep.subr.bf16.mxu0 0
  %3450 = vmatpush1.bf16.msra.mxu0 %v3437
  %3451 = vmatprep.subr.bf16.mxu0 0
  %3452 = vmatpush1.bf16.msra.mxu0 %v3436
  %3453 = vmatprep.subr.bf16.mxu0 0
  %3454 = vmatpush1.bf16.msra.mxu0 %v3435
  %3455 = vmatprep.subr.bf16.mxu0 0
  %3456 = vmatpush1.bf16.msra.mxu0 %v3434
  %3457 = vmatprep.subr.bf16.mxu0 0
  %3458 = vmatpush1.bf16.msra.mxu0 %v3433
  %3459 = vmatprep.subr.bf16.mxu0 0
  %3460 = vmatpush1.bf16.msra.mxu0 %v3432
  %3461 = vmatprep.subr.bf16.mxu0 0
  %3462 = vmatpush1.bf16.msra.mxu0 %v3431
  %3463 = vmatprep.subr.bf16.mxu0 0
  %3464 = vmatpush2.bf16.msra.mxu0 0
  %3465 = vmatprep.subr.bf16.mxu0 0
  %3466 = vmatpush2.bf16.msra.mxu0 0
  %3467 = vmatprep.subr.bf16.mxu0 0
  %3468 = vmatpush2.bf16.msra.mxu0 0
  %3469 = vmatprep.subr.bf16.mxu0 0
  %3470 = vmatpush2.bf16.msra.mxu0 0
  %3471 = vmatprep.subr.bf16.mxu0 0
  %3472 = vmatpush2.bf16.msra.mxu0 0
  %3473 = vmatprep.subr.bf16.mxu0 0
  %3474 = vmatpush2.bf16.msra.mxu0 0
  %3475 = vmatprep.subr.bf16.mxu0 0
  %3476 = vmatpush2.bf16.msra.mxu0 0
  %3477 = vmatprep.subr.bf16.mxu0 0
  %3478 = vmatpush2.bf16.msra.mxu0 0
  %3479 = vmatprep.mubr.bf16.mxu0 0
  %3480 = vmatmul.mubr.bf16.gmra.mxu0 %v3381
  %v3481 = vpop.f32.mrf.mxu0
  %v3482 = vadd.f32 0.0, %v3481
  %v3483 = vpop.f32.mrf.mxu0
  %v3484 = vpop.f32.mrf.mxu0
  %v3485 = vadd.f32 0.0, %v3484
  %v3486 = vpop.f32.mrf.mxu0
  %3487 = vmatprep.mubr.bf16.mxu0 0
  %3488 = vmatmul.mubr.bf16.gmra.mxu0 %v3382
  %v3489 = vpop.f32.mrf.mxu0
  %v3490 = vadd.f32 0.0, %v3489
  %v3491 = vpop.f32.mrf.mxu0
  %v3492 = vpop.f32.mrf.mxu0
  %v3493 = vpop.f32.mrf.mxu0
  %3494 = vdwg.mxu0
  %v3495 = vadd.f32 %v3365, %v3482
  %v3496 = vadd.f32 %v3368, %v3485
  %v3497 = vadd.f32 %v3373, %v3490
  %v3498 = vld [vmem:[#allocation8 + $0x1] sm:$0xff]
  %v3499 = vld [vmem:[#allocation8 + $0x9] sm:$0xff]
  %v3500 = vld [vmem:[#allocation8 + $0x11] sm:$0x3]
  %v3501 = vpack.c.bf16 %v3499, %v3498
  %v3502 = vpack.c.bf16 %v3500, %v3500
  %v3503 = vld [vmem:[%s6 + $0xc0] sm:$0xf]
  %v3504 = vld [vmem:[%s6 + $0xc4] sm:$0xf]
  %v3505 = vld [vmem:[%s6 + $0xc8] sm:$0xf]
  %v3506 = vld [vmem:[%s6 + $0xcc] sm:$0xf]
  %v3507 = vld [vmem:[%s6 + $0xd0] sm:$0xf]
  %v3508 = vld [vmem:[%s6 + $0xd4] sm:$0xf]
  %v3509 = vld [vmem:[%s6 + $0xd8] sm:$0xf]
  %v3510 = vld [vmem:[%s6 + $0xdc] sm:$0xf]
  %v3511 = vld [vmem:[%s6 + $0xe0] sm:$0xf]
  %v3512 = vld [vmem:[%s6 + $0xe4] sm:$0xf]
  %v3513 = vld [vmem:[%s6 + $0xe8] sm:$0xf]
  %v3514 = vld [vmem:[%s6 + $0xec] sm:$0xf]
  %v3515 = vld [vmem:[%s6 + $0xf0] sm:$0xf]
  %v3516 = vld [vmem:[%s6 + $0xf4] sm:$0xf]
  %v3517 = vld [vmem:[%s6 + $0xf8] sm:$0xf]
  %v3518 = vld [vmem:[%s6 + $0xfc] sm:$0xf]
  %v3535 = vunpack.c.l.b16 %v3503
  %v3536 = vunpack.c.l.b16 %v3504
  %v3537 = vunpack.c.l.b16 %v3505
  %v3538 = vunpack.c.l.b16 %v3506
  %v3539 = vunpack.c.l.b16 %v3507
  %v3540 = vunpack.c.l.b16 %v3508
  %v3541 = vunpack.c.l.b16 %v3509
  %v3542 = vunpack.c.l.b16 %v3510
  %v3543 = vunpack.c.l.b16 %v3511
  %v3544 = vunpack.c.l.b16 %v3512
  %v3545 = vunpack.c.l.b16 %v3513
  %v3546 = vunpack.c.l.b16 %v3514
  %v3547 = vunpack.c.l.b16 %v3515
  %v3548 = vunpack.c.l.b16 %v3516
  %v3549 = vunpack.c.l.b16 %v3517
  %v3550 = vunpack.c.l.b16 %v3518
  %v3551 = vpack.c.b16 %v3536, %v3535
  %v3552 = vpack.c.b16 %v3538, %v3537
  %v3553 = vpack.c.b16 %v3540, %v3539
  %v3554 = vpack.c.b16 %v3542, %v3541
  %v3555 = vpack.c.b16 %v3544, %v3543
  %v3556 = vpack.c.b16 %v3546, %v3545
  %v3557 = vpack.c.b16 %v3548, %v3547
  %v3558 = vpack.c.b16 %v3550, %v3549
  %3567 = vmatprep.subr.bf16.mxu0 0
  %3568 = vmatpush1.bf16.msra.mxu0 %v3558
  %3569 = vmatprep.subr.bf16.mxu0 0
  %3570 = vmatpush1.bf16.msra.mxu0 %v3557
  %3571 = vmatprep.subr.bf16.mxu0 0
  %3572 = vmatpush1.bf16.msra.mxu0 %v3556
  %3573 = vmatprep.subr.bf16.mxu0 0
  %3574 = vmatpush1.bf16.msra.mxu0 %v3555
  %3575 = vmatprep.subr.bf16.mxu0 0
  %3576 = vmatpush1.bf16.msra.mxu0 %v3554
  %3577 = vmatprep.subr.bf16.mxu0 0
  %3578 = vmatpush1.bf16.msra.mxu0 %v3553
  %3579 = vmatprep.subr.bf16.mxu0 0
  %3580 = vmatpush1.bf16.msra.mxu0 %v3552
  %3581 = vmatprep.subr.bf16.mxu0 0
  %3582 = vmatpush1.bf16.msra.mxu0 %v3551
  %3583 = vmatprep.subr.bf16.mxu0 0
  %3584 = vmatpush2.bf16.msra.mxu0 0
  %3585 = vmatprep.subr.bf16.mxu0 0
  %3586 = vmatpush2.bf16.msra.mxu0 0
  %3587 = vmatprep.subr.bf16.mxu0 0
  %3588 = vmatpush2.bf16.msra.mxu0 0
  %3589 = vmatprep.subr.bf16.mxu0 0
  %3590 = vmatpush2.bf16.msra.mxu0 0
  %3591 = vmatprep.subr.bf16.mxu0 0
  %3592 = vmatpush2.bf16.msra.mxu0 0
  %3593 = vmatprep.subr.bf16.mxu0 0
  %3594 = vmatpush2.bf16.msra.mxu0 0
  %3595 = vmatprep.subr.bf16.mxu0 0
  %3596 = vmatpush2.bf16.msra.mxu0 0
  %3597 = vmatprep.subr.bf16.mxu0 0
  %3598 = vmatpush2.bf16.msra.mxu0 0
  %3599 = vmatprep.mubr.bf16.mxu0 0
  %3600 = vmatmul.mubr.bf16.gmra.mxu0 %v3501
  %v3601 = vpop.f32.mrf.mxu0
  %v3602 = vadd.f32 0.0, %v3601
  %v3603 = vpop.f32.mrf.mxu0
  %v3604 = vpop.f32.mrf.mxu0
  %v3605 = vadd.f32 0.0, %v3604
  %v3606 = vpop.f32.mrf.mxu0
  %3607 = vmatprep.mubr.bf16.mxu0 0
  %3608 = vmatmul.mubr.bf16.gmra.mxu0 %v3502
  %v3609 = vpop.f32.mrf.mxu0
  %v3610 = vadd.f32 0.0, %v3609
  %v3611 = vpop.f32.mrf.mxu0
  %v3612 = vpop.f32.mrf.mxu0
  %v3613 = vpop.f32.mrf.mxu0
  %3614 = vdwg.mxu0
  %v3615 = vadd.f32 %v3495, %v3602
  %v3616 = vadd.f32 %v3496, %v3605
  %v3617 = vadd.f32 %v3497, %v3610
  %v3618 = vld [vmem:[#allocation7 + $0x3] sm:$0xff]
  %v3619 = vld [vmem:[#allocation7 + $0xb] sm:$0xff]
  %v3620 = vld [vmem:[#allocation7 + $0x13] sm:$0x3]
  %v3621 = vpack.c.bf16 %v3619, %v3618
  %v3622 = vpack.c.bf16 %v3620, %v3620
  %v3623 = vld [vmem:[%s6 + $0x100] sm:$0xf]
  %v3624 = vld [vmem:[%s6 + $0x104] sm:$0xf]
  %v3625 = vld [vmem:[%s6 + $0x108] sm:$0xf]
  %v3626 = vld [vmem:[%s6 + $0x10c] sm:$0xf]
  %v3627 = vld [vmem:[%s6 + $0x110] sm:$0xf]
  %v3628 = vld [vmem:[%s6 + $0x114] sm:$0xf]
  %v3629 = vld [vmem:[%s6 + $0x118] sm:$0xf]
  %v3630 = vld [vmem:[%s6 + $0x11c] sm:$0xf]
  %v3631 = vld [vmem:[%s6 + $0x120] sm:$0xf]
  %v3632 = vld [vmem:[%s6 + $0x124] sm:$0xf]
  %v3633 = vld [vmem:[%s6 + $0x128] sm:$0xf]
  %v3634 = vld [vmem:[%s6 + $0x12c] sm:$0xf]
  %v3635 = vld [vmem:[%s6 + $0x130] sm:$0xf]
  %v3636 = vld [vmem:[%s6 + $0x134] sm:$0xf]
  %v3637 = vld [vmem:[%s6 + $0x138] sm:$0xf]
  %v3638 = vld [vmem:[%s6 + $0x13c] sm:$0xf]
  %v3655 = vunpack.c.l.b16 %v3623
  %v3656 = vunpack.c.l.b16 %v3624
  %v3657 = vunpack.c.l.b16 %v3625
  %v3658 = vunpack.c.l.b16 %v3626
  %v3659 = vunpack.c.l.b16 %v3627
  %v3660 = vunpack.c.l.b16 %v3628
  %v3661 = vunpack.c.l.b16 %v3629
  %v3662 = vunpack.c.l.b16 %v3630
  %v3663 = vunpack.c.l.b16 %v3631
  %v3664 = vunpack.c.l.b16 %v3632
  %v3665 = vunpack.c.l.b16 %v3633
  %v3666 = vunpack.c.l.b16 %v3634
  %v3667 = vunpack.c.l.b16 %v3635
  %v3668 = vunpack.c.l.b16 %v3636
  %v3669 = vunpack.c.l.b16 %v3637
  %v3670 = vunpack.c.l.b16 %v3638
  %v3671 = vpack.c.b16 %v3656, %v3655
  %v3672 = vpack.c.b16 %v3658, %v3657
  %v3673 = vpack.c.b16 %v3660, %v3659
  %v3674 = vpack.c.b16 %v3662, %v3661
  %v3675 = vpack.c.b16 %v3664, %v3663
  %v3676 = vpack.c.b16 %v3666, %v3665
  %v3677 = vpack.c.b16 %v3668, %v3667
  %v3678 = vpack.c.b16 %v3670, %v3669
  %3687 = vmatprep.subr.bf16.mxu0 0
  %3688 = vmatpush1.bf16.msra.mxu0 %v3678
  %3689 = vmatprep.subr.bf16.mxu0 0
  %3690 = vmatpush1.bf16.msra.mxu0 %v3677
  %3691 = vmatprep.subr.bf16.mxu0 0
  %3692 = vmatpush1.bf16.msra.mxu0 %v3676
  %3693 = vmatprep.subr.bf16.mxu0 0
  %3694 = vmatpush1.bf16.msra.mxu0 %v3675
  %3695 = vmatprep.subr.bf16.mxu0 0
  %3696 = vmatpush1.bf16.msra.mxu0 %v3674
  %3697 = vmatprep.subr.bf16.mxu0 0
  %3698 = vmatpush1.bf16.msra.mxu0 %v3673
  %3699 = vmatprep.subr.bf16.mxu0 0
  %3700 = vmatpush1.bf16.msra.mxu0 %v3672
  %3701 = vmatprep.subr.bf16.mxu0 0
  %3702 = vmatpush1.bf16.msra.mxu0 %v3671
  %3703 = vmatprep.subr.bf16.mxu0 0
  %3704 = vmatpush2.bf16.msra.mxu0 0
  %3705 = vmatprep.subr.bf16.mxu0 0
  %3706 = vmatpush2.bf16.msra.mxu0 0
  %3707 = vmatprep.subr.bf16.mxu0 0
  %3708 = vmatpush2.bf16.msra.mxu0 0
  %3709 = vmatprep.subr.bf16.mxu0 0
  %3710 = vmatpush2.bf16.msra.mxu0 0
  %3711 = vmatprep.subr.bf16.mxu0 0
  %3712 = vmatpush2.bf16.msra.mxu0 0
  %3713 = vmatprep.subr.bf16.mxu0 0
  %3714 = vmatpush2.bf16.msra.mxu0 0
  %3715 = vmatprep.subr.bf16.mxu0 0
  %3716 = vmatpush2.bf16.msra.mxu0 0
  %3717 = vmatprep.subr.bf16.mxu0 0
  %3718 = vmatpush2.bf16.msra.mxu0 0
  %3719 = vmatprep.mubr.bf16.mxu0 0
  %3720 = vmatmul.mubr.bf16.gmra.mxu0 %v3621
  %v3721 = vpop.f32.mrf.mxu0
  %v3722 = vadd.f32 0.0, %v3721
  %v3723 = vpop.f32.mrf.mxu0
  %v3724 = vpop.f32.mrf.mxu0
  %v3725 = vadd.f32 0.0, %v3724
  %v3726 = vpop.f32.mrf.mxu0
  %3727 = vmatprep.mubr.bf16.mxu0 0
  %3728 = vmatmul.mubr.bf16.gmra.mxu0 %v3622
  %v3729 = vpop.f32.mrf.mxu0
  %v3730 = vadd.f32 0.0, %v3729
  %v3731 = vpop.f32.mrf.mxu0
  %v3732 = vpop.f32.mrf.mxu0
  %v3733 = vpop.f32.mrf.mxu0
  %3734 = vdwg.mxu0
  %v3735 = vadd.f32 %v3615, %v3722
  %v3736 = vadd.f32 %v3616, %v3725
  %v3737 = vadd.f32 %v3617, %v3730
  %v3738 = vld [vmem:[#allocation7 + $0x4] sm:$0xff]
  %v3739 = vld [vmem:[#allocation7 + $0xc] sm:$0xff]
  %v3740 = vld [vmem:[#allocation7 + $0x14] sm:$0x3]
  %v3741 = vpack.c.bf16 %v3739, %v3738
  %v3742 = vpack.c.bf16 %v3740, %v3740
  %v3743 = vld [vmem:[%s6 + $0x140] sm:$0xf]
  %v3744 = vld [vmem:[%s6 + $0x144] sm:$0xf]
  %v3745 = vld [vmem:[%s6 + $0x148] sm:$0xf]
  %v3746 = vld [vmem:[%s6 + $0x14c] sm:$0xf]
  %v3747 = vld [vmem:[%s6 + $0x150] sm:$0xf]
  %v3748 = vld [vmem:[%s6 + $0x154] sm:$0xf]
  %v3749 = vld [vmem:[%s6 + $0x158] sm:$0xf]
  %v3750 = vld [vmem:[%s6 + $0x15c] sm:$0xf]
  %v3751 = vld [vmem:[%s6 + $0x160] sm:$0xf]
  %v3752 = vld [vmem:[%s6 + $0x164] sm:$0xf]
  %v3753 = vld [vmem:[%s6 + $0x168] sm:$0xf]
  %v3754 = vld [vmem:[%s6 + $0x16c] sm:$0xf]
  %v3755 = vld [vmem:[%s6 + $0x170] sm:$0xf]
  %v3756 = vld [vmem:[%s6 + $0x174] sm:$0xf]
  %v3757 = vld [vmem:[%s6 + $0x178] sm:$0xf]
  %v3758 = vld [vmem:[%s6 + $0x17c] sm:$0xf]
  %v3775 = vunpack.c.l.b16 %v3743
  %v3776 = vunpack.c.l.b16 %v3744
  %v3777 = vunpack.c.l.b16 %v3745
  %v3778 = vunpack.c.l.b16 %v3746
  %v3779 = vunpack.c.l.b16 %v3747
  %v3780 = vunpack.c.l.b16 %v3748
  %v3781 = vunpack.c.l.b16 %v3749
  %v3782 = vunpack.c.l.b16 %v3750
  %v3783 = vunpack.c.l.b16 %v3751
  %v3784 = vunpack.c.l.b16 %v3752
  %v3785 = vunpack.c.l.b16 %v3753
  %v3786 = vunpack.c.l.b16 %v3754
  %v3787 = vunpack.c.l.b16 %v3755
  %v3788 = vunpack.c.l.b16 %v3756
  %v3789 = vunpack.c.l.b16 %v3757
  %v3790 = vunpack.c.l.b16 %v3758
  %v3791 = vpack.c.b16 %v3776, %v3775
  %v3792 = vpack.c.b16 %v3778, %v3777
  %v3793 = vpack.c.b16 %v3780, %v3779
  %v3794 = vpack.c.b16 %v3782, %v3781
  %v3795 = vpack.c.b16 %v3784, %v3783
  %v3796 = vpack.c.b16 %v3786, %v3785
  %v3797 = vpack.c.b16 %v3788, %v3787
  %v3798 = vpack.c.b16 %v3790, %v3789
  %3807 = vmatprep.subr.bf16.mxu0 0
  %3808 = vmatpush1.bf16.msra.mxu0 %v3798
  %3809 = vmatprep.subr.bf16.mxu0 0
  %3810 = vmatpush1.bf16.msra.mxu0 %v3797
  %3811 = vmatprep.subr.bf16.mxu0 0
  %3812 = vmatpush1.bf16.msra.mxu0 %v3796
  %3813 = vmatprep.subr.bf16.mxu0 0
  %3814 = vmatpush1.bf16.msra.mxu0 %v3795
  %3815 = vmatprep.subr.bf16.mxu0 0
  %3816 = vmatpush1.bf16.msra.mxu0 %v3794
  %3817 = vmatprep.subr.bf16.mxu0 0
  %3818 = vmatpush1.bf16.msra.mxu0 %v3793
  %3819 = vmatprep.subr.bf16.mxu0 0
  %3820 = vmatpush1.bf16.msra.mxu0 %v3792
  %3821 = vmatprep.subr.bf16.mxu0 0
  %3822 = vmatpush1.bf16.msra.mxu0 %v3791
  %3823 = vmatprep.subr.bf16.mxu0 0
  %3824 = vmatpush2.bf16.msra.mxu0 0
  %3825 = vmatprep.subr.bf16.mxu0 0
  %3826 = vmatpush2.bf16.msra.mxu0 0
  %3827 = vmatprep.subr.bf16.mxu0 0
  %3828 = vmatpush2.bf16.msra.mxu0 0
  %3829 = vmatprep.subr.bf16.mxu0 0
  %3830 = vmatpush2.bf16.msra.mxu0 0
  %3831 = vmatprep.subr.bf16.mxu0 0
  %3832 = vmatpush2.bf16.msra.mxu0 0
  %3833 = vmatprep.subr.bf16.mxu0 0
  %3834 = vmatpush2.bf16.msra.mxu0 0
  %3835 = vmatprep.subr.bf16.mxu0 0
  %3836 = vmatpush2.bf16.msra.mxu0 0
  %3837 = vmatprep.subr.bf16.mxu0 0
  %3838 = vmatpush2.bf16.msra.mxu0 0
  %3839 = vmatprep.mubr.bf16.mxu0 0
  %3840 = vmatmul.mubr.bf16.gmra.mxu0 %v3741
  %v3841 = vpop.f32.mrf.mxu0
  %v3842 = vadd.f32 0.0, %v3841
  %v3843 = vpop.f32.mrf.mxu0
  %v3844 = vpop.f32.mrf.mxu0
  %v3845 = vadd.f32 0.0, %v3844
  %v3846 = vpop.f32.mrf.mxu0
  %3847 = vmatprep.mubr.bf16.mxu0 0
  %3848 = vmatmul.mubr.bf16.gmra.mxu0 %v3742
  %v3849 = vpop.f32.mrf.mxu0
  %v3850 = vadd.f32 0.0, %v3849
  %v3851 = vpop.f32.mrf.mxu0
  %v3852 = vpop.f32.mrf.mxu0
  %v3853 = vpop.f32.mrf.mxu0
  %3854 = vdwg.mxu0
  %v3855 = vadd.f32 %v3735, %v3842
  %v3856 = vadd.f32 %v3736, %v3845
  %v3857 = vadd.f32 %v3737, %v3850
  %v3858 = vld [vmem:[%s7] sm:$0x1]
  %v3859 = vld [vmem:[%s7 + $0x1] sm:$0x1]
  %v3860 = vld [vmem:[%s7 + $0x2] sm:$0x1]
  %v3861 = vlaneseq
  %v3862 = vshrl.u32 %v3861, 7
  %v3863 = vsub.s32 0, %v3862
  %v3864 = vrot.slane %v3858, %v3863
  %v3865 = vadd.f32 %v3855, %v3864
  %v3866 = vadd.f32 %v3856, %v3864
  %v3867 = vadd.f32 %v3857, %v3864
  %v3868 = vmul.f32 %v3865, 0.2
  %v3869 = vmul.f32 %v3866, 0.2
  %v3870 = vmul.f32 %v3867, 0.2
  %v3871 = vmax.f32 %v3865, %v3868
  %v3872 = vmax.f32 %v3866, %v3869
  %v3873 = vmax.f32 %v3867, %v3870
  %v3874 = vlaneseq
  %v3875 = vshrl.u32 %v3874, 7
  %v3876 = vsub.s32 0, %v3875
  %v3877 = vrot.slane %v3859, %v3876
  %v3878 = vmul.f32 %v3871, %v3877
  %v3879 = vmul.f32 %v3872, %v3877
  %v3880 = vmul.f32 %v3873, %v3877
  %v3881 = vlaneseq
  %v3882 = vshrl.u32 %v3881, 7
  %v3883 = vsub.s32 0, %v3882
  %v3884 = vrot.slane %v3860, %v3883
  %v3885 = vadd.f32 %v3878, %v3884
  %v3886 = vadd.f32 %v3879, %v3884
  %v3887 = vadd.f32 %v3880, %v3884
  %3888 = vst [vmem:[#allocation4] sm:$0xff] %v3885
  %3889 = vst [vmem:[#allocation4 + $0x8] sm:$0xff] %v3886
  %3890 = vst [vmem:[#allocation4 + $0x10] sm:$0x3] %v3887
  %3891 = vst [vmem:[#allocation9] sm:$0xff] 0.0
  %3892 = vst [vmem:[#allocation9 + $0x8] sm:$0xff] 0.0
  %3893 = vst [vmem:[#allocation9 + $0x10] sm:$0xff] 0.0
  %3894 = vst [vmem:[#allocation10] sm:$0xff] 0.0
  %3895 = vst [vmem:[#allocation10 + $0x8] sm:$0xff] 0.0
  %3896 = vst [vmem:[#allocation10 + $0x10] sm:$0xff] 0.0
  %v3897 = vld [vmem:[#allocation4] sm:$0x1]
  %3899 = vrot.lane.b32.xlu0 %v3897, 64
  %v3900 = vpop.permute.xlu0 %3899
  %vm3902 = vcmask 1040896
  %3903 = vst.msk [vmem:[#allocation10] sm:$0x1] %vm3902, %v3900
  %v3904 = vld [vmem:[#allocation4 + $0x1] sm:$0x1]
  %vm3905 = vcmask 516096
  %3906 = vst.msk [vmem:[#allocation10 + $0x1] sm:$0x1] %vm3905, %v3904
  %v3907 = vld [vmem:[#allocation4 + $0x3] sm:$0x1]
  %3909 = vrot.lane.b32.xlu0 %v3907, 64
  %v3910 = vpop.permute.xlu0 %3909
  %3912 = vst.msk [vmem:[#allocation9 + $0x2] sm:$0x1] %vm3902, %v3910
  %v3913 = vld [vmem:[#allocation4 + $0x4] sm:$0x1]
  %3914 = vst.msk [vmem:[#allocation9 + $0x3] sm:$0x1] %vm3905, %v3913
  %v3915 = vld [vmem:[#allocation4 + $0x9] sm:$0x1]
  %3917 = vrot.lane.b32.xlu0 %v3915, 64
  %v3918 = vpop.permute.xlu0 %3917
  %3920 = vst.msk [vmem:[#allocation10 + $0x4] sm:$0x1] %vm3902, %v3918
  %v3921 = vld [vmem:[#allocation4 + $0xa] sm:$0x1]
  %3922 = vst.msk [vmem:[#allocation10 + $0x5] sm:$0x1] %vm3905, %v3921
  %v3923 = vld [vmem:[#allocation4 + $0xc] sm:$0x1]
  %3925 = vrot.lane.b32.xlu0 %v3923, 64
  %v3926 = vpop.permute.xlu0 %3925
  %3928 = vst.msk [vmem:[#allocation9 + $0x6] sm:$0x1] %vm3902, %v3926
  %v3929 = vld [vmem:[#allocation4 + $0xd] sm:$0x1]
  %3930 = vst.msk [vmem:[#allocation9 + $0x7] sm:$0x1] %vm3905, %v3929
  %v3931 = vld [vmem:[#allocation9] sm:$0xff]
  %v3932 = vpack.c.bf16 %v3931, %v3931
  %v3933 = vld [vmem:[%s8] sm:$0xf]
  %v3934 = vld [vmem:[%s8 + $0x4] sm:$0xf]
  %v3935 = vld [vmem:[%s8 + $0x8] sm:$0xf]
  %v3936 = vld [vmem:[%s8 + $0xc] sm:$0xf]
  %v3937 = vld [vmem:[%s8 + $0x10] sm:$0xf]
  %v3938 = vld [vmem:[%s8 + $0x14] sm:$0xf]
  %v3939 = vld [vmem:[%s8 + $0x18] sm:$0xf]
  %v3940 = vld [vmem:[%s8 + $0x1c] sm:$0xf]
  %v3941 = vld [vmem:[%s8 + $0x20] sm:$0xf]
  %v3942 = vld [vmem:[%s8 + $0x24] sm:$0xf]
  %v3943 = vld [vmem:[%s8 + $0x28] sm:$0xf]
  %v3944 = vld [vmem:[%s8 + $0x2c] sm:$0xf]
  %v3945 = vld [vmem:[%s8 + $0x30] sm:$0xf]
  %v3946 = vld [vmem:[%s8 + $0x34] sm:$0xf]
  %v3947 = vld [vmem:[%s8 + $0x38] sm:$0xf]
  %v3948 = vld [vmem:[%s8 + $0x3c] sm:$0xf]
  %v3949 = vld [vmem:[#allocation9 + $0x1] sm:$0xff]
  %v3950 = vpack.c.bf16 %v3949, %v3949
  %v3951 = vld [vmem:[%s8 + $0x40] sm:$0xf]
  %v3952 = vld [vmem:[%s8 + $0x44] sm:$0xf]
  %v3953 = vld [vmem:[%s8 + $0x48] sm:$0xf]
  %v3954 = vld [vmem:[%s8 + $0x4c] sm:$0xf]
  %v3955 = vld [vmem:[%s8 + $0x50] sm:$0xf]
  %v3956 = vld [vmem:[%s8 + $0x54] sm:$0xf]
  %v3957 = vld [vmem:[%s8 + $0x58] sm:$0xf]
  %v3958 = vld [vmem:[%s8 + $0x5c] sm:$0xf]
  %v3959 = vld [vmem:[%s8 + $0x60] sm:$0xf]
  %v3960 = vld [vmem:[%s8 + $0x64] sm:$0xf]
  %v3961 = vld [vmem:[%s8 + $0x68] sm:$0xf]
  %v3962 = vld [vmem:[%s8 + $0x6c] sm:$0xf]
  %v3963 = vld [vmem:[%s8 + $0x70] sm:$0xf]
  %v3964 = vld [vmem:[%s8 + $0x74] sm:$0xf]
  %v3965 = vld [vmem:[%s8 + $0x78] sm:$0xf]
  %v3966 = vld [vmem:[%s8 + $0x7c] sm:$0xf]
  %v3983 = vunpack.c.l.b16 %v3951
  %v3984 = vunpack.c.l.b16 %v3952
  %v3985 = vunpack.c.l.b16 %v3953
  %v3986 = vunpack.c.l.b16 %v3954
  %v3987 = vunpack.c.l.b16 %v3955
  %v3988 = vunpack.c.l.b16 %v3956
  %v3989 = vunpack.c.l.b16 %v3957
  %v3990 = vunpack.c.l.b16 %v3958
  %v3991 = vunpack.c.l.b16 %v3959
  %v3992 = vunpack.c.l.b16 %v3960
  %v3993 = vunpack.c.l.b16 %v3961
  %v3994 = vunpack.c.l.b16 %v3962
  %v3995 = vunpack.c.l.b16 %v3963
  %v3996 = vunpack.c.l.b16 %v3964
  %v3997 = vunpack.c.l.b16 %v3965
  %v3998 = vunpack.c.l.b16 %v3966
  %v3999 = vpack.c.b16 %v3984, %v3983
  %v4000 = vpack.c.b16 %v3986, %v3985
  %v4001 = vpack.c.b16 %v3988, %v3987
  %v4002 = vpack.c.b16 %v3990, %v3989
  %v4003 = vpack.c.b16 %v3992, %v3991
  %v4004 = vpack.c.b16 %v3994, %v3993
  %v4005 = vpack.c.b16 %v3996, %v3995
  %v4006 = vpack.c.b16 %v3998, %v3997
  %4015 = vmatprep.subr.bf16.mxu0 0
  %4016 = vmatpush1.bf16.msra.mxu0 %v4006
  %4017 = vmatprep.subr.bf16.mxu0 0
  %4018 = vmatpush1.bf16.msra.mxu0 %v4005
  %4019 = vmatprep.subr.bf16.mxu0 0
  %4020 = vmatpush1.bf16.msra.mxu0 %v4004
  %4021 = vmatprep.subr.bf16.mxu0 0
  %4022 = vmatpush1.bf16.msra.mxu0 %v4003
  %4023 = vmatprep.subr.bf16.mxu0 0
  %4024 = vmatpush1.bf16.msra.mxu0 %v4002
  %4025 = vmatprep.subr.bf16.mxu0 0
  %4026 = vmatpush1.bf16.msra.mxu0 %v4001
  %4027 = vmatprep.subr.bf16.mxu0 0
  %4028 = vmatpush1.bf16.msra.mxu0 %v4000
  %4029 = vmatprep.subr.bf16.mxu0 0
  %4030 = vmatpush1.bf16.msra.mxu0 %v3999
  %4031 = vmatprep.subr.bf16.mxu0 0
  %4032 = vmatpush2.bf16.msra.mxu0 0
  %4033 = vmatprep.subr.bf16.mxu0 0
  %4034 = vmatpush2.bf16.msra.mxu0 0
  %4035 = vmatprep.subr.bf16.mxu0 0
  %4036 = vmatpush2.bf16.msra.mxu0 0
  %4037 = vmatprep.subr.bf16.mxu0 0
  %4038 = vmatpush2.bf16.msra.mxu0 0
  %4039 = vmatprep.subr.bf16.mxu0 0
  %4040 = vmatpush2.bf16.msra.mxu0 0
  %4041 = vmatprep.subr.bf16.mxu0 0
  %4042 = vmatpush2.bf16.msra.mxu0 0
  %4043 = vmatprep.subr.bf16.mxu0 0
  %4044 = vmatpush2.bf16.msra.mxu0 0
  %4045 = vmatprep.subr.bf16.mxu0 0
  %4046 = vmatpush2.bf16.msra.mxu0 0
  %4047 = vmatprep.mubr.bf16.mxu0 0
  %4048 = vmatmul.mubr.bf16.gmra.mxu0 %v3950
  %v4049 = vpop.f32.mrf.mxu0
  %v4050 = vadd.f32 0.0, %v4049
  %v4051 = vpop.f32.mrf.mxu0
  %v4052 = vpop.f32.mrf.mxu0
  %v4053 = vpop.f32.mrf.mxu0
  %4054 = vdwg.mxu0
  %v4071 = vunpack.c.l.b16 %v3933
  %v4072 = vunpack.c.l.b16 %v3934
  %v4073 = vunpack.c.l.b16 %v3935
  %v4074 = vunpack.c.l.b16 %v3936
  %v4075 = vunpack.c.l.b16 %v3937
  %v4076 = vunpack.c.l.b16 %v3938
  %v4077 = vunpack.c.l.b16 %v3939
  %v4078 = vunpack.c.l.b16 %v3940
  %v4079 = vunpack.c.l.b16 %v3941
  %v4080 = vunpack.c.l.b16 %v3942
  %v4081 = vunpack.c.l.b16 %v3943
  %v4082 = vunpack.c.l.b16 %v3944
  %v4083 = vunpack.c.l.b16 %v3945
  %v4084 = vunpack.c.l.b16 %v3946
  %v4085 = vunpack.c.l.b16 %v3947
  %v4086 = vunpack.c.l.b16 %v3948
  %v4087 = vpack.c.b16 %v4072, %v4071
  %v4088 = vpack.c.b16 %v4074, %v4073
  %v4089 = vpack.c.b16 %v4076, %v4075
  %v4090 = vpack.c.b16 %v4078, %v4077
  %v4091 = vpack.c.b16 %v4080, %v4079
  %v4092 = vpack.c.b16 %v4082, %v4081
  %v4093 = vpack.c.b16 %v4084, %v4083
  %v4094 = vpack.c.b16 %v4086, %v4085
  %4103 = vmatprep.subr.bf16.mxu0 0
  %4104 = vmatpush1.bf16.msra.mxu0 %v4094
  %4105 = vmatprep.subr.bf16.mxu0 0
  %4106 = vmatpush1.bf16.msra.mxu0 %v4093
  %4107 = vmatprep.subr.bf16.mxu0 0
  %4108 = vmatpush1.bf16.msra.mxu0 %v4092
  %4109 = vmatprep.subr.bf16.mxu0 0
  %4110 = vmatpush1.bf16.msra.mxu0 %v4091
  %4111 = vmatprep.subr.bf16.mxu0 0
  %4112 = vmatpush1.bf16.msra.mxu0 %v4090
  %4113 = vmatprep.subr.bf16.mxu0 0
  %4114 = vmatpush1.bf16.msra.mxu0 %v4089
  %4115 = vmatprep.subr.bf16.mxu0 0
  %4116 = vmatpush1.bf16.msra.mxu0 %v4088
  %4117 = vmatprep.subr.bf16.mxu0 0
  %4118 = vmatpush1.bf16.msra.mxu0 %v4087
  %4119 = vmatprep.subr.bf16.mxu0 0
  %4120 = vmatpush2.bf16.msra.mxu0 0
  %4121 = vmatprep.subr.bf16.mxu0 0
  %4122 = vmatpush2.bf16.msra.mxu0 0
  %4123 = vmatprep.subr.bf16.mxu0 0
  %4124 = vmatpush2.bf16.msra.mxu0 0
  %4125 = vmatprep.subr.bf16.mxu0 0
  %4126 = vmatpush2.bf16.msra.mxu0 0
  %4127 = vmatprep.subr.bf16.mxu0 0
  %4128 = vmatpush2.bf16.msra.mxu0 0
  %4129 = vmatprep.subr.bf16.mxu0 0
  %4130 = vmatpush2.bf16.msra.mxu0 0
  %4131 = vmatprep.subr.bf16.mxu0 0
  %4132 = vmatpush2.bf16.msra.mxu0 0
  %4133 = vmatprep.subr.bf16.mxu0 0
  %4134 = vmatpush2.bf16.msra.mxu0 0
  %4135 = vmatprep.mubr.bf16.mxu0 0
  %4136 = vmatmul.mubr.bf16.gmra.mxu0 %v3932
  %v4137 = vpop.f32.mrf.mxu0
  %v4138 = vadd.f32 %v4050, %v4137
  %v4139 = vpop.f32.mrf.mxu0
  %v4140 = vpop.f32.mrf.mxu0
  %v4141 = vpop.f32.mrf.mxu0
  %4142 = vdwg.mxu0
  %v4143 = vld [vmem:[#allocation10] sm:$0xff]
  %v4144 = vpack.c.bf16 %v4143, %v4143
  %v4145 = vld [vmem:[%s8 + $0x80] sm:$0xf]
  %v4146 = vld [vmem:[%s8 + $0x84] sm:$0xf]
  %v4147 = vld [vmem:[%s8 + $0x88] sm:$0xf]
  %v4148 = vld [vmem:[%s8 + $0x8c] sm:$0xf]
  %v4149 = vld [vmem:[%s8 + $0x90] sm:$0xf]
  %v4150 = vld [vmem:[%s8 + $0x94] sm:$0xf]
  %v4151 = vld [vmem:[%s8 + $0x98] sm:$0xf]
  %v4152 = vld [vmem:[%s8 + $0x9c] sm:$0xf]
  %v4153 = vld [vmem:[%s8 + $0xa0] sm:$0xf]
  %v4154 = vld [vmem:[%s8 + $0xa4] sm:$0xf]
  %v4155 = vld [vmem:[%s8 + $0xa8] sm:$0xf]
  %v4156 = vld [vmem:[%s8 + $0xac] sm:$0xf]
  %v4157 = vld [vmem:[%s8 + $0xb0] sm:$0xf]
  %v4158 = vld [vmem:[%s8 + $0xb4] sm:$0xf]
  %v4159 = vld [vmem:[%s8 + $0xb8] sm:$0xf]
  %v4160 = vld [vmem:[%s8 + $0xbc] sm:$0xf]
  %v4177 = vunpack.c.l.b16 %v4145
  %v4178 = vunpack.c.l.b16 %v4146
  %v4179 = vunpack.c.l.b16 %v4147
  %v4180 = vunpack.c.l.b16 %v4148
  %v4181 = vunpack.c.l.b16 %v4149
  %v4182 = vunpack.c.l.b16 %v4150
  %v4183 = vunpack.c.l.b16 %v4151
  %v4184 = vunpack.c.l.b16 %v4152
  %v4185 = vunpack.c.l.b16 %v4153
  %v4186 = vunpack.c.l.b16 %v4154
  %v4187 = vunpack.c.l.b16 %v4155
  %v4188 = vunpack.c.l.b16 %v4156
  %v4189 = vunpack.c.l.b16 %v4157
  %v4190 = vunpack.c.l.b16 %v4158
  %v4191 = vunpack.c.l.b16 %v4159
  %v4192 = vunpack.c.l.b16 %v4160
  %v4193 = vpack.c.b16 %v4178, %v4177
  %v4194 = vpack.c.b16 %v4180, %v4179
  %v4195 = vpack.c.b16 %v4182, %v4181
  %v4196 = vpack.c.b16 %v4184, %v4183
  %v4197 = vpack.c.b16 %v4186, %v4185
  %v4198 = vpack.c.b16 %v4188, %v4187
  %v4199 = vpack.c.b16 %v4190, %v4189
  %v4200 = vpack.c.b16 %v4192, %v4191
  %4209 = vmatprep.subr.bf16.mxu0 0
  %4210 = vmatpush1.bf16.msra.mxu0 %v4200
  %4211 = vmatprep.subr.bf16.mxu0 0
  %4212 = vmatpush1.bf16.msra.mxu0 %v4199
  %4213 = vmatprep.subr.bf16.mxu0 0
  %4214 = vmatpush1.bf16.msra.mxu0 %v4198
  %4215 = vmatprep.subr.bf16.mxu0 0
  %4216 = vmatpush1.bf16.msra.mxu0 %v4197
  %4217 = vmatprep.subr.bf16.mxu0 0
  %4218 = vmatpush1.bf16.msra.mxu0 %v4196
  %4219 = vmatprep.subr.bf16.mxu0 0
  %4220 = vmatpush1.bf16.msra.mxu0 %v4195
  %4221 = vmatprep.subr.bf16.mxu0 0
  %4222 = vmatpush1.bf16.msra.mxu0 %v4194
  %4223 = vmatprep.subr.bf16.mxu0 0
  %4224 = vmatpush1.bf16.msra.mxu0 %v4193
  %4225 = vmatprep.subr.bf16.mxu0 0
  %4226 = vmatpush2.bf16.msra.mxu0 0
  %4227 = vmatprep.subr.bf16.mxu0 0
  %4228 = vmatpush2.bf16.msra.mxu0 0
  %4229 = vmatprep.subr.bf16.mxu0 0
  %4230 = vmatpush2.bf16.msra.mxu0 0
  %4231 = vmatprep.subr.bf16.mxu0 0
  %4232 = vmatpush2.bf16.msra.mxu0 0
  %4233 = vmatprep.subr.bf16.mxu0 0
  %4234 = vmatpush2.bf16.msra.mxu0 0
  %4235 = vmatprep.subr.bf16.mxu0 0
  %4236 = vmatpush2.bf16.msra.mxu0 0
  %4237 = vmatprep.subr.bf16.mxu0 0
  %4238 = vmatpush2.bf16.msra.mxu0 0
  %4239 = vmatprep.subr.bf16.mxu0 0
  %4240 = vmatpush2.bf16.msra.mxu0 0
  %4241 = vmatprep.mubr.bf16.mxu0 0
  %4242 = vmatmul.mubr.bf16.gmra.mxu0 %v4144
  %v4243 = vpop.f32.mrf.mxu0
  %v4244 = vadd.f32 0.0, %v4243
  %v4245 = vpop.f32.mrf.mxu0
  %v4246 = vpop.f32.mrf.mxu0
  %v4247 = vpop.f32.mrf.mxu0
  %4248 = vdwg.mxu0
  %v4249 = vadd.f32 %v4138, %v4244
  %v4250 = vld [vmem:[#allocation10 + $0x1] sm:$0xff]
  %v4251 = vpack.c.bf16 %v4250, %v4250
  %v4252 = vld [vmem:[%s8 + $0xc0] sm:$0xf]
  %v4253 = vld [vmem:[%s8 + $0xc4] sm:$0xf]
  %v4254 = vld [vmem:[%s8 + $0xc8] sm:$0xf]
  %v4255 = vld [vmem:[%s8 + $0xcc] sm:$0xf]
  %v4256 = vld [vmem:[%s8 + $0xd0] sm:$0xf]
  %v4257 = vld [vmem:[%s8 + $0xd4] sm:$0xf]
  %v4258 = vld [vmem:[%s8 + $0xd8] sm:$0xf]
  %v4259 = vld [vmem:[%s8 + $0xdc] sm:$0xf]
  %v4260 = vld [vmem:[%s8 + $0xe0] sm:$0xf]
  %v4261 = vld [vmem:[%s8 + $0xe4] sm:$0xf]
  %v4262 = vld [vmem:[%s8 + $0xe8] sm:$0xf]
  %v4263 = vld [vmem:[%s8 + $0xec] sm:$0xf]
  %v4264 = vld [vmem:[%s8 + $0xf0] sm:$0xf]
  %v4265 = vld [vmem:[%s8 + $0xf4] sm:$0xf]
  %v4266 = vld [vmem:[%s8 + $0xf8] sm:$0xf]
  %v4267 = vld [vmem:[%s8 + $0xfc] sm:$0xf]
  %v4284 = vunpack.c.l.b16 %v4252
  %v4285 = vunpack.c.l.b16 %v4253
  %v4286 = vunpack.c.l.b16 %v4254
  %v4287 = vunpack.c.l.b16 %v4255
  %v4288 = vunpack.c.l.b16 %v4256
  %v4289 = vunpack.c.l.b16 %v4257
  %v4290 = vunpack.c.l.b16 %v4258
  %v4291 = vunpack.c.l.b16 %v4259
  %v4292 = vunpack.c.l.b16 %v4260
  %v4293 = vunpack.c.l.b16 %v4261
  %v4294 = vunpack.c.l.b16 %v4262
  %v4295 = vunpack.c.l.b16 %v4263
  %v4296 = vunpack.c.l.b16 %v4264
  %v4297 = vunpack.c.l.b16 %v4265
  %v4298 = vunpack.c.l.b16 %v4266
  %v4299 = vunpack.c.l.b16 %v4267
  %v4300 = vpack.c.b16 %v4285, %v4284
  %v4301 = vpack.c.b16 %v4287, %v4286
  %v4302 = vpack.c.b16 %v4289, %v4288
  %v4303 = vpack.c.b16 %v4291, %v4290
  %v4304 = vpack.c.b16 %v4293, %v4292
  %v4305 = vpack.c.b16 %v4295, %v4294
  %v4306 = vpack.c.b16 %v4297, %v4296
  %v4307 = vpack.c.b16 %v4299, %v4298
  %4316 = vmatprep.subr.bf16.mxu0 0
  %4317 = vmatpush1.bf16.msra.mxu0 %v4307
  %4318 = vmatprep.subr.bf16.mxu0 0
  %4319 = vmatpush1.bf16.msra.mxu0 %v4306
  %4320 = vmatprep.subr.bf16.mxu0 0
  %4321 = vmatpush1.bf16.msra.mxu0 %v4305
  %4322 = vmatprep.subr.bf16.mxu0 0
  %4323 = vmatpush1.bf16.msra.mxu0 %v4304
  %4324 = vmatprep.subr.bf16.mxu0 0
  %4325 = vmatpush1.bf16.msra.mxu0 %v4303
  %4326 = vmatprep.subr.bf16.mxu0 0
  %4327 = vmatpush1.bf16.msra.mxu0 %v4302
  %4328 = vmatprep.subr.bf16.mxu0 0
  %4329 = vmatpush1.bf16.msra.mxu0 %v4301
  %4330 = vmatprep.subr.bf16.mxu0 0
  %4331 = vmatpush1.bf16.msra.mxu0 %v4300
  %4332 = vmatprep.subr.bf16.mxu0 0
  %4333 = vmatpush2.bf16.msra.mxu0 0
  %4334 = vmatprep.subr.bf16.mxu0 0
  %4335 = vmatpush2.bf16.msra.mxu0 0
  %4336 = vmatprep.subr.bf16.mxu0 0
  %4337 = vmatpush2.bf16.msra.mxu0 0
  %4338 = vmatprep.subr.bf16.mxu0 0
  %4339 = vmatpush2.bf16.msra.mxu0 0
  %4340 = vmatprep.subr.bf16.mxu0 0
  %4341 = vmatpush2.bf16.msra.mxu0 0
  %4342 = vmatprep.subr.bf16.mxu0 0
  %4343 = vmatpush2.bf16.msra.mxu0 0
  %4344 = vmatprep.subr.bf16.mxu0 0
  %4345 = vmatpush2.bf16.msra.mxu0 0
  %4346 = vmatprep.subr.bf16.mxu0 0
  %4347 = vmatpush2.bf16.msra.mxu0 0
  %4348 = vmatprep.mubr.bf16.mxu0 0
  %4349 = vmatmul.mubr.bf16.gmra.mxu0 %v4251
  %v4350 = vpop.f32.mrf.mxu0
  %v4351 = vadd.f32 0.0, %v4350
  %v4352 = vpop.f32.mrf.mxu0
  %v4353 = vpop.f32.mrf.mxu0
  %v4354 = vpop.f32.mrf.mxu0
  %4355 = vdwg.mxu0
  %v4356 = vadd.f32 %v4249, %v4351
  %v4357 = vld [vmem:[#allocation9 + $0x2] sm:$0xff]
  %v4358 = vpack.c.bf16 %v4357, %v4357
  %v4359 = vld [vmem:[%s8 + $0x100] sm:$0xf]
  %v4360 = vld [vmem:[%s8 + $0x104] sm:$0xf]
  %v4361 = vld [vmem:[%s8 + $0x108] sm:$0xf]
  %v4362 = vld [vmem:[%s8 + $0x10c] sm:$0xf]
  %v4363 = vld [vmem:[%s8 + $0x110] sm:$0xf]
  %v4364 = vld [vmem:[%s8 + $0x114] sm:$0xf]
  %v4365 = vld [vmem:[%s8 + $0x118] sm:$0xf]
  %v4366 = vld [vmem:[%s8 + $0x11c] sm:$0xf]
  %v4367 = vld [vmem:[%s8 + $0x120] sm:$0xf]
  %v4368 = vld [vmem:[%s8 + $0x124] sm:$0xf]
  %v4369 = vld [vmem:[%s8 + $0x128] sm:$0xf]
  %v4370 = vld [vmem:[%s8 + $0x12c] sm:$0xf]
  %v4371 = vld [vmem:[%s8 + $0x130] sm:$0xf]
  %v4372 = vld [vmem:[%s8 + $0x134] sm:$0xf]
  %v4373 = vld [vmem:[%s8 + $0x138] sm:$0xf]
  %v4374 = vld [vmem:[%s8 + $0x13c] sm:$0xf]
  %v4391 = vunpack.c.l.b16 %v4359
  %v4392 = vunpack.c.l.b16 %v4360
  %v4393 = vunpack.c.l.b16 %v4361
  %v4394 = vunpack.c.l.b16 %v4362
  %v4395 = vunpack.c.l.b16 %v4363
  %v4396 = vunpack.c.l.b16 %v4364
  %v4397 = vunpack.c.l.b16 %v4365
  %v4398 = vunpack.c.l.b16 %v4366
  %v4399 = vunpack.c.l.b16 %v4367
  %v4400 = vunpack.c.l.b16 %v4368
  %v4401 = vunpack.c.l.b16 %v4369
  %v4402 = vunpack.c.l.b16 %v4370
  %v4403 = vunpack.c.l.b16 %v4371
  %v4404 = vunpack.c.l.b16 %v4372
  %v4405 = vunpack.c.l.b16 %v4373
  %v4406 = vunpack.c.l.b16 %v4374
  %v4407 = vpack.c.b16 %v4392, %v4391
  %v4408 = vpack.c.b16 %v4394, %v4393
  %v4409 = vpack.c.b16 %v4396, %v4395
  %v4410 = vpack.c.b16 %v4398, %v4397
  %v4411 = vpack.c.b16 %v4400, %v4399
  %v4412 = vpack.c.b16 %v4402, %v4401
  %v4413 = vpack.c.b16 %v4404, %v4403
  %v4414 = vpack.c.b16 %v4406, %v4405
  %4423 = vmatprep.subr.bf16.mxu0 0
  %4424 = vmatpush1.bf16.msra.mxu0 %v4414
  %4425 = vmatprep.subr.bf16.mxu0 0
  %4426 = vmatpush1.bf16.msra.mxu0 %v4413
  %4427 = vmatprep.subr.bf16.mxu0 0
  %4428 = vmatpush1.bf16.msra.mxu0 %v4412
  %4429 = vmatprep.subr.bf16.mxu0 0
  %4430 = vmatpush1.bf16.msra.mxu0 %v4411
  %4431 = vmatprep.subr.bf16.mxu0 0
  %4432 = vmatpush1.bf16.msra.mxu0 %v4410
  %4433 = vmatprep.subr.bf16.mxu0 0
  %4434 = vmatpush1.bf16.msra.mxu0 %v4409
  %4435 = vmatprep.subr.bf16.mxu0 0
  %4436 = vmatpush1.bf16.msra.mxu0 %v4408
  %4437 = vmatprep.subr.bf16.mxu0 0
  %4438 = vmatpush1.bf16.msra.mxu0 %v4407
  %4439 = vmatprep.subr.bf16.mxu0 0
  %4440 = vmatpush2.bf16.msra.mxu0 0
  %4441 = vmatprep.subr.bf16.mxu0 0
  %4442 = vmatpush2.bf16.msra.mxu0 0
  %4443 = vmatprep.subr.bf16.mxu0 0
  %4444 = vmatpush2.bf16.msra.mxu0 0
  %4445 = vmatprep.subr.bf16.mxu0 0
  %4446 = vmatpush2.bf16.msra.mxu0 0
  %4447 = vmatprep.subr.bf16.mxu0 0
  %4448 = vmatpush2.bf16.msra.mxu0 0
  %4449 = vmatprep.subr.bf16.mxu0 0
  %4450 = vmatpush2.bf16.msra.mxu0 0
  %4451 = vmatprep.subr.bf16.mxu0 0
  %4452 = vmatpush2.bf16.msra.mxu0 0
  %4453 = vmatprep.subr.bf16.mxu0 0
  %4454 = vmatpush2.bf16.msra.mxu0 0
  %4455 = vmatprep.mubr.bf16.mxu0 0
  %4456 = vmatmul.mubr.bf16.gmra.mxu0 %v4358
  %v4457 = vpop.f32.mrf.mxu0
  %v4458 = vadd.f32 0.0, %v4457
  %v4459 = vpop.f32.mrf.mxu0
  %v4460 = vpop.f32.mrf.mxu0
  %v4461 = vpop.f32.mrf.mxu0
  %4462 = vdwg.mxu0
  %v4463 = vadd.f32 %v4356, %v4458
  %v4464 = vld [vmem:[#allocation9 + $0x3] sm:$0xff]
  %v4465 = vpack.c.bf16 %v4464, %v4464
  %v4466 = vld [vmem:[%s8 + $0x140] sm:$0xf]
  %v4467 = vld [vmem:[%s8 + $0x144] sm:$0xf]
  %v4468 = vld [vmem:[%s8 + $0x148] sm:$0xf]
  %v4469 = vld [vmem:[%s8 + $0x14c] sm:$0xf]
  %v4470 = vld [vmem:[%s8 + $0x150] sm:$0xf]
  %v4471 = vld [vmem:[%s8 + $0x154] sm:$0xf]
  %v4472 = vld [vmem:[%s8 + $0x158] sm:$0xf]
  %v4473 = vld [vmem:[%s8 + $0x15c] sm:$0xf]
  %v4474 = vld [vmem:[%s8 + $0x160] sm:$0xf]
  %v4475 = vld [vmem:[%s8 + $0x164] sm:$0xf]
  %v4476 = vld [vmem:[%s8 + $0x168] sm:$0xf]
  %v4477 = vld [vmem:[%s8 + $0x16c] sm:$0xf]
  %v4478 = vld [vmem:[%s8 + $0x170] sm:$0xf]
  %v4479 = vld [vmem:[%s8 + $0x174] sm:$0xf]
  %v4480 = vld [vmem:[%s8 + $0x178] sm:$0xf]
  %v4481 = vld [vmem:[%s8 + $0x17c] sm:$0xf]
  %v4498 = vunpack.c.l.b16 %v4466
  %v4499 = vunpack.c.l.b16 %v4467
  %v4500 = vunpack.c.l.b16 %v4468
  %v4501 = vunpack.c.l.b16 %v4469
  %v4502 = vunpack.c.l.b16 %v4470
  %v4503 = vunpack.c.l.b16 %v4471
  %v4504 = vunpack.c.l.b16 %v4472
  %v4505 = vunpack.c.l.b16 %v4473
  %v4506 = vunpack.c.l.b16 %v4474
  %v4507 = vunpack.c.l.b16 %v4475
  %v4508 = vunpack.c.l.b16 %v4476
  %v4509 = vunpack.c.l.b16 %v4477
  %v4510 = vunpack.c.l.b16 %v4478
  %v4511 = vunpack.c.l.b16 %v4479
  %v4512 = vunpack.c.l.b16 %v4480
  %v4513 = vunpack.c.l.b16 %v4481
  %v4514 = vpack.c.b16 %v4499, %v4498
  %v4515 = vpack.c.b16 %v4501, %v4500
  %v4516 = vpack.c.b16 %v4503, %v4502
  %v4517 = vpack.c.b16 %v4505, %v4504
  %v4518 = vpack.c.b16 %v4507, %v4506
  %v4519 = vpack.c.b16 %v4509, %v4508
  %v4520 = vpack.c.b16 %v4511, %v4510
  %v4521 = vpack.c.b16 %v4513, %v4512
  %4530 = vmatprep.subr.bf16.mxu0 0
  %4531 = vmatpush1.bf16.msra.mxu0 %v4521
  %4532 = vmatprep.subr.bf16.mxu0 0
  %4533 = vmatpush1.bf16.msra.mxu0 %v4520
  %4534 = vmatprep.subr.bf16.mxu0 0
  %4535 = vmatpush1.bf16.msra.mxu0 %v4519
  %4536 = vmatprep.subr.bf16.mxu0 0
  %4537 = vmatpush1.bf16.msra.mxu0 %v4518
  %4538 = vmatprep.subr.bf16.mxu0 0
  %4539 = vmatpush1.bf16.msra.mxu0 %v4517
  %4540 = vmatprep.subr.bf16.mxu0 0
  %4541 = vmatpush1.bf16.msra.mxu0 %v4516
  %4542 = vmatprep.subr.bf16.mxu0 0
  %4543 = vmatpush1.bf16.msra.mxu0 %v4515
  %4544 = vmatprep.subr.bf16.mxu0 0
  %4545 = vmatpush1.bf16.msra.mxu0 %v4514
  %4546 = vmatprep.subr.bf16.mxu0 0
  %4547 = vmatpush2.bf16.msra.mxu0 0
  %4548 = vmatprep.subr.bf16.mxu0 0
  %4549 = vmatpush2.bf16.msra.mxu0 0
  %4550 = vmatprep.subr.bf16.mxu0 0
  %4551 = vmatpush2.bf16.msra.mxu0 0
  %4552 = vmatprep.subr.bf16.mxu0 0
  %4553 = vmatpush2.bf16.msra.mxu0 0
  %4554 = vmatprep.subr.bf16.mxu0 0
  %4555 = vmatpush2.bf16.msra.mxu0 0
  %4556 = vmatprep.subr.bf16.mxu0 0
  %4557 = vmatpush2.bf16.msra.mxu0 0
  %4558 = vmatprep.subr.bf16.mxu0 0
  %4559 = vmatpush2.bf16.msra.mxu0 0
  %4560 = vmatprep.subr.bf16.mxu0 0
  %4561 = vmatpush2.bf16.msra.mxu0 0
  %4562 = vmatprep.mubr.bf16.mxu0 0
  %4563 = vmatmul.mubr.bf16.gmra.mxu0 %v4465
  %v4564 = vpop.f32.mrf.mxu0
  %v4565 = vadd.f32 0.0, %v4564
  %v4566 = vpop.f32.mrf.mxu0
  %v4567 = vpop.f32.mrf.mxu0
  %v4568 = vpop.f32.mrf.mxu0
  %4569 = vdwg.mxu0
  %v4570 = vadd.f32 %v4463, %v4565
  %v4571 = vld [vmem:[%s9] sm:$0x1]
  %v4572 = vld [vmem:[%s9 + $0x1] sm:$0x1]
  %v4573 = vld [vmem:[%s9 + $0x2] sm:$0x1]
  %v4574 = vlaneseq
  %v4575 = vshrl.u32 %v4574, 7
  %v4576 = vsub.s32 0, %v4575
  %v4577 = vrot.slane %v4571, %v4576
  %v4578 = vadd.f32 %v4570, %v4577
  %v4579 = vmul.f32 %v4578, 0.2
  %v4580 = vmax.f32 %v4578, %v4579
  %v4581 = vlaneseq
  %v4582 = vshrl.u32 %v4581, 7
  %v4583 = vsub.s32 0, %v4582
  %v4584 = vrot.slane %v4572, %v4583
  %v4585 = vmul.f32 %v4580, %v4584
  %v4586 = vlaneseq
  %v4587 = vshrl.u32 %v4586, 7
  %v4588 = vsub.s32 0, %v4587
  %v4589 = vrot.slane %v4573, %v4588
  %v4590 = vadd.f32 %v4585, %v4589
  %v4591 = vld [vmem:[%s10] sm:$0xf]
  %v4592 = vmul.f32 %v4590, %v4591
  %vm4593 = vcmask 1043456
  %v4594 = vsel %vm4593, %v4592, 0.0
  %v4595 = vrot.slane %v4594, 4
  %v4596 = vadd.f32 %v4594, %v4595
  %v4597 = vrot.slane %v4596, 2
  %v4598 = vadd.f32 %v4596, %v4597
  %v4599 = vrot.slane %v4598, 1
  %v4600 = vadd.f32 %v4598, %v4599
  %v4602 = vrot.slane %v4591, 4
  %v4604 = vmul.f32 %v4590, %v4602
  %v4606 = vrot.slane %v4604, 4
  %v4608 = vsel %vm4593, %v4606, 0.0
  %v4609 = vrot.slane %v4608, 4
  %v4610 = vadd.f32 %v4608, %v4609
  %v4611 = vrot.slane %v4610, 2
  %v4612 = vadd.f32 %v4610, %v4611
  %v4613 = vrot.slane %v4612, 1
  %v4614 = vadd.f32 %v4612, %v4613
  %vm4615 = vcmask 1040384
  %v4616 = vsel %vm4615, %v4600, %v4614
  %vm4617 = vcmask 1041408
  %v4618 = vsel %vm4617, %v4616, 0.0
  %4619 = vadd.xlane.f32.xlu0 %v4618
  %v4620 = vpop.xlane.xlu0 %4619
  %v4621 = vld [vmem:[%s11] sm:$0x1]
  %v4623 = vlaneseq
  %v4624 = vshrl.u32 %v4623, 7
  %v4625 = vsub.s32 0, %v4624
  %v4626 = vrot.slane %v4621, %v4625
  %v4628 = vadd.f32 %v4620, %v4626
  %v4629 = vsub.f32 0.0, %v4628
  %v4630 = vmul.f32 %v4629, 1.442695
  %v4631 = vpow.pop %v4630
  %v4632 = vadd.f32 %v4631, 1.0
  %v4633 = vrcp.pop %v4632
  %v4634 = vmul.f32 1.0, %v4633
  %4636 = vset.pattern.permute.xlu0 0
  %4637 = vperm.xlu0 %4636, %v4634
  %v4638 = vpop.permute.xlu0 %4637
  %4640 = vst [vmem:[%s12] sm:$0x3] %v4638
  // Predicated region
  $region50: #{discriminator_forward.1} parent=0 // pred_check
    _
  $region51: #{discriminator_forward.1} parent=0 // pred_check_branch
    %4642 = sbr.rel (0) target = $region53
  $region52: #{discriminator_forward.1} parent=0 // pred_region
    _
  $region53: #{discriminator_forward.1} parent=0 // pred_fallthru
    _
  // Predicated region
  $region54: #{discriminator_forward.1} parent=0 // pred_check
    _
  $region55: #{discriminator_forward.1} parent=0 // pred_check_branch
    %4644 = sbr.rel (0) target = $region57
  $region56: #{discriminator_forward.1} parent=0 // pred_region
    _
  $region57: #{discriminator_forward.1} parent=0 // pred_fallthru
    _

</llo_original>
